<compile_context>
chip_gen: v6e
topology: v6e:2x2x1
jax: 0.10.0
libtpu: 0.0.40
codegen_flags: <defaults>
</compile_context>

<pallas_src>
import jax
import jax.numpy as jnp
from jax.experimental import pallas as pl
from jax.experimental.pallas import tpu as pltpu


def _conv_block_kernel(x_ref, w1_ref, w2_ref, o_ref, p1_ref, pad_ref, p2_ref):
    # x_ref:   (1, H+2, W+2, Cin)  input, zero-padded by the wrapper (glue)
    # w1_ref:  (9*Cin, Cout)       conv1 weights, HWIO flattened (dy, dx, cin)-major
    # w2_ref:  (9*Cout, Cout)      conv2 weights, same flattening
    # o_ref:   (1, Cout, H*W)      lane-dense, channel-major output
    # p1_ref:  (H*W, 9*Cin)        VMEM scratch: im2col patches for conv 1
    # pad_ref: (H+2, W+2, Cout)    VMEM scratch: zero-padded intermediate y1
    # p2_ref:  (H*W, 9*Cout)       VMEM scratch: im2col patches for conv 2
    Hp2, Wp2, cin = x_ref.shape[1], x_ref.shape[2], x_ref.shape[3]
    H, W = Hp2 - 2, Wp2 - 2
    cout = o_ref.shape[1]

    def im2col(xp, c, patches_ref):
        # Scatter the 9 shifted taps into the patch scratch -> (H*W, 9*c).
        # Column order (dy, dx, c) matches the HWIO->(9*c, cout) weight reshape.
        for dy in range(3):
            for dx in range(3):
                tap = dy * 3 + dx
                patches_ref[:, tap * c:(tap + 1) * c] = (
                    xp[dy:dy + H, dx:dx + W, :].reshape(H * W, c))
        return patches_ref[...]

    def inorm_lrelu(y, axis):
        # Fused one-pass InstanceNorm2d (eps=1e-5, no affine) + LeakyReLU(0.2).
        # y is f32 (matmul accumulator); stats stay in f32.
        inv_n = 1.0 / float(H * W)
        mean = jnp.sum(y, axis=axis, keepdims=True) * inv_n
        ex2 = jnp.sum(y * y, axis=axis, keepdims=True) * inv_n
        var = jnp.maximum(ex2 - mean * mean, 0.0)
        yn = (y - mean) * jax.lax.rsqrt(var + 1e-5)
        return jnp.where(yn >= 0, yn, 0.2 * yn)

    x = x_ref[0]  # (H+2, W+2, Cin), kept in input dtype (bf16-ready MXU feed)

    # --- block 1: conv (one im2col matmul) -> inorm -> leaky relu -> dropout(id) ---
    patches1 = im2col(x, cin, p1_ref)                       # (H*W, 9*Cin)
    y1 = jnp.dot(patches1, w1_ref[...],
                 preferred_element_type=jnp.float32)        # (H*W, Cout) f32
    y1 = inorm_lrelu(y1, axis=0)

    # Zero-pad the intermediate in VMEM: write the interior once, then zero only
    # the 4 border strips (no full-buffer zero pass + overwrite).
    pad_ref[1:H + 1, 1:W + 1, :] = y1.reshape(H, W, cout).astype(pad_ref.dtype)
    zrow = jnp.zeros((1, Wp2, cout), pad_ref.dtype)
    zcol = jnp.zeros((Hp2, 1, cout), pad_ref.dtype)
    pad_ref[0:1, :, :] = zrow
    pad_ref[H + 1:H + 2, :, :] = zrow
    pad_ref[:, 0:1, :] = zcol
    pad_ref[:, W + 1:W + 2, :] = zcol

    # --- block 2: conv (one im2col matmul) -> inorm -> leaky relu -> dropout(id) ---
    patches2 = im2col(pad_ref[...], cout, p2_ref)           # (H*W, 9*Cout)
    y2 = jnp.dot(patches2, w2_ref[...],
                 preferred_element_type=jnp.float32)        # (H*W, Cout) f32
    # Transpose the small result to channel-major so the store and the output
    # writeback DMA are lane-dense (last dim = H*W >= 128).
    y2t = inorm_lrelu(jnp.transpose(y2), axis=1)            # (Cout, H*W)
    o_ref[0] = y2t.astype(o_ref.dtype)


@jax.jit
def conv_block(x_nchw, w1_hwio, w2_hwio):
    """Pallas ConvBlock forward. x_nchw: (N, Cin, H, W) -> (N, Cout, H, W)."""
    N, Cin, H, W = x_nchw.shape
    Cout = w1_hwio.shape[-1]
    dt = x_nchw.dtype

    # NCHW -> NHWC, zero-pad spatial dims by 1, flatten weights (pure glue).
    x_nhwc = jnp.transpose(x_nchw, (0, 2, 3, 1))
    x_pad = jnp.pad(x_nhwc, ((0, 0), (1, 1), (1, 1), (0, 0)))
    w1r = w1_hwio.reshape(9 * Cin, Cout)
    w2r = w2_hwio.reshape(9 * Cout, Cout)

    out = pl.pallas_call(
        _conv_block_kernel,
        out_shape=jax.ShapeDtypeStruct((N, Cout, H * W), dt),
        grid_spec=pltpu.PrefetchScalarGridSpec(
            num_scalar_prefetch=0,
            grid=(N,),  # one grid step per batch element
            in_specs=[
                pl.BlockSpec((1, H + 2, W + 2, Cin), lambda n: (n, 0, 0, 0)),
                pl.BlockSpec((9 * Cin, Cout), lambda n: (0, 0)),
                pl.BlockSpec((9 * Cout, Cout), lambda n: (0, 0)),
            ],
            out_specs=pl.BlockSpec((1, Cout, H * W), lambda n: (n, 0, 0)),
            scratch_shapes=[
                pltpu.VMEM((H * W, 9 * Cin), dt),          # im2col patches, conv 1
                pltpu.VMEM((H + 2, W + 2, Cout), dt),      # padded intermediate
                pltpu.VMEM((H * W, 9 * Cout), dt),         # im2col patches, conv 2
            ],
        ),
        compiler_params=pltpu.CompilerParams(
            dimension_semantics=("parallel",),
            vmem_limit_bytes=32 * 1024 * 1024,
        ),
    )(x_pad, w1r, w2r)

    # (N, Cout, H*W) -> (N, Cout, H, W): the kernel already emits channel-major,
    # so the NCHW result is a plain reshape (no transpose).
    return out.reshape(N, Cout, H, W)


def _reference_conv_block(x_nchw, w1_hwio, w2_hwio):
    """Pure-JAX reference (mirrors the PyTorch module in eval mode)."""
    def conv(x, w_hwio):
        w_oihw = jnp.transpose(w_hwio, (3, 2, 0, 1))
        return jax.lax.conv_general_dilated(
            x, w_oihw, window_strides=(1, 1), padding="SAME",
            dimension_numbers=("NCHW", "OIHW", "NCHW"),
            precision=jax.lax.Precision.HIGHEST)

    def inorm_lrelu(y):
        mean = jnp.mean(y, axis=(2, 3), keepdims=True)
        var = jnp.mean((y - mean) ** 2, axis=(2, 3), keepdims=True)
        y = (y - mean) / jnp.sqrt(var + 1e-5)
        return jnp.where(y >= 0, y, 0.2 * y)

    y = inorm_lrelu(conv(x_nchw, w1_hwio))
    y = inorm_lrelu(conv(y, w2_hwio))
    return y


if __name__ == "__main__":
    # Small shapes consistent with the module: batch=2, in_chans=4, out_chans=8, 16x16.
    N, Cin, Cout, H, W = 2, 4, 8, 16, 16
    drop_prob = 0.0  # eval-mode dropout => identity

    key = jax.random.PRNGKey(0)
    kx, kw1, kw2 = jax.random.split(key, 3)

    x = jax.random.normal(kx, (N, Cin, H, W), dtype=jnp.float32)
    # Deterministic, kaiming-ish scaled weights in HWIO layout.
    w1 = jax.random.normal(kw1, (3, 3, Cin, Cout), dtype=jnp.float32) * (
        2.0 / (9 * Cin)) ** 0.5
    w2 = jax.random.normal(kw2, (3, 3, Cout, Cout), dtype=jnp.float32) * (
        2.0 / (9 * Cout)) ** 0.5

    out = conv_block(x, w1, w2)
    out = jax.block_until_ready(out)

    ref = _reference_conv_block(x, w1, w2)
    assert out.shape == (N, Cout, H, W), out.shape
    max_err = float(jnp.max(jnp.abs(out - ref)))
    assert max_err < 1e-3, max_err

    print("KERNEL_OK")
</pallas_src>

<mosaic_0001>
module attributes {stable_mosaic.version = 11 : i64} {
  func.func @_conv_block_kernel(%arg0: i32, %arg1: memref<1x18x18x4xf32, #tpu.memory_space<vmem>>, %arg2: memref<36x8xf32, #tpu.memory_space<vmem>>, %arg3: memref<72x8xf32, #tpu.memory_space<vmem>>, %arg4: memref<1x8x256xf32, #tpu.memory_space<vmem>>, %arg5: memref<256x36xf32, #tpu.memory_space<vmem>>, %arg6: memref<18x18x8xf32, #tpu.memory_space<vmem>>, %arg7: memref<256x72xf32, #tpu.memory_space<vmem>>) attributes {dimension_semantics = [#tpu.dimension_semantics<parallel>], iteration_bounds = array<i64: 2>, scalar_prefetch = 0 : i64, scratch_operands = 3 : i64, tpu.core_type = #tpu.core_type<tc>, window_params = [{transform_indices = @transform_0, window_bounds = array<i64: 1, 18, 18, 4>}, {pipeline_mode = #tpu.pipeline_mode<synchronous>, transform_indices = @transform_1, window_bounds = array<i64: 36, 8>}, {pipeline_mode = #tpu.pipeline_mode<synchronous>, transform_indices = @transform_2, window_bounds = array<i64: 72, 8>}, {transform_indices = @transform_3, window_bounds = array<i64: 1, 8, 256>}]} {
    %c0 = arith.constant 0 : index
    %c0_0 = arith.constant 0 : index
    %c0_1 = arith.constant 0 : index
    %c0_2 = arith.constant 0 : index
    %0 = vector.load %arg1[%c0, %c0_0, %c0_1, %c0_2] : memref<1x18x18x4xf32, #tpu.memory_space<vmem>>, vector<1x18x18x4xf32>
    %1 = vector.shape_cast %0 : vector<1x18x18x4xf32> to vector<18x18x4xf32>
    %2 = vector.extract_strided_slice %1 {offsets = [0, 0, 0], sizes = [16, 16, 4], strides = [1, 1, 1]} : vector<18x18x4xf32> to vector<16x16x4xf32>
    %3 = vector.shape_cast %2 : vector<16x16x4xf32> to vector<256x4xf32>
    %c0_3 = arith.constant 0 : index
    %c0_4 = arith.constant 0 : index
    %4 = vector.load %arg5[%c0_3, %c0_4] : memref<256x36xf32, #tpu.memory_space<vmem>>, vector<256x4xf32>
    tpu.vector_store %arg5[%c0_3, %c0_4], %3 {strides = array<i32>} : memref<256x36xf32, #tpu.memory_space<vmem>>, vector<256x4xf32>,
    %5 = vector.extract_strided_slice %1 {offsets = [0, 1, 0], sizes = [16, 16, 4], strides = [1, 1, 1]} : vector<18x18x4xf32> to vector<16x16x4xf32>
    %6 = vector.shape_cast %5 : vector<16x16x4xf32> to vector<256x4xf32>
    %c0_5 = arith.constant 0 : index
    %c4 = arith.constant 4 : index
    %7 = vector.load %arg5[%c0_5, %c4] : memref<256x36xf32, #tpu.memory_space<vmem>>, vector<256x4xf32>
    tpu.vector_store %arg5[%c0_5, %c4], %6 {strides = array<i32>} : memref<256x36xf32, #tpu.memory_space<vmem>>, vector<256x4xf32>,
    %8 = vector.extract_strided_slice %1 {offsets = [0, 2, 0], sizes = [16, 16, 4], strides = [1, 1, 1]} : vector<18x18x4xf32> to vector<16x16x4xf32>
    %9 = vector.shape_cast %8 : vector<16x16x4xf32> to vector<256x4xf32>
    %c0_6 = arith.constant 0 : index
    %c8 = arith.constant 8 : index
    %10 = vector.load %arg5[%c0_6, %c8] : memref<256x36xf32, #tpu.memory_space<vmem>>, vector<256x4xf32>
    tpu.vector_store %arg5[%c0_6, %c8], %9 {strides = array<i32>} : memref<256x36xf32, #tpu.memory_space<vmem>>, vector<256x4xf32>,
    %11 = vector.extract_strided_slice %1 {offsets = [1, 0, 0], sizes = [16, 16, 4], strides = [1, 1, 1]} : vector<18x18x4xf32> to vector<16x16x4xf32>
    %12 = vector.shape_cast %11 : vector<16x16x4xf32> to vector<256x4xf32>
    %c0_7 = arith.constant 0 : index
    %c12 = arith.constant 12 : index
    %13 = vector.load %arg5[%c0_7, %c12] : memref<256x36xf32, #tpu.memory_space<vmem>>, vector<256x4xf32>
    tpu.vector_store %arg5[%c0_7, %c12], %12 {strides = array<i32>} : memref<256x36xf32, #tpu.memory_space<vmem>>, vector<256x4xf32>,
    %14 = vector.extract_strided_slice %1 {offsets = [1, 1, 0], sizes = [16, 16, 4], strides = [1, 1, 1]} : vector<18x18x4xf32> to vector<16x16x4xf32>
    %15 = vector.shape_cast %14 : vector<16x16x4xf32> to vector<256x4xf32>
    %c0_8 = arith.constant 0 : index
    %c16 = arith.constant 16 : index
    %16 = vector.load %arg5[%c0_8, %c16] : memref<256x36xf32, #tpu.memory_space<vmem>>, vector<256x4xf32>
    tpu.vector_store %arg5[%c0_8, %c16], %15 {strides = array<i32>} : memref<256x36xf32, #tpu.memory_space<vmem>>, vector<256x4xf32>,
    %17 = vector.extract_strided_slice %1 {offsets = [1, 2, 0], sizes = [16, 16, 4], strides = [1, 1, 1]} : vector<18x18x4xf32> to vector<16x16x4xf32>
    %18 = vector.shape_cast %17 : vector<16x16x4xf32> to vector<256x4xf32>
    %c0_9 = arith.constant 0 : index
    %c20 = arith.constant 20 : index
    %19 = vector.load %arg5[%c0_9, %c20] : memref<256x36xf32, #tpu.memory_space<vmem>>, vector<256x4xf32>
    tpu.vector_store %arg5[%c0_9, %c20], %18 {strides = array<i32>} : memref<256x36xf32, #tpu.memory_space<vmem>>, vector<256x4xf32>,
    %20 = vector.extract_strided_slice %1 {offsets = [2, 0, 0], sizes = [16, 16, 4], strides = [1, 1, 1]} : vector<18x18x4xf32> to vector<16x16x4xf32>
    %21 = vector.shape_cast %20 : vector<16x16x4xf32> to vector<256x4xf32>
    %c0_10 = arith.constant 0 : index
    %c24 = arith.constant 24 : index
    %22 = vector.load %arg5[%c0_10, %c24] : memref<256x36xf32, #tpu.memory_space<vmem>>, vector<256x4xf32>
    tpu.vector_store %arg5[%c0_10, %c24], %21 {strides = array<i32>} : memref<256x36xf32, #tpu.memory_space<vmem>>, vector<256x4xf32>,
    %23 = vector.extract_strided_slice %1 {offsets = [2, 1, 0], sizes = [16, 16, 4], strides = [1, 1, 1]} : vector<18x18x4xf32> to vector<16x16x4xf32>
    %24 = vector.shape_cast %23 : vector<16x16x4xf32> to vector<256x4xf32>
    %c0_11 = arith.constant 0 : index
    %c28 = arith.constant 28 : index
    %25 = vector.load %arg5[%c0_11, %c28] : memref<256x36xf32, #tpu.memory_space<vmem>>, vector<256x4xf32>
    tpu.vector_store %arg5[%c0_11, %c28], %24 {strides = array<i32>} : memref<256x36xf32, #tpu.memory_space<vmem>>, vector<256x4xf32>,
    %26 = vector.extract_strided_slice %1 {offsets = [2, 2, 0], sizes = [16, 16, 4], strides = [1, 1, 1]} : vector<18x18x4xf32> to vector<16x16x4xf32>
    %27 = vector.shape_cast %26 : vector<16x16x4xf32> to vector<256x4xf32>
    %c0_12 = arith.constant 0 : index
    %c32 = arith.constant 32 : index
    %28 = vector.load %arg5[%c0_12, %c32] : memref<256x36xf32, #tpu.memory_space<vmem>>, vector<256x4xf32>
    tpu.vector_store %arg5[%c0_12, %c32], %27 {strides = array<i32>} : memref<256x36xf32, #tpu.memory_space<vmem>>, vector<256x4xf32>,
    %c0_13 = arith.constant 0 : index
    %c0_14 = arith.constant 0 : index
    %29 = vector.load %arg5[%c0_13, %c0_14] : memref<256x36xf32, #tpu.memory_space<vmem>>, vector<256x36xf32>
    %c0_15 = arith.constant 0 : index
    %c0_16 = arith.constant 0 : index
    %30 = vector.load %arg2[%c0_15, %c0_16] : memref<36x8xf32, #tpu.memory_space<vmem>>, vector<36x8xf32>
    %cst = arith.constant dense<0.000000e+00> : vector<256x8xf32>
    %31 = tpu.matmul %29, %30, %cst {dimension_numbers = #tpu.dot_dimension_numbers<[1], [0], [0], [1], [0, 0, 1, 1], [], []>} : vector<256x36xf32>, vector<36x8xf32>, vector<256x8xf32> -> vector<256x8xf32>
    %cst_17 = arith.constant dense<0.000000e+00> : vector<8xf32>
    %32 = vector.multi_reduction <add>, %31, %cst_17 [0] : vector<256x8xf32> to vector<8xf32>
    %33 = vector.shape_cast %32 : vector<8xf32> to vector<1x8xf32>
    %cst_18 = arith.constant 3.906250e-03 : f32
    %34 = vector.broadcast %cst_18 : f32 to vector<1x8xf32>
    %35 = arith.mulf %33, %34 : vector<1x8xf32>
    %36 = arith.mulf %31, %31 : vector<256x8xf32>
    %cst_19 = arith.constant dense<0.000000e+00> : vector<8xf32>
    %37 = vector.multi_reduction <add>, %36, %cst_19 [0] : vector<256x8xf32> to vector<8xf32>
    %38 = vector.shape_cast %37 : vector<8xf32> to vector<1x8xf32>
    %cst_20 = arith.constant 3.906250e-03 : f32
    %39 = vector.broadcast %cst_20 : f32 to vector<1x8xf32>
    %40 = arith.mulf %38, %39 : vector<1x8xf32>
    %41 = arith.mulf %35, %35 : vector<1x8xf32>
    %42 = arith.subf %40, %41 : vector<1x8xf32>
    %cst_21 = arith.constant 0.000000e+00 : f32
    %43 = vector.broadcast %cst_21 : f32 to vector<1x8xf32>
    %44 = arith.maximumf %42, %43 : vector<1x8xf32>
    %45 = vector.broadcast %35 : vector<1x8xf32> to vector<256x8xf32>
    %46 = arith.subf %31, %45 : vector<256x8xf32>
    %cst_22 = arith.constant 9.99999974E-6 : f32
    %47 = vector.broadcast %cst_22 : f32 to vector<1x8xf32>
    %48 = arith.addf %44, %47 : vector<1x8xf32>
    %49 = math.rsqrt %48 : vector<1x8xf32>
    %50 = vector.broadcast %49 : vector<1x8xf32> to vector<256x8xf32>
    %51 = arith.mulf %46, %50 : vector<256x8xf32>
    %cst_23 = arith.constant 0.000000e+00 : f32
    %52 = vector.broadcast %cst_23 : f32 to vector<256x8xf32>
    %53 = arith.cmpf oge, %51, %52 : vector<256x8xf32>
    %cst_24 = arith.constant 2.000000e-01 : f32
    %54 = vector.broadcast %cst_24 : f32 to vector<256x8xf32>
    %55 = arith.mulf %54, %51 : vector<256x8xf32>
    %56 = arith.select %53, %51, %55 : vector<256x8xi1>, vector<256x8xf32>
    %57 = vector.shape_cast %56 : vector<256x8xf32> to vector<16x16x8xf32>
    %c1 = arith.constant 1 : index
    %c1_25 = arith.constant 1 : index
    %c0_26 = arith.constant 0 : index
    %58 = vector.load %arg6[%c1, %c1_25, %c0_26] : memref<18x18x8xf32, #tpu.memory_space<vmem>>, vector<16x16x8xf32>
    tpu.vector_store %arg6[%c1, %c1_25, %c0_26], %57 {strides = array<i32>} : memref<18x18x8xf32, #tpu.memory_space<vmem>>, vector<16x16x8xf32>,
    %cst_27 = arith.constant 0.000000e+00 : f32
    %59 = vector.broadcast %cst_27 : f32 to vector<1x18x8xf32>
    %cst_28 = arith.constant 0.000000e+00 : f32
    %60 = vector.broadcast %cst_28 : f32 to vector<18x1x8xf32>
    %c0_29 = arith.constant 0 : index
    %c0_30 = arith.constant 0 : index
    %c0_31 = arith.constant 0 : index
    %61 = vector.load %arg6[%c0_29, %c0_30, %c0_31] : memref<18x18x8xf32, #tpu.memory_space<vmem>>, vector<1x18x8xf32>
    tpu.vector_store %arg6[%c0_29, %c0_30, %c0_31], %59 {strides = array<i32>} : memref<18x18x8xf32, #tpu.memory_space<vmem>>, vector<1x18x8xf32>,
    %c17 = arith.constant 17 : index
    %c0_32 = arith.constant 0 : index
    %c0_33 = arith.constant 0 : index
    %62 = vector.load %arg6[%c17, %c0_32, %c0_33] : memref<18x18x8xf32, #tpu.memory_space<vmem>>, vector<1x18x8xf32>
    tpu.vector_store %arg6[%c17, %c0_32, %c0_33], %59 {strides = array<i32>} : memref<18x18x8xf32, #tpu.memory_space<vmem>>, vector<1x18x8xf32>,
    %c0_34 = arith.constant 0 : index
    %c0_35 = arith.constant 0 : index
    %c0_36 = arith.constant 0 : index
    %63 = vector.load %arg6[%c0_34, %c0_35, %c0_36] : memref<18x18x8xf32, #tpu.memory_space<vmem>>, vector<18x1x8xf32>
    tpu.vector_store %arg6[%c0_34, %c0_35, %c0_36], %60 {strides = array<i32>} : memref<18x18x8xf32, #tpu.memory_space<vmem>>, vector<18x1x8xf32>,
    %c0_37 = arith.constant 0 : index
    %c17_38 = arith.constant 17 : index
    %c0_39 = arith.constant 0 : index
    %64 = vector.load %arg6[%c0_37, %c17_38, %c0_39] : memref<18x18x8xf32, #tpu.memory_space<vmem>>, vector<18x1x8xf32>
    tpu.vector_store %arg6[%c0_37, %c17_38, %c0_39], %60 {strides = array<i32>} : memref<18x18x8xf32, #tpu.memory_space<vmem>>, vector<18x1x8xf32>,
    %c0_40 = arith.constant 0 : index
    %c0_41 = arith.constant 0 : index
    %c0_42 = arith.constant 0 : index
    %65 = vector.load %arg6[%c0_40, %c0_41, %c0_42] : memref<18x18x8xf32, #tpu.memory_space<vmem>>, vector<18x18x8xf32>
    %66 = vector.extract_strided_slice %65 {offsets = [0, 0, 0], sizes = [16, 16, 8], strides = [1, 1, 1]} : vector<18x18x8xf32> to vector<16x16x8xf32>
    %67 = vector.shape_cast %66 : vector<16x16x8xf32> to vector<256x8xf32>
    %c0_43 = arith.constant 0 : index
    %c0_44 = arith.constant 0 : index
    %68 = vector.load %arg7[%c0_43, %c0_44] : memref<256x72xf32, #tpu.memory_space<vmem>>, vector<256x8xf32>
    tpu.vector_store %arg7[%c0_43, %c0_44], %67 {strides = array<i32>} : memref<256x72xf32, #tpu.memory_space<vmem>>, vector<256x8xf32>,
    %69 = vector.extract_strided_slice %65 {offsets = [0, 1, 0], sizes = [16, 16, 8], strides = [1, 1, 1]} : vector<18x18x8xf32> to vector<16x16x8xf32>
    %70 = vector.shape_cast %69 : vector<16x16x8xf32> to vector<256x8xf32>
    %c0_45 = arith.constant 0 : index
    %c8_46 = arith.constant 8 : index
    %71 = vector.load %arg7[%c0_45, %c8_46] : memref<256x72xf32, #tpu.memory_space<vmem>>, vector<256x8xf32>
    tpu.vector_store %arg7[%c0_45, %c8_46], %70 {strides = array<i32>} : memref<256x72xf32, #tpu.memory_space<vmem>>, vector<256x8xf32>,
    %72 = vector.extract_strided_slice %65 {offsets = [0, 2, 0], sizes = [16, 16, 8], strides = [1, 1, 1]} : vector<18x18x8xf32> to vector<16x16x8xf32>
    %73 = vector.shape_cast %72 : vector<16x16x8xf32> to vector<256x8xf32>
    %c0_47 = arith.constant 0 : index
    %c16_48 = arith.constant 16 : index
    %74 = vector.load %arg7[%c0_47, %c16_48] : memref<256x72xf32, #tpu.memory_space<vmem>>, vector<256x8xf32>
    tpu.vector_store %arg7[%c0_47, %c16_48], %73 {strides = array<i32>} : memref<256x72xf32, #tpu.memory_space<vmem>>, vector<256x8xf32>,
    %75 = vector.extract_strided_slice %65 {offsets = [1, 0, 0], sizes = [16, 16, 8], strides = [1, 1, 1]} : vector<18x18x8xf32> to vector<16x16x8xf32>
    %76 = vector.shape_cast %75 : vector<16x16x8xf32> to vector<256x8xf32>
    %c0_49 = arith.constant 0 : index
    %c24_50 = arith.constant 24 : index
    %77 = vector.load %arg7[%c0_49, %c24_50] : memref<256x72xf32, #tpu.memory_space<vmem>>, vector<256x8xf32>
    tpu.vector_store %arg7[%c0_49, %c24_50], %76 {strides = array<i32>} : memref<256x72xf32, #tpu.memory_space<vmem>>, vector<256x8xf32>,
    %78 = vector.extract_strided_slice %65 {offsets = [1, 1, 0], sizes = [16, 16, 8], strides = [1, 1, 1]} : vector<18x18x8xf32> to vector<16x16x8xf32>
    %79 = vector.shape_cast %78 : vector<16x16x8xf32> to vector<256x8xf32>
    %c0_51 = arith.constant 0 : index
    %c32_52 = arith.constant 32 : index
    %80 = vector.load %arg7[%c0_51, %c32_52] : memref<256x72xf32, #tpu.memory_space<vmem>>, vector<256x8xf32>
    tpu.vector_store %arg7[%c0_51, %c32_52], %79 {strides = array<i32>} : memref<256x72xf32, #tpu.memory_space<vmem>>, vector<256x8xf32>,
    %81 = vector.extract_strided_slice %65 {offsets = [1, 2, 0], sizes = [16, 16, 8], strides = [1, 1, 1]} : vector<18x18x8xf32> to vector<16x16x8xf32>
    %82 = vector.shape_cast %81 : vector<16x16x8xf32> to vector<256x8xf32>
    %c0_53 = arith.constant 0 : index
    %c40 = arith.constant 40 : index
    %83 = vector.load %arg7[%c0_53, %c40] : memref<256x72xf32, #tpu.memory_space<vmem>>, vector<256x8xf32>
    tpu.vector_store %arg7[%c0_53, %c40], %82 {strides = array<i32>} : memref<256x72xf32, #tpu.memory_space<vmem>>, vector<256x8xf32>,
    %84 = vector.extract_strided_slice %65 {offsets = [2, 0, 0], sizes = [16, 16, 8], strides = [1, 1, 1]} : vector<18x18x8xf32> to vector<16x16x8xf32>
    %85 = vector.shape_cast %84 : vector<16x16x8xf32> to vector<256x8xf32>
    %c0_54 = arith.constant 0 : index
    %c48 = arith.constant 48 : index
    %86 = vector.load %arg7[%c0_54, %c48] : memref<256x72xf32, #tpu.memory_space<vmem>>, vector<256x8xf32>
    tpu.vector_store %arg7[%c0_54, %c48], %85 {strides = array<i32>} : memref<256x72xf32, #tpu.memory_space<vmem>>, vector<256x8xf32>,
    %87 = vector.extract_strided_slice %65 {offsets = [2, 1, 0], sizes = [16, 16, 8], strides = [1, 1, 1]} : vector<18x18x8xf32> to vector<16x16x8xf32>
    %88 = vector.shape_cast %87 : vector<16x16x8xf32> to vector<256x8xf32>
    %c0_55 = arith.constant 0 : index
    %c56 = arith.constant 56 : index
    %89 = vector.load %arg7[%c0_55, %c56] : memref<256x72xf32, #tpu.memory_space<vmem>>, vector<256x8xf32>
    tpu.vector_store %arg7[%c0_55, %c56], %88 {strides = array<i32>} : memref<256x72xf32, #tpu.memory_space<vmem>>, vector<256x8xf32>,
    %90 = vector.extract_strided_slice %65 {offsets = [2, 2, 0], sizes = [16, 16, 8], strides = [1, 1, 1]} : vector<18x18x8xf32> to vector<16x16x8xf32>
    %91 = vector.shape_cast %90 : vector<16x16x8xf32> to vector<256x8xf32>
    %c0_56 = arith.constant 0 : index
    %c64 = arith.constant 64 : index
    %92 = vector.load %arg7[%c0_56, %c64] : memref<256x72xf32, #tpu.memory_space<vmem>>, vector<256x8xf32>
    tpu.vector_store %arg7[%c0_56, %c64], %91 {strides = array<i32>} : memref<256x72xf32, #tpu.memory_space<vmem>>, vector<256x8xf32>,
    %c0_57 = arith.constant 0 : index
    %c0_58 = arith.constant 0 : index
    %93 = vector.load %arg7[%c0_57, %c0_58] : memref<256x72xf32, #tpu.memory_space<vmem>>, vector<256x72xf32>
    %c0_59 = arith.constant 0 : index
    %c0_60 = arith.constant 0 : index
    %94 = vector.load %arg3[%c0_59, %c0_60] : memref<72x8xf32, #tpu.memory_space<vmem>>, vector<72x8xf32>
    %cst_61 = arith.constant dense<0.000000e+00> : vector<256x8xf32>
    %95 = tpu.matmul %93, %94, %cst_61 {dimension_numbers = #tpu.dot_dimension_numbers<[1], [0], [0], [1], [0, 0, 1, 1], [], []>} : vector<256x72xf32>, vector<72x8xf32>, vector<256x8xf32> -> vector<256x8xf32>
    %96 = tpu.transpose %95, [1, 0] : vector<256x8xf32> -> vector<8x256xf32>
    %cst_62 = arith.constant dense<0.000000e+00> : vector<8xf32>
    %97 = vector.multi_reduction <add>, %96, %cst_62 [1] : vector<8x256xf32> to vector<8xf32>
    %98 = vector.shape_cast %97 : vector<8xf32> to vector<8x1xf32>
    %cst_63 = arith.constant 3.906250e-03 : f32
    %99 = vector.broadcast %cst_63 : f32 to vector<8x1xf32>
    %100 = arith.mulf %98, %99 : vector<8x1xf32>
    %101 = arith.mulf %96, %96 : vector<8x256xf32>
    %cst_64 = arith.constant dense<0.000000e+00> : vector<8xf32>
    %102 = vector.multi_reduction <add>, %101, %cst_64 [1] : vector<8x256xf32> to vector<8xf32>
    %103 = vector.shape_cast %102 : vector<8xf32> to vector<8x1xf32>
    %cst_65 = arith.constant 3.906250e-03 : f32
    %104 = vector.broadcast %cst_65 : f32 to vector<8x1xf32>
    %105 = arith.mulf %103, %104 : vector<8x1xf32>
    %106 = arith.mulf %100, %100 : vector<8x1xf32>
    %107 = arith.subf %105, %106 : vector<8x1xf32>
    %cst_66 = arith.constant 0.000000e+00 : f32
    %108 = vector.broadcast %cst_66 : f32 to vector<8x1xf32>
    %109 = arith.maximumf %107, %108 : vector<8x1xf32>
    %110 = vector.broadcast %100 : vector<8x1xf32> to vector<8x256xf32>
    %111 = arith.subf %96, %110 : vector<8x256xf32>
    %cst_67 = arith.constant 9.99999974E-6 : f32
    %112 = vector.broadcast %cst_67 : f32 to vector<8x1xf32>
    %113 = arith.addf %109, %112 : vector<8x1xf32>
    %114 = math.rsqrt %113 : vector<8x1xf32>
    %115 = vector.broadcast %114 : vector<8x1xf32> to vector<8x256xf32>
    %116 = arith.mulf %111, %115 : vector<8x256xf32>
    %cst_68 = arith.constant 0.000000e+00 : f32
    %117 = vector.broadcast %cst_68 : f32 to vector<8x256xf32>
    %118 = arith.cmpf oge, %116, %117 : vector<8x256xf32>
    %cst_69 = arith.constant 2.000000e-01 : f32
    %119 = vector.broadcast %cst_69 : f32 to vector<8x256xf32>
    %120 = arith.mulf %119, %116 : vector<8x256xf32>
    %121 = arith.select %118, %116, %120 : vector<8x256xi1>, vector<8x256xf32>
    %c0_70 = arith.constant 0 : index
    %c0_71 = arith.constant 0 : index
    %c0_72 = arith.constant 0 : index
    %122 = vector.load %arg4[%c0_70, %c0_71, %c0_72] : memref<1x8x256xf32, #tpu.memory_space<vmem>>, vector<1x8x256xf32>
    %123 = vector.shape_cast %122 : vector<1x8x256xf32> to vector<8x256xf32>
    %124 = vector.shape_cast %121 : vector<8x256xf32> to vector<1x8x256xf32>
    tpu.vector_store %arg4[%c0_70, %c0_71, %c0_72], %124 {strides = array<i32>} : memref<1x8x256xf32, #tpu.memory_space<vmem>>, vector<1x8x256xf32>,
    return
  }
  func.func @transform_0(%arg0: i32) -> (i32, i32, i32, i32) {
    %c0_i32 = arith.constant 0 : i32
    %c0_i32_0 = arith.constant 0 : i32
    %c0_i32_1 = arith.constant 0 : i32
    %c0_i32_2 = arith.constant 0 : i32
    return %arg0, %c0_i32, %c0_i32_0, %c0_i32_1 : i32, i32, i32, i32
  }
  func.func @transform_1(%arg0: i32) -> (i32, i32) {
    %c0_i32 = arith.constant 0 : i32
    %c0_i32_0 = arith.constant 0 : i32
    %c0_i32_1 = arith.constant 0 : i32
    return %c0_i32, %c0_i32_0 : i32, i32
  }
  func.func @transform_2(%arg0: i32) -> (i32, i32) {
    %c0_i32 = arith.constant 0 : i32
    %c0_i32_0 = arith.constant 0 : i32
    %c0_i32_1 = arith.constant 0 : i32
    return %c0_i32, %c0_i32_0 : i32, i32
  }
  func.func @transform_3(%arg0: i32) -> (i32, i32, i32) {
    %c0_i32 = arith.constant 0 : i32
    %c0_i32_0 = arith.constant 0 : i32
    %c0_i32_1 = arith.constant 0 : i32
    return %arg0, %c0_i32, %c0_i32_0 : i32, i32, i32
  }
}

</mosaic_0001>

<llo_original>
// kernel: conv_block.1
$region0: #{conv_block.1}
  #allocation0 [shape = 'u32[]', space=smem, size = 0x4, offset = 0x4, fixed_abs, tag = 'smem constant byte address 0x4 - core index']
  #allocation1 [shape = 'u32[144,128]{1,0:T(1,128)}', space=vmem, size = 0x12000, scoped, tag = 'internal scratch']
  #allocation2 [shape = 'f32[256,36]{1,0:T(8,128)}', space=vmem, size = 0x20000, scoped, tag = 'scratch operand']
  #allocation3 [shape = 'f32[18,18,8]{2,1,0:T(8,128)}', space=vmem, size = 0x36000, scoped, tag = 'scratch operand']
  #allocation4 [shape = 'f32[256,72]{1,0:T(8,128)}', space=vmem, size = 0x20000, scoped, tag = 'scratch operand']
  %s0 = inlined_call_operand.vmem [shape: f32[2,18,18,4], index: 0, kind: input, shape index: {}]
  %s1 = inlined_call_operand.vmem [shape: f32[36,8], index: 1, kind: input, shape index: {}]
  %s2 = inlined_call_operand.vmem [shape: f32[72,8], index: 2, kind: input, shape index: {}]
  %s3 = inlined_call_operand.vmem [shape: f32[2,8,256], index: 3, kind: output, shape index: {}]
  %s4 = sld [smem:[#allocation0]]
  $region45: #{conv_block.1} parent=0
    _
  %s6 = ssub.s32 1, %s4
  %s7 = scalar_select 0, %s6, %s4
  loop: start=0, step=1, limit=4
  $region2: #{conv_block.1} parent=0 // loop_pre_header
    _
  $region3: #{conv_block.1} parent=0 // loop_header
    %s9 = sphi 0, %s13
    %p10 = scmp.ge.s32.totalorder %s9, 4
    %s19 = sphi 0, %s21
    %s22 = sphi 0, %s19
    %s23 = sphi 0, %s22
    %s39 = sphi 0, %s23
    %s43 = sphi 0, %s43
    %s45 = sphi 0, %s43
    %s46 = sphi 0, %s45
    %s60 = sphi 0, %s46
    %s64 = sphi 0, %s64
    %s66 = sphi 0, %s64
    %s67 = sphi 0, %s66
    %s81 = sphi 0, %s67
    %s87 = sphi 0, %s89
    %s90 = sphi 0, %s87
    %s91 = sphi 0, %s90
    %s107 = sphi 0, %s91
  $region4: #{conv_block.1} parent=0 // loop_header_branch
    %12 = sbr.rel (%p10) target = $region8
  $region5: #{conv_block.1} parent=0 // loop_body
    %s14 = ssub.s32 %s9, 1
    %s15 = ssub.s32 %s9, 2
    %s16 = sadd.s32 %s9, 1
    %s17 = ssub.s32 %s9, %s16
    %p18 = scmp.eq.s32.totalorder %s17, 0
    %s20 = sadd.s32 %s19, 1
    %s21 = scalar_select %p18, %s19, %s20
    %p24 = pneg %p18
    %p25 = scmp.eq.s32.totalorder %s9, 1
    %p26 = por %p24, %p25
    %p27 = scmp.ne.s32.totalorder %s19, %s22
    %p28 = scmp.eq.s32.totalorder %s9, 0
    %p29 = por %p27, %p28
    %p30 = scmp.ne.s32.totalorder %s19, %s22
    %p31 = scmp.eq.s32.totalorder %s14, 1
    %p32 = por %p30, %p31
    %p33 = scmp.ne.s32.totalorder %s22, %s23
    %p34 = scmp.eq.s32.totalorder %s14, 0
    %p35 = por %p33, %p34
    %p36 = scmp.ne.s32.totalorder %s22, %s23
    %p37 = scmp.eq.s32.totalorder %s15, 1
    %p38 = por %p36, %p37
    %p40 = scmp.ne.s32.totalorder %s23, %s39
    %p41 = scmp.eq.s32.totalorder %s15, 0
    %p42 = por %p40, %p41
    %s44 = sadd.s32 %s43, 1
    %p47 = scmp.eq.s32.totalorder %s9, 1
    %p48 = scmp.ne.s32.totalorder %s43, %s45
    %p49 = scmp.eq.s32.totalorder %s9, 0
    %p50 = por %p48, %p49
    %p51 = scmp.ne.s32.totalorder %s43, %s45
    %p52 = scmp.eq.s32.totalorder %s14, 1
    %p53 = por %p51, %p52
    %p54 = scmp.ne.s32.totalorder %s45, %s46
    %p55 = scmp.eq.s32.totalorder %s14, 0
    %p56 = por %p54, %p55
    %p57 = scmp.ne.s32.totalorder %s45, %s46
    %p58 = scmp.eq.s32.totalorder %s15, 1
    %p59 = por %p57, %p58
    %p61 = scmp.ne.s32.totalorder %s46, %s60
    %p62 = scmp.eq.s32.totalorder %s15, 0
    %p63 = por %p61, %p62
    %s65 = sadd.s32 %s64, 1
    %p68 = scmp.eq.s32.totalorder %s9, 1
    %p69 = scmp.ne.s32.totalorder %s64, %s66
    %p70 = scmp.eq.s32.totalorder %s9, 0
    %p71 = por %p69, %p70
    %p72 = scmp.ne.s32.totalorder %s64, %s66
    %p73 = scmp.eq.s32.totalorder %s14, 1
    %p74 = por %p72, %p73
    %p75 = scmp.ne.s32.totalorder %s66, %s67
    %p76 = scmp.eq.s32.totalorder %s14, 0
    %p77 = por %p75, %p76
    %p78 = scmp.ne.s32.totalorder %s66, %s67
    %p79 = scmp.eq.s32.totalorder %s15, 1
    %p80 = por %p78, %p79
    %p82 = scmp.ne.s32.totalorder %s67, %s81
    %p83 = scmp.eq.s32.totalorder %s15, 0
    %p84 = por %p82, %p83
    %s85 = ssub.s32 %s9, %s16
    %p86 = scmp.eq.s32.totalorder %s85, 0
    %s88 = sadd.s32 %s87, 1
    %s89 = scalar_select %p86, %s87, %s88
    %p92 = pneg %p86
    %p93 = scmp.eq.s32.totalorder %s9, 1
    %p94 = por %p92, %p93
    %p95 = scmp.ne.s32.totalorder %s87, %s90
    %p96 = scmp.eq.s32.totalorder %s9, 0
    %p97 = por %p95, %p96
    %p98 = scmp.ne.s32.totalorder %s87, %s90
    %p99 = scmp.eq.s32.totalorder %s14, 1
    %p100 = por %p98, %p99
    %p101 = scmp.ne.s32.totalorder %s90, %s91
    %p102 = scmp.eq.s32.totalorder %s14, 0
    %p103 = por %p101, %p102
    %p104 = scmp.ne.s32.totalorder %s90, %s91
    %p105 = scmp.eq.s32.totalorder %s15, 1
    %p106 = por %p104, %p105
    %p108 = scmp.ne.s32.totalorder %s91, %s107
    %p109 = scmp.eq.s32.totalorder %s15, 0
    %p110 = por %p108, %p109
    %p111 = scmp.le.s32.totalorder 1, %s9
    %p112 = scmp.lt.s32.totalorder %s9, 3
    %p113 = pnand %p111, %p112
    %p114 = pneg %p113
    // Predicated region
    $region9: #{conv_block.1} parent=5 // pred_check
      _
    $region10: #{conv_block.1} parent=5 // pred_check_branch
      %116 = sbr.rel (%p113) target = $region12
    $region11: #{conv_block.1} parent=5 // pred_region
      %s117 = ssub.s32 %s9, 1
      // Predicated region
      $region13: #{conv_block.1} parent=11 // pred_check
        %p118 = pneg %p56
      $region14: #{conv_block.1} parent=11 // pred_check_branch
        %120 = sbr.rel (%p118) target = $region16
      $region15: #{conv_block.1} parent=11 // pred_region
        _
      $region16: #{conv_block.1} parent=11 // pred_fallthru
        _
      // Predicated region
      $region17: #{conv_block.1} parent=11 // pred_check
        %p121 = pneg %p77
      $region18: #{conv_block.1} parent=11 // pred_check_branch
        %123 = sbr.rel (%p121) target = $region20
      $region19: #{conv_block.1} parent=11 // pred_region
        _
      $region20: #{conv_block.1} parent=11 // pred_fallthru
        _
    $region12: #{conv_block.1} parent=5 // pred_fallthru
      _
    %p124 = scmp.lt.s32.totalorder %s9, 2
    // Predicated region
    $region21: #{conv_block.1} parent=5 // pred_check
      %p125 = pneg %p124
    $region22: #{conv_block.1} parent=5 // pred_check_branch
      %127 = sbr.rel (%p125) target = $region24
    $region23: #{conv_block.1} parent=5 // pred_region
      // Predicated region
      $region25: #{conv_block.1} parent=23 // pred_check
        %p128 = pneg %p29
      $region26: #{conv_block.1} parent=23 // pred_check_branch
        %130 = sbr.rel (%p128) target = $region28
      $region27: #{conv_block.1} parent=23 // pred_region
        %p131 = scmp.lt.s32.totalorder %s9, 1
        %s132 = scalar_select %p131, %s9, 1
        %s133 = smul.addr %s132, 54
        %s134 = smul.addr %s133, 8
        %s135 = scalar_lea.vmem %s0, %s134
      $region28: #{conv_block.1} parent=23 // pred_fallthru
        _
    $region24: #{conv_block.1} parent=5 // pred_fallthru
      _
    %p136 = scmp.le.s32.totalorder 1, %s9
    %p137 = scmp.lt.s32.totalorder %s9, 3
    %p138 = pnand %p136, %p137
    %p139 = pneg %p138
    // Predicated region
    $region29: #{conv_block.1} parent=5 // pred_check
      _
    $region30: #{conv_block.1} parent=5 // pred_check_branch
      %141 = sbr.rel (%p138) target = $region32
    $region31: #{conv_block.1} parent=5 // pred_region
      %s142 = ssub.s32 %s9, 1
      %p143 = scmp.lt.s32.totalorder %s14, 1
      %s144 = scalar_select %p143, %s14, 1
      %s145 = smul.addr %s144, 54
      %s146 = smul.addr %s145, 8
      %s147 = scalar_lea.vmem %s0, %s146
      %p148 = pneg %p35
      %p149 = pneg %p32
      %p150 = pneg %p56
      %p151 = pneg %p53
      %p152 = pneg %p77
      %p153 = pneg %p74
      %p154 = pneg %p103
      %p155 = pneg %p100
      %p156 = scmp.lt.s32.totalorder %s14, 1
      %s157 = scalar_select %p156, %s14, 1
      %s158 = smul.addr %s157, 2
      %s159 = smul.addr %s158, 8
      %s160 = scalar_lea.vmem %s3, %s159
      %p161 = scmp.lt.s32.totalorder %s14, 1
      %s162 = scalar_select %p161, %s14, 1
      %s163 = smul.addr %s162, 54
      %s164 = smul.addr %s163, 8
      %s165 = scalar_lea.vmem %s0, %s164
      %p166 = scmp.lt.s32.totalorder %s14, 1
      %s167 = scalar_select %p166, %s14, 1
      %s168 = smul.addr %s167, 2
      %s169 = smul.addr %s168, 8
      %s170 = scalar_lea.vmem %s3, %s169
      %v171 = vld [vmem:[%s165] sm:$0xff]
      %v172 = vld [vmem:[%s165 + $0x8] sm:$0xff]
      %v173 = vld [vmem:[%s165 + $0x10] sm:$0x3]
      %v174 = vld [vmem:[%s165 + $0x18] sm:$0xff]
      %v175 = vld [vmem:[%s165 + $0x20] sm:$0xff]
      %v176 = vld [vmem:[%s165 + $0x28] sm:$0x3]
      %v177 = vld [vmem:[%s165 + $0x30] sm:$0xff]
      %v178 = vld [vmem:[%s165 + $0x38] sm:$0xff]
      %v179 = vld [vmem:[%s165 + $0x40] sm:$0x3]
      %v180 = vld [vmem:[%s165 + $0x48] sm:$0xff]
      %v181 = vld [vmem:[%s165 + $0x50] sm:$0xff]
      %v182 = vld [vmem:[%s165 + $0x58] sm:$0x3]
      %v183 = vld [vmem:[%s165 + $0x60] sm:$0xff]
      %v184 = vld [vmem:[%s165 + $0x68] sm:$0xff]
      %v185 = vld [vmem:[%s165 + $0x70] sm:$0x3]
      %v186 = vld [vmem:[%s165 + $0x78] sm:$0xff]
      %v187 = vld [vmem:[%s165 + $0x80] sm:$0xff]
      %v188 = vld [vmem:[%s165 + $0x88] sm:$0x3]
      %v189 = vld [vmem:[%s165 + $0x90] sm:$0xff]
      %v190 = vld [vmem:[%s165 + $0x98] sm:$0xff]
      %v191 = vld [vmem:[%s165 + $0xa0] sm:$0x3]
      %v192 = vld [vmem:[%s165 + $0xa8] sm:$0xff]
      %v193 = vld [vmem:[%s165 + $0xb0] sm:$0xff]
      %v194 = vld [vmem:[%s165 + $0xb8] sm:$0x3]
      %v195 = vld [vmem:[%s165 + $0xc0] sm:$0xff]
      %v196 = vld [vmem:[%s165 + $0xc8] sm:$0xff]
      %v197 = vld [vmem:[%s165 + $0xd0] sm:$0x3]
      %v198 = vld [vmem:[%s165 + $0xd8] sm:$0xff]
      %v199 = vld [vmem:[%s165 + $0xe0] sm:$0xff]
      %v200 = vld [vmem:[%s165 + $0xe8] sm:$0x3]
      %v201 = vld [vmem:[%s165 + $0xf0] sm:$0xff]
      %v202 = vld [vmem:[%s165 + $0xf8] sm:$0xff]
      %v203 = vld [vmem:[%s165 + $0x100] sm:$0x3]
      %v204 = vld [vmem:[%s165 + $0x108] sm:$0xff]
      %v205 = vld [vmem:[%s165 + $0x110] sm:$0xff]
      %v206 = vld [vmem:[%s165 + $0x118] sm:$0x3]
      %v207 = vld [vmem:[%s165 + $0x120] sm:$0xff]
      %v208 = vld [vmem:[%s165 + $0x128] sm:$0xff]
      %v209 = vld [vmem:[%s165 + $0x130] sm:$0x3]
      %v210 = vld [vmem:[%s165 + $0x138] sm:$0xff]
      %v211 = vld [vmem:[%s165 + $0x140] sm:$0xff]
      %v212 = vld [vmem:[%s165 + $0x148] sm:$0x3]
      %v213 = vld [vmem:[%s165 + $0x150] sm:$0xff]
      %v214 = vld [vmem:[%s165 + $0x158] sm:$0xff]
      %v215 = vld [vmem:[%s165 + $0x160] sm:$0x3]
      %v216 = vld [vmem:[%s165 + $0x168] sm:$0xff]
      %v217 = vld [vmem:[%s165 + $0x170] sm:$0xff]
      %v218 = vld [vmem:[%s165 + $0x178] sm:$0x3]
      %v219 = vld [vmem:[%s165 + $0x180] sm:$0xff]
      %v220 = vld [vmem:[%s165 + $0x188] sm:$0xff]
      %v221 = vld [vmem:[%s165 + $0x190] sm:$0x3]
      %v222 = vld [vmem:[%s165 + $0x198] sm:$0xff]
      %v223 = vld [vmem:[%s165 + $0x1a0] sm:$0xff]
      %v224 = vld [vmem:[%s165 + $0x1a8] sm:$0x3]
      %vm225 = vcmask 31744
      %226 = vst.msk [vmem:[#allocation2] sm:$0xff] %vm225, %v171
      %227 = vst.msk [vmem:[#allocation2 + $0x8] sm:$0xff] %vm225, %v172
      %228 = vst.msk [vmem:[#allocation2 + $0x10] sm:$0xff] %vm225, %v174
      %229 = vst.msk [vmem:[#allocation2 + $0x18] sm:$0xff] %vm225, %v175
      %230 = vst.msk [vmem:[#allocation2 + $0x20] sm:$0xff] %vm225, %v177
      %231 = vst.msk [vmem:[#allocation2 + $0x28] sm:$0xff] %vm225, %v178
      %232 = vst.msk [vmem:[#allocation2 + $0x30] sm:$0xff] %vm225, %v180
      %233 = vst.msk [vmem:[#allocation2 + $0x38] sm:$0xff] %vm225, %v181
      %234 = vst.msk [vmem:[#allocation2 + $0x40] sm:$0xff] %vm225, %v183
      %235 = vst.msk [vmem:[#allocation2 + $0x48] sm:$0xff] %vm225, %v184
      %236 = vst.msk [vmem:[#allocation2 + $0x50] sm:$0xff] %vm225, %v186
      %237 = vst.msk [vmem:[#allocation2 + $0x58] sm:$0xff] %vm225, %v187
      %238 = vst.msk [vmem:[#allocation2 + $0x60] sm:$0xff] %vm225, %v189
      %239 = vst.msk [vmem:[#allocation2 + $0x68] sm:$0xff] %vm225, %v190
      %240 = vst.msk [vmem:[#allocation2 + $0x70] sm:$0xff] %vm225, %v192
      %241 = vst.msk [vmem:[#allocation2 + $0x78] sm:$0xff] %vm225, %v193
      %242 = vst.msk [vmem:[#allocation2 + $0x80] sm:$0xff] %vm225, %v195
      %243 = vst.msk [vmem:[#allocation2 + $0x88] sm:$0xff] %vm225, %v196
      %244 = vst.msk [vmem:[#allocation2 + $0x90] sm:$0xff] %vm225, %v198
      %245 = vst.msk [vmem:[#allocation2 + $0x98] sm:$0xff] %vm225, %v199
      %246 = vst.msk [vmem:[#allocation2 + $0xa0] sm:$0xff] %vm225, %v201
      %247 = vst.msk [vmem:[#allocation2 + $0xa8] sm:$0xff] %vm225, %v202
      %248 = vst.msk [vmem:[#allocation2 + $0xb0] sm:$0xff] %vm225, %v204
      %249 = vst.msk [vmem:[#allocation2 + $0xb8] sm:$0xff] %vm225, %v205
      %250 = vst.msk [vmem:[#allocation2 + $0xc0] sm:$0xff] %vm225, %v207
      %251 = vst.msk [vmem:[#allocation2 + $0xc8] sm:$0xff] %vm225, %v208
      %252 = vst.msk [vmem:[#allocation2 + $0xd0] sm:$0xff] %vm225, %v210
      %253 = vst.msk [vmem:[#allocation2 + $0xd8] sm:$0xff] %vm225, %v211
      %254 = vst.msk [vmem:[#allocation2 + $0xe0] sm:$0xff] %vm225, %v213
      %255 = vst.msk [vmem:[#allocation2 + $0xe8] sm:$0xff] %vm225, %v214
      %256 = vst.msk [vmem:[#allocation2 + $0xf0] sm:$0xff] %vm225, %v216
      %257 = vst.msk [vmem:[#allocation2 + $0xf8] sm:$0xff] %vm225, %v217
      %vm306 = vcmask 1046528
      %v307 = vrot.slane %v171, 1
      %v308 = vrot.slane %v172, 1
      %v309 = vsel %vm306, %v307, %v308
      %v310 = vrot.slane %v173, 1
      %v311 = vsel %vm306, %v308, %v310
      %v312 = vrot.slane %v174, 1
      %v313 = vrot.slane %v175, 1
      %v314 = vsel %vm306, %v312, %v313
      %v315 = vrot.slane %v176, 1
      %v316 = vsel %vm306, %v313, %v315
      %v317 = vrot.slane %v177, 1
      %v318 = vrot.slane %v178, 1
      %v319 = vsel %vm306, %v317, %v318
      %v320 = vrot.slane %v179, 1
      %v321 = vsel %vm306, %v318, %v320
      %v322 = vrot.slane %v180, 1
      %v323 = vrot.slane %v181, 1
      %v324 = vsel %vm306, %v322, %v323
      %v325 = vrot.slane %v182, 1
      %v326 = vsel %vm306, %v323, %v325
      %v327 = vrot.slane %v183, 1
      %v328 = vrot.slane %v184, 1
      %v329 = vsel %vm306, %v327, %v328
      %v330 = vrot.slane %v185, 1
      %v331 = vsel %vm306, %v328, %v330
      %v332 = vrot.slane %v186, 1
      %v333 = vrot.slane %v187, 1
      %v334 = vsel %vm306, %v332, %v333
      %v335 = vrot.slane %v188, 1
      %v336 = vsel %vm306, %v333, %v335
      %v337 = vrot.slane %v189, 1
      %v338 = vrot.slane %v190, 1
      %v339 = vsel %vm306, %v337, %v338
      %v340 = vrot.slane %v191, 1
      %v341 = vsel %vm306, %v338, %v340
      %v342 = vrot.slane %v192, 1
      %v343 = vrot.slane %v193, 1
      %v344 = vsel %vm306, %v342, %v343
      %v345 = vrot.slane %v194, 1
      %v346 = vsel %vm306, %v343, %v345
      %v347 = vrot.slane %v195, 1
      %v348 = vrot.slane %v196, 1
      %v349 = vsel %vm306, %v347, %v348
      %v350 = vrot.slane %v197, 1
      %v351 = vsel %vm306, %v348, %v350
      %v352 = vrot.slane %v198, 1
      %v353 = vrot.slane %v199, 1
      %v354 = vsel %vm306, %v352, %v353
      %v355 = vrot.slane %v200, 1
      %v356 = vsel %vm306, %v353, %v355
      %v357 = vrot.slane %v201, 1
      %v358 = vrot.slane %v202, 1
      %v359 = vsel %vm306, %v357, %v358
      %v360 = vrot.slane %v203, 1
      %v361 = vsel %vm306, %v358, %v360
      %v362 = vrot.slane %v204, 1
      %v363 = vrot.slane %v205, 1
      %v364 = vsel %vm306, %v362, %v363
      %v365 = vrot.slane %v206, 1
      %v366 = vsel %vm306, %v363, %v365
      %v367 = vrot.slane %v207, 1
      %v368 = vrot.slane %v208, 1
      %v369 = vsel %vm306, %v367, %v368
      %v370 = vrot.slane %v209, 1
      %v371 = vsel %vm306, %v368, %v370
      %v372 = vrot.slane %v210, 1
      %v373 = vrot.slane %v211, 1
      %v374 = vsel %vm306, %v372, %v373
      %v375 = vrot.slane %v212, 1
      %v376 = vsel %vm306, %v373, %v375
      %v377 = vrot.slane %v213, 1
      %v378 = vrot.slane %v214, 1
      %v379 = vsel %vm306, %v377, %v378
      %v380 = vrot.slane %v215, 1
      %v381 = vsel %vm306, %v378, %v380
      %v382 = vrot.slane %v216, 1
      %v383 = vrot.slane %v217, 1
      %v384 = vsel %vm306, %v382, %v383
      %v385 = vrot.slane %v218, 1
      %v386 = vsel %vm306, %v383, %v385
      %387 = vrot.lane.b32.xlu0 %v309, 4
      %v388 = vpop.permute.xlu0 %387
      %389 = vrot.lane.b32.xlu0 %v311, 4
      %v390 = vpop.permute.xlu0 %389
      %391 = vrot.lane.b32.xlu0 %v314, 4
      %v392 = vpop.permute.xlu0 %391
      %393 = vrot.lane.b32.xlu0 %v316, 4
      %v394 = vpop.permute.xlu0 %393
      %395 = vrot.lane.b32.xlu0 %v319, 4
      %v396 = vpop.permute.xlu0 %395
      %397 = vrot.lane.b32.xlu0 %v321, 4
      %v398 = vpop.permute.xlu0 %397
      %399 = vrot.lane.b32.xlu0 %v324, 4
      %v400 = vpop.permute.xlu0 %399
      %401 = vrot.lane.b32.xlu0 %v326, 4
      %v402 = vpop.permute.xlu0 %401
      %403 = vrot.lane.b32.xlu0 %v329, 4
      %v404 = vpop.permute.xlu0 %403
      %405 = vrot.lane.b32.xlu0 %v331, 4
      %v406 = vpop.permute.xlu0 %405
      %407 = vrot.lane.b32.xlu0 %v334, 4
      %v408 = vpop.permute.xlu0 %407
      %409 = vrot.lane.b32.xlu0 %v336, 4
      %v410 = vpop.permute.xlu0 %409
      %411 = vrot.lane.b32.xlu0 %v339, 4
      %v412 = vpop.permute.xlu0 %411
      %413 = vrot.lane.b32.xlu0 %v341, 4
      %v414 = vpop.permute.xlu0 %413
      %415 = vrot.lane.b32.xlu0 %v344, 4
      %v416 = vpop.permute.xlu0 %415
      %417 = vrot.lane.b32.xlu0 %v346, 4
      %v418 = vpop.permute.xlu0 %417
      %419 = vrot.lane.b32.xlu0 %v349, 4
      %v420 = vpop.permute.xlu0 %419
      %421 = vrot.lane.b32.xlu0 %v351, 4
      %v422 = vpop.permute.xlu0 %421
      %423 = vrot.lane.b32.xlu0 %v354, 4
      %v424 = vpop.permute.xlu0 %423
      %425 = vrot.lane.b32.xlu0 %v356, 4
      %v426 = vpop.permute.xlu0 %425
      %427 = vrot.lane.b32.xlu0 %v359, 4
      %v428 = vpop.permute.xlu0 %427
      %429 = vrot.lane.b32.xlu0 %v361, 4
      %v430 = vpop.permute.xlu0 %429
      %431 = vrot.lane.b32.xlu0 %v364, 4
      %v432 = vpop.permute.xlu0 %431
      %433 = vrot.lane.b32.xlu0 %v366, 4
      %v434 = vpop.permute.xlu0 %433
      %435 = vrot.lane.b32.xlu0 %v369, 4
      %v436 = vpop.permute.xlu0 %435
      %437 = vrot.lane.b32.xlu0 %v371, 4
      %v438 = vpop.permute.xlu0 %437
      %439 = vrot.lane.b32.xlu0 %v374, 4
      %v440 = vpop.permute.xlu0 %439
      %441 = vrot.lane.b32.xlu0 %v376, 4
      %v442 = vpop.permute.xlu0 %441
      %443 = vrot.lane.b32.xlu0 %v379, 4
      %v444 = vpop.permute.xlu0 %443
      %445 = vrot.lane.b32.xlu0 %v381, 4
      %v446 = vpop.permute.xlu0 %445
      %447 = vrot.lane.b32.xlu0 %v384, 4
      %v448 = vpop.permute.xlu0 %447
      %449 = vrot.lane.b32.xlu0 %v386, 4
      %v450 = vpop.permute.xlu0 %449
      %vm483 = vcmask 64544
      %484 = vst.msk [vmem:[#allocation2] sm:$0xff] %vm483, %v388
      %485 = vst.msk [vmem:[#allocation2 + $0x8] sm:$0xff] %vm483, %v390
      %486 = vst.msk [vmem:[#allocation2 + $0x10] sm:$0xff] %vm483, %v392
      %487 = vst.msk [vmem:[#allocation2 + $0x18] sm:$0xff] %vm483, %v394
      %488 = vst.msk [vmem:[#allocation2 + $0x20] sm:$0xff] %vm483, %v396
      %489 = vst.msk [vmem:[#allocation2 + $0x28] sm:$0xff] %vm483, %v398
      %490 = vst.msk [vmem:[#allocation2 + $0x30] sm:$0xff] %vm483, %v400
      %491 = vst.msk [vmem:[#allocation2 + $0x38] sm:$0xff] %vm483, %v402
      %492 = vst.msk [vmem:[#allocation2 + $0x40] sm:$0xff] %vm483, %v404
      %493 = vst.msk [vmem:[#allocation2 + $0x48] sm:$0xff] %vm483, %v406
      %494 = vst.msk [vmem:[#allocation2 + $0x50] sm:$0xff] %vm483, %v408
      %495 = vst.msk [vmem:[#allocation2 + $0x58] sm:$0xff] %vm483, %v410
      %496 = vst.msk [vmem:[#allocation2 + $0x60] sm:$0xff] %vm483, %v412
      %497 = vst.msk [vmem:[#allocation2 + $0x68] sm:$0xff] %vm483, %v414
      %498 = vst.msk [vmem:[#allocation2 + $0x70] sm:$0xff] %vm483, %v416
      %499 = vst.msk [vmem:[#allocation2 + $0x78] sm:$0xff] %vm483, %v418
      %500 = vst.msk [vmem:[#allocation2 + $0x80] sm:$0xff] %vm483, %v420
      %501 = vst.msk [vmem:[#allocation2 + $0x88] sm:$0xff] %vm483, %v422
      %502 = vst.msk [vmem:[#allocation2 + $0x90] sm:$0xff] %vm483, %v424
      %503 = vst.msk [vmem:[#allocation2 + $0x98] sm:$0xff] %vm483, %v426
      %504 = vst.msk [vmem:[#allocation2 + $0xa0] sm:$0xff] %vm483, %v428
      %505 = vst.msk [vmem:[#allocation2 + $0xa8] sm:$0xff] %vm483, %v430
      %506 = vst.msk [vmem:[#allocation2 + $0xb0] sm:$0xff] %vm483, %v432
      %507 = vst.msk [vmem:[#allocation2 + $0xb8] sm:$0xff] %vm483, %v434
      %508 = vst.msk [vmem:[#allocation2 + $0xc0] sm:$0xff] %vm483, %v436
      %509 = vst.msk [vmem:[#allocation2 + $0xc8] sm:$0xff] %vm483, %v438
      %510 = vst.msk [vmem:[#allocation2 + $0xd0] sm:$0xff] %vm483, %v440
      %511 = vst.msk [vmem:[#allocation2 + $0xd8] sm:$0xff] %vm483, %v442
      %512 = vst.msk [vmem:[#allocation2 + $0xe0] sm:$0xff] %vm483, %v444
      %513 = vst.msk [vmem:[#allocation2 + $0xe8] sm:$0xff] %vm483, %v446
      %514 = vst.msk [vmem:[#allocation2 + $0xf0] sm:$0xff] %vm483, %v448
      %515 = vst.msk [vmem:[#allocation2 + $0xf8] sm:$0xff] %vm483, %v450
      %vm516 = vcmask 1045504
      %v517 = vrot.slane %v171, 2
      %v518 = vrot.slane %v172, 2
      %v519 = vsel %vm516, %v517, %v518
      %v520 = vrot.slane %v173, 2
      %v521 = vsel %vm516, %v518, %v520
      %v522 = vrot.slane %v174, 2
      %v523 = vrot.slane %v175, 2
      %v524 = vsel %vm516, %v522, %v523
      %v525 = vrot.slane %v176, 2
      %v526 = vsel %vm516, %v523, %v525
      %v527 = vrot.slane %v177, 2
      %v528 = vrot.slane %v178, 2
      %v529 = vsel %vm516, %v527, %v528
      %v530 = vrot.slane %v179, 2
      %v531 = vsel %vm516, %v528, %v530
      %v532 = vrot.slane %v180, 2
      %v533 = vrot.slane %v181, 2
      %v534 = vsel %vm516, %v532, %v533
      %v535 = vrot.slane %v182, 2
      %v536 = vsel %vm516, %v533, %v535
      %v537 = vrot.slane %v183, 2
      %v538 = vrot.slane %v184, 2
      %v539 = vsel %vm516, %v537, %v538
      %v540 = vrot.slane %v185, 2
      %v541 = vsel %vm516, %v538, %v540
      %v542 = vrot.slane %v186, 2
      %v543 = vrot.slane %v187, 2
      %v544 = vsel %vm516, %v542, %v543
      %v545 = vrot.slane %v188, 2
      %v546 = vsel %vm516, %v543, %v545
      %v547 = vrot.slane %v189, 2
      %v548 = vrot.slane %v190, 2
      %v549 = vsel %vm516, %v547, %v548
      %v550 = vrot.slane %v191, 2
      %v551 = vsel %vm516, %v548, %v550
      %v552 = vrot.slane %v192, 2
      %v553 = vrot.slane %v193, 2
      %v554 = vsel %vm516, %v552, %v553
      %v555 = vrot.slane %v194, 2
      %v556 = vsel %vm516, %v553, %v555
      %v557 = vrot.slane %v195, 2
      %v558 = vrot.slane %v196, 2
      %v559 = vsel %vm516, %v557, %v558
      %v560 = vrot.slane %v197, 2
      %v561 = vsel %vm516, %v558, %v560
      %v562 = vrot.slane %v198, 2
      %v563 = vrot.slane %v199, 2
      %v564 = vsel %vm516, %v562, %v563
      %v565 = vrot.slane %v200, 2
      %v566 = vsel %vm516, %v563, %v565
      %v567 = vrot.slane %v201, 2
      %v568 = vrot.slane %v202, 2
      %v569 = vsel %vm516, %v567, %v568
      %v570 = vrot.slane %v203, 2
      %v571 = vsel %vm516, %v568, %v570
      %v572 = vrot.slane %v204, 2
      %v573 = vrot.slane %v205, 2
      %v574 = vsel %vm516, %v572, %v573
      %v575 = vrot.slane %v206, 2
      %v576 = vsel %vm516, %v573, %v575
      %v577 = vrot.slane %v207, 2
      %v578 = vrot.slane %v208, 2
      %v579 = vsel %vm516, %v577, %v578
      %v580 = vrot.slane %v209, 2
      %v581 = vsel %vm516, %v578, %v580
      %v582 = vrot.slane %v210, 2
      %v583 = vrot.slane %v211, 2
      %v584 = vsel %vm516, %v582, %v583
      %v585 = vrot.slane %v212, 2
      %v586 = vsel %vm516, %v583, %v585
      %v587 = vrot.slane %v213, 2
      %v588 = vrot.slane %v214, 2
      %v589 = vsel %vm516, %v587, %v588
      %v590 = vrot.slane %v215, 2
      %v591 = vsel %vm516, %v588, %v590
      %v592 = vrot.slane %v216, 2
      %v593 = vrot.slane %v217, 2
      %v594 = vsel %vm516, %v592, %v593
      %v595 = vrot.slane %v218, 2
      %v596 = vsel %vm516, %v593, %v595
      %597 = vrot.lane.b32.xlu0 %v519, 8
      %v598 = vpop.permute.xlu0 %597
      %599 = vrot.lane.b32.xlu0 %v521, 8
      %v600 = vpop.permute.xlu0 %599
      %601 = vrot.lane.b32.xlu0 %v524, 8
      %v602 = vpop.permute.xlu0 %601
      %603 = vrot.lane.b32.xlu0 %v526, 8
      %v604 = vpop.permute.xlu0 %603
      %605 = vrot.lane.b32.xlu0 %v529, 8
      %v606 = vpop.permute.xlu0 %605
      %607 = vrot.lane.b32.xlu0 %v531, 8
      %v608 = vpop.permute.xlu0 %607
      %609 = vrot.lane.b32.xlu0 %v534, 8
      %v610 = vpop.permute.xlu0 %609
      %611 = vrot.lane.b32.xlu0 %v536, 8
      %v612 = vpop.permute.xlu0 %611
      %613 = vrot.lane.b32.xlu0 %v539, 8
      %v614 = vpop.permute.xlu0 %613
      %615 = vrot.lane.b32.xlu0 %v541, 8
      %v616 = vpop.permute.xlu0 %615
      %617 = vrot.lane.b32.xlu0 %v544, 8
      %v618 = vpop.permute.xlu0 %617
      %619 = vrot.lane.b32.xlu0 %v546, 8
      %v620 = vpop.permute.xlu0 %619
      %621 = vrot.lane.b32.xlu0 %v549, 8
      %v622 = vpop.permute.xlu0 %621
      %623 = vrot.lane.b32.xlu0 %v551, 8
      %v624 = vpop.permute.xlu0 %623
      %625 = vrot.lane.b32.xlu0 %v554, 8
      %v626 = vpop.permute.xlu0 %625
      %627 = vrot.lane.b32.xlu0 %v556, 8
      %v628 = vpop.permute.xlu0 %627
      %629 = vrot.lane.b32.xlu0 %v559, 8
      %v630 = vpop.permute.xlu0 %629
      %631 = vrot.lane.b32.xlu0 %v561, 8
      %v632 = vpop.permute.xlu0 %631
      %633 = vrot.lane.b32.xlu0 %v564, 8
      %v634 = vpop.permute.xlu0 %633
      %635 = vrot.lane.b32.xlu0 %v566, 8
      %v636 = vpop.permute.xlu0 %635
      %637 = vrot.lane.b32.xlu0 %v569, 8
      %v638 = vpop.permute.xlu0 %637
      %639 = vrot.lane.b32.xlu0 %v571, 8
      %v640 = vpop.permute.xlu0 %639
      %641 = vrot.lane.b32.xlu0 %v574, 8
      %v642 = vpop.permute.xlu0 %641
      %643 = vrot.lane.b32.xlu0 %v576, 8
      %v644 = vpop.permute.xlu0 %643
      %645 = vrot.lane.b32.xlu0 %v579, 8
      %v646 = vpop.permute.xlu0 %645
      %647 = vrot.lane.b32.xlu0 %v581, 8
      %v648 = vpop.permute.xlu0 %647
      %649 = vrot.lane.b32.xlu0 %v584, 8
      %v650 = vpop.permute.xlu0 %649
      %651 = vrot.lane.b32.xlu0 %v586, 8
      %v652 = vpop.permute.xlu0 %651
      %653 = vrot.lane.b32.xlu0 %v589, 8
      %v654 = vpop.permute.xlu0 %653
      %655 = vrot.lane.b32.xlu0 %v591, 8
      %v656 = vpop.permute.xlu0 %655
      %657 = vrot.lane.b32.xlu0 %v594, 8
      %v658 = vpop.permute.xlu0 %657
      %659 = vrot.lane.b32.xlu0 %v596, 8
      %v660 = vpop.permute.xlu0 %659
      %vm693 = vcmask 97344
      %694 = vst.msk [vmem:[#allocation2] sm:$0xff] %vm693, %v598
      %695 = vst.msk [vmem:[#allocation2 + $0x8] sm:$0xff] %vm693, %v600
      %696 = vst.msk [vmem:[#allocation2 + $0x10] sm:$0xff] %vm693, %v602
      %697 = vst.msk [vmem:[#allocation2 + $0x18] sm:$0xff] %vm693, %v604
      %698 = vst.msk [vmem:[#allocation2 + $0x20] sm:$0xff] %vm693, %v606
      %699 = vst.msk [vmem:[#allocation2 + $0x28] sm:$0xff] %vm693, %v608
      %700 = vst.msk [vmem:[#allocation2 + $0x30] sm:$0xff] %vm693, %v610
      %701 = vst.msk [vmem:[#allocation2 + $0x38] sm:$0xff] %vm693, %v612
      %702 = vst.msk [vmem:[#allocation2 + $0x40] sm:$0xff] %vm693, %v614
      %703 = vst.msk [vmem:[#allocation2 + $0x48] sm:$0xff] %vm693, %v616
      %704 = vst.msk [vmem:[#allocation2 + $0x50] sm:$0xff] %vm693, %v618
      %705 = vst.msk [vmem:[#allocation2 + $0x58] sm:$0xff] %vm693, %v620
      %706 = vst.msk [vmem:[#allocation2 + $0x60] sm:$0xff] %vm693, %v622
      %707 = vst.msk [vmem:[#allocation2 + $0x68] sm:$0xff] %vm693, %v624
      %708 = vst.msk [vmem:[#allocation2 + $0x70] sm:$0xff] %vm693, %v626
      %709 = vst.msk [vmem:[#allocation2 + $0x78] sm:$0xff] %vm693, %v628
      %710 = vst.msk [vmem:[#allocation2 + $0x80] sm:$0xff] %vm693, %v630
      %711 = vst.msk [vmem:[#allocation2 + $0x88] sm:$0xff] %vm693, %v632
      %712 = vst.msk [vmem:[#allocation2 + $0x90] sm:$0xff] %vm693, %v634
      %713 = vst.msk [vmem:[#allocation2 + $0x98] sm:$0xff] %vm693, %v636
      %714 = vst.msk [vmem:[#allocation2 + $0xa0] sm:$0xff] %vm693, %v638
      %715 = vst.msk [vmem:[#allocation2 + $0xa8] sm:$0xff] %vm693, %v640
      %716 = vst.msk [vmem:[#allocation2 + $0xb0] sm:$0xff] %vm693, %v642
      %717 = vst.msk [vmem:[#allocation2 + $0xb8] sm:$0xff] %vm693, %v644
      %718 = vst.msk [vmem:[#allocation2 + $0xc0] sm:$0xff] %vm693, %v646
      %719 = vst.msk [vmem:[#allocation2 + $0xc8] sm:$0xff] %vm693, %v648
      %720 = vst.msk [vmem:[#allocation2 + $0xd0] sm:$0xff] %vm693, %v650
      %721 = vst.msk [vmem:[#allocation2 + $0xd8] sm:$0xff] %vm693, %v652
      %722 = vst.msk [vmem:[#allocation2 + $0xe0] sm:$0xff] %vm693, %v654
      %723 = vst.msk [vmem:[#allocation2 + $0xe8] sm:$0xff] %vm693, %v656
      %724 = vst.msk [vmem:[#allocation2 + $0xf0] sm:$0xff] %vm693, %v658
      %725 = vst.msk [vmem:[#allocation2 + $0xf8] sm:$0xff] %vm693, %v660
      %728 = vrot.lane.b32.xlu0 %v174, 12
      %v729 = vpop.permute.xlu0 %728
      %730 = vrot.lane.b32.xlu0 %v175, 12
      %v731 = vpop.permute.xlu0 %730
      %732 = vrot.lane.b32.xlu0 %v177, 12
      %v733 = vpop.permute.xlu0 %732
      %734 = vrot.lane.b32.xlu0 %v178, 12
      %v735 = vpop.permute.xlu0 %734
      %736 = vrot.lane.b32.xlu0 %v180, 12
      %v737 = vpop.permute.xlu0 %736
      %738 = vrot.lane.b32.xlu0 %v181, 12
      %v739 = vpop.permute.xlu0 %738
      %740 = vrot.lane.b32.xlu0 %v183, 12
      %v741 = vpop.permute.xlu0 %740
      %742 = vrot.lane.b32.xlu0 %v184, 12
      %v743 = vpop.permute.xlu0 %742
      %744 = vrot.lane.b32.xlu0 %v186, 12
      %v745 = vpop.permute.xlu0 %744
      %746 = vrot.lane.b32.xlu0 %v187, 12
      %v747 = vpop.permute.xlu0 %746
      %748 = vrot.lane.b32.xlu0 %v189, 12
      %v749 = vpop.permute.xlu0 %748
      %750 = vrot.lane.b32.xlu0 %v190, 12
      %v751 = vpop.permute.xlu0 %750
      %752 = vrot.lane.b32.xlu0 %v192, 12
      %v753 = vpop.permute.xlu0 %752
      %754 = vrot.lane.b32.xlu0 %v193, 12
      %v755 = vpop.permute.xlu0 %754
      %756 = vrot.lane.b32.xlu0 %v195, 12
      %v757 = vpop.permute.xlu0 %756
      %758 = vrot.lane.b32.xlu0 %v196, 12
      %v759 = vpop.permute.xlu0 %758
      %760 = vrot.lane.b32.xlu0 %v198, 12
      %v761 = vpop.permute.xlu0 %760
      %762 = vrot.lane.b32.xlu0 %v199, 12
      %v763 = vpop.permute.xlu0 %762
      %764 = vrot.lane.b32.xlu0 %v201, 12
      %v765 = vpop.permute.xlu0 %764
      %766 = vrot.lane.b32.xlu0 %v202, 12
      %v767 = vpop.permute.xlu0 %766
      %768 = vrot.lane.b32.xlu0 %v204, 12
      %v769 = vpop.permute.xlu0 %768
      %770 = vrot.lane.b32.xlu0 %v205, 12
      %v771 = vpop.permute.xlu0 %770
      %772 = vrot.lane.b32.xlu0 %v207, 12
      %v773 = vpop.permute.xlu0 %772
      %774 = vrot.lane.b32.xlu0 %v208, 12
      %v775 = vpop.permute.xlu0 %774
      %776 = vrot.lane.b32.xlu0 %v210, 12
      %v777 = vpop.permute.xlu0 %776
      %778 = vrot.lane.b32.xlu0 %v211, 12
      %v779 = vpop.permute.xlu0 %778
      %780 = vrot.lane.b32.xlu0 %v213, 12
      %v781 = vpop.permute.xlu0 %780
      %782 = vrot.lane.b32.xlu0 %v214, 12
      %v783 = vpop.permute.xlu0 %782
      %784 = vrot.lane.b32.xlu0 %v216, 12
      %v785 = vpop.permute.xlu0 %784
      %786 = vrot.lane.b32.xlu0 %v217, 12
      %v787 = vpop.permute.xlu0 %786
      %788 = vrot.lane.b32.xlu0 %v219, 12
      %v789 = vpop.permute.xlu0 %788
      %790 = vrot.lane.b32.xlu0 %v220, 12
      %v791 = vpop.permute.xlu0 %790
      %vm824 = vcmask 130144
      %825 = vst.msk [vmem:[#allocation2] sm:$0xff] %vm824, %v729
      %826 = vst.msk [vmem:[#allocation2 + $0x8] sm:$0xff] %vm824, %v731
      %827 = vst.msk [vmem:[#allocation2 + $0x10] sm:$0xff] %vm824, %v733
      %828 = vst.msk [vmem:[#allocation2 + $0x18] sm:$0xff] %vm824, %v735
      %829 = vst.msk [vmem:[#allocation2 + $0x20] sm:$0xff] %vm824, %v737
      %830 = vst.msk [vmem:[#allocation2 + $0x28] sm:$0xff] %vm824, %v739
      %831 = vst.msk [vmem:[#allocation2 + $0x30] sm:$0xff] %vm824, %v741
      %832 = vst.msk [vmem:[#allocation2 + $0x38] sm:$0xff] %vm824, %v743
      %833 = vst.msk [vmem:[#allocation2 + $0x40] sm:$0xff] %vm824, %v745
      %834 = vst.msk [vmem:[#allocation2 + $0x48] sm:$0xff] %vm824, %v747
      %835 = vst.msk [vmem:[#allocation2 + $0x50] sm:$0xff] %vm824, %v749
      %836 = vst.msk [vmem:[#allocation2 + $0x58] sm:$0xff] %vm824, %v751
      %837 = vst.msk [vmem:[#allocation2 + $0x60] sm:$0xff] %vm824, %v753
      %838 = vst.msk [vmem:[#allocation2 + $0x68] sm:$0xff] %vm824, %v755
      %839 = vst.msk [vmem:[#allocation2 + $0x70] sm:$0xff] %vm824, %v757
      %840 = vst.msk [vmem:[#allocation2 + $0x78] sm:$0xff] %vm824, %v759
      %841 = vst.msk [vmem:[#allocation2 + $0x80] sm:$0xff] %vm824, %v761
      %842 = vst.msk [vmem:[#allocation2 + $0x88] sm:$0xff] %vm824, %v763
      %843 = vst.msk [vmem:[#allocation2 + $0x90] sm:$0xff] %vm824, %v765
      %844 = vst.msk [vmem:[#allocation2 + $0x98] sm:$0xff] %vm824, %v767
      %845 = vst.msk [vmem:[#allocation2 + $0xa0] sm:$0xff] %vm824, %v769
      %846 = vst.msk [vmem:[#allocation2 + $0xa8] sm:$0xff] %vm824, %v771
      %847 = vst.msk [vmem:[#allocation2 + $0xb0] sm:$0xff] %vm824, %v773
      %848 = vst.msk [vmem:[#allocation2 + $0xb8] sm:$0xff] %vm824, %v775
      %849 = vst.msk [vmem:[#allocation2 + $0xc0] sm:$0xff] %vm824, %v777
      %850 = vst.msk [vmem:[#allocation2 + $0xc8] sm:$0xff] %vm824, %v779
      %851 = vst.msk [vmem:[#allocation2 + $0xd0] sm:$0xff] %vm824, %v781
      %852 = vst.msk [vmem:[#allocation2 + $0xd8] sm:$0xff] %vm824, %v783
      %853 = vst.msk [vmem:[#allocation2 + $0xe0] sm:$0xff] %vm824, %v785
      %854 = vst.msk [vmem:[#allocation2 + $0xe8] sm:$0xff] %vm824, %v787
      %855 = vst.msk [vmem:[#allocation2 + $0xf0] sm:$0xff] %vm824, %v789
      %856 = vst.msk [vmem:[#allocation2 + $0xf8] sm:$0xff] %vm824, %v791
      %v858 = vrot.slane %v219, 1
      %v859 = vrot.slane %v220, 1
      %v860 = vsel %vm306, %v858, %v859
      %v861 = vrot.slane %v221, 1
      %v862 = vsel %vm306, %v859, %v861
      %863 = vrot.lane.b32.xlu0 %v314, 16
      %v864 = vpop.permute.xlu0 %863
      %865 = vrot.lane.b32.xlu0 %v316, 16
      %v866 = vpop.permute.xlu0 %865
      %867 = vrot.lane.b32.xlu0 %v319, 16
      %v868 = vpop.permute.xlu0 %867
      %869 = vrot.lane.b32.xlu0 %v321, 16
      %v870 = vpop.permute.xlu0 %869
      %871 = vrot.lane.b32.xlu0 %v324, 16
      %v872 = vpop.permute.xlu0 %871
      %873 = vrot.lane.b32.xlu0 %v326, 16
      %v874 = vpop.permute.xlu0 %873
      %875 = vrot.lane.b32.xlu0 %v329, 16
      %v876 = vpop.permute.xlu0 %875
      %877 = vrot.lane.b32.xlu0 %v331, 16
      %v878 = vpop.permute.xlu0 %877
      %879 = vrot.lane.b32.xlu0 %v334, 16
      %v880 = vpop.permute.xlu0 %879
      %881 = vrot.lane.b32.xlu0 %v336, 16
      %v882 = vpop.permute.xlu0 %881
      %883 = vrot.lane.b32.xlu0 %v339, 16
      %v884 = vpop.permute.xlu0 %883
      %885 = vrot.lane.b32.xlu0 %v341, 16
      %v886 = vpop.permute.xlu0 %885
      %887 = vrot.lane.b32.xlu0 %v344, 16
      %v888 = vpop.permute.xlu0 %887
      %889 = vrot.lane.b32.xlu0 %v346, 16
      %v890 = vpop.permute.xlu0 %889
      %891 = vrot.lane.b32.xlu0 %v349, 16
      %v892 = vpop.permute.xlu0 %891
      %893 = vrot.lane.b32.xlu0 %v351, 16
      %v894 = vpop.permute.xlu0 %893
      %895 = vrot.lane.b32.xlu0 %v354, 16
      %v896 = vpop.permute.xlu0 %895
      %897 = vrot.lane.b32.xlu0 %v356, 16
      %v898 = vpop.permute.xlu0 %897
      %899 = vrot.lane.b32.xlu0 %v359, 16
      %v900 = vpop.permute.xlu0 %899
      %901 = vrot.lane.b32.xlu0 %v361, 16
      %v902 = vpop.permute.xlu0 %901
      %903 = vrot.lane.b32.xlu0 %v364, 16
      %v904 = vpop.permute.xlu0 %903
      %905 = vrot.lane.b32.xlu0 %v366, 16
      %v906 = vpop.permute.xlu0 %905
      %907 = vrot.lane.b32.xlu0 %v369, 16
      %v908 = vpop.permute.xlu0 %907
      %909 = vrot.lane.b32.xlu0 %v371, 16
      %v910 = vpop.permute.xlu0 %909
      %911 = vrot.lane.b32.xlu0 %v374, 16
      %v912 = vpop.permute.xlu0 %911
      %913 = vrot.lane.b32.xlu0 %v376, 16
      %v914 = vpop.permute.xlu0 %913
      %915 = vrot.lane.b32.xlu0 %v379, 16
      %v916 = vpop.permute.xlu0 %915
      %917 = vrot.lane.b32.xlu0 %v381, 16
      %v918 = vpop.permute.xlu0 %917
      %919 = vrot.lane.b32.xlu0 %v384, 16
      %v920 = vpop.permute.xlu0 %919
      %921 = vrot.lane.b32.xlu0 %v386, 16
      %v922 = vpop.permute.xlu0 %921
      %923 = vrot.lane.b32.xlu0 %v860, 16
      %v924 = vpop.permute.xlu0 %923
      %925 = vrot.lane.b32.xlu0 %v862, 16
      %v926 = vpop.permute.xlu0 %925
      %vm959 = vcmask 162944
      %960 = vst.msk [vmem:[#allocation2] sm:$0xff] %vm959, %v864
      %961 = vst.msk [vmem:[#allocation2 + $0x8] sm:$0xff] %vm959, %v866
      %962 = vst.msk [vmem:[#allocation2 + $0x10] sm:$0xff] %vm959, %v868
      %963 = vst.msk [vmem:[#allocation2 + $0x18] sm:$0xff] %vm959, %v870
      %964 = vst.msk [vmem:[#allocation2 + $0x20] sm:$0xff] %vm959, %v872
      %965 = vst.msk [vmem:[#allocation2 + $0x28] sm:$0xff] %vm959, %v874
      %966 = vst.msk [vmem:[#allocation2 + $0x30] sm:$0xff] %vm959, %v876
      %967 = vst.msk [vmem:[#allocation2 + $0x38] sm:$0xff] %vm959, %v878
      %968 = vst.msk [vmem:[#allocation2 + $0x40] sm:$0xff] %vm959, %v880
      %969 = vst.msk [vmem:[#allocation2 + $0x48] sm:$0xff] %vm959, %v882
      %970 = vst.msk [vmem:[#allocation2 + $0x50] sm:$0xff] %vm959, %v884
      %971 = vst.msk [vmem:[#allocation2 + $0x58] sm:$0xff] %vm959, %v886
      %972 = vst.msk [vmem:[#allocation2 + $0x60] sm:$0xff] %vm959, %v888
      %973 = vst.msk [vmem:[#allocation2 + $0x68] sm:$0xff] %vm959, %v890
      %974 = vst.msk [vmem:[#allocation2 + $0x70] sm:$0xff] %vm959, %v892
      %975 = vst.msk [vmem:[#allocation2 + $0x78] sm:$0xff] %vm959, %v894
      %976 = vst.msk [vmem:[#allocation2 + $0x80] sm:$0xff] %vm959, %v896
      %977 = vst.msk [vmem:[#allocation2 + $0x88] sm:$0xff] %vm959, %v898
      %978 = vst.msk [vmem:[#allocation2 + $0x90] sm:$0xff] %vm959, %v900
      %979 = vst.msk [vmem:[#allocation2 + $0x98] sm:$0xff] %vm959, %v902
      %980 = vst.msk [vmem:[#allocation2 + $0xa0] sm:$0xff] %vm959, %v904
      %981 = vst.msk [vmem:[#allocation2 + $0xa8] sm:$0xff] %vm959, %v906
      %982 = vst.msk [vmem:[#allocation2 + $0xb0] sm:$0xff] %vm959, %v908
      %983 = vst.msk [vmem:[#allocation2 + $0xb8] sm:$0xff] %vm959, %v910
      %984 = vst.msk [vmem:[#allocation2 + $0xc0] sm:$0xff] %vm959, %v912
      %985 = vst.msk [vmem:[#allocation2 + $0xc8] sm:$0xff] %vm959, %v914
      %986 = vst.msk [vmem:[#allocation2 + $0xd0] sm:$0xff] %vm959, %v916
      %987 = vst.msk [vmem:[#allocation2 + $0xd8] sm:$0xff] %vm959, %v918
      %988 = vst.msk [vmem:[#allocation2 + $0xe0] sm:$0xff] %vm959, %v920
      %989 = vst.msk [vmem:[#allocation2 + $0xe8] sm:$0xff] %vm959, %v922
      %990 = vst.msk [vmem:[#allocation2 + $0xf0] sm:$0xff] %vm959, %v924
      %991 = vst.msk [vmem:[#allocation2 + $0xf8] sm:$0xff] %vm959, %v926
      %v992 = vrot.slane %v219, 2
      %v993 = vrot.slane %v220, 2
      %v994 = vsel %vm516, %v992, %v993
      %v995 = vrot.slane %v221, 2
      %v996 = vsel %vm516, %v993, %v995
      %997 = vrot.lane.b32.xlu0 %v524, 20
      %v998 = vpop.permute.xlu0 %997
      %999 = vrot.lane.b32.xlu0 %v526, 20
      %v1000 = vpop.permute.xlu0 %999
      %1001 = vrot.lane.b32.xlu0 %v529, 20
      %v1002 = vpop.permute.xlu0 %1001
      %1003 = vrot.lane.b32.xlu0 %v531, 20
      %v1004 = vpop.permute.xlu0 %1003
      %1005 = vrot.lane.b32.xlu0 %v534, 20
      %v1006 = vpop.permute.xlu0 %1005
      %1007 = vrot.lane.b32.xlu0 %v536, 20
      %v1008 = vpop.permute.xlu0 %1007
      %1009 = vrot.lane.b32.xlu0 %v539, 20
      %v1010 = vpop.permute.xlu0 %1009
      %1011 = vrot.lane.b32.xlu0 %v541, 20
      %v1012 = vpop.permute.xlu0 %1011
      %1013 = vrot.lane.b32.xlu0 %v544, 20
      %v1014 = vpop.permute.xlu0 %1013
      %1015 = vrot.lane.b32.xlu0 %v546, 20
      %v1016 = vpop.permute.xlu0 %1015
      %1017 = vrot.lane.b32.xlu0 %v549, 20
      %v1018 = vpop.permute.xlu0 %1017
      %1019 = vrot.lane.b32.xlu0 %v551, 20
      %v1020 = vpop.permute.xlu0 %1019
      %1021 = vrot.lane.b32.xlu0 %v554, 20
      %v1022 = vpop.permute.xlu0 %1021
      %1023 = vrot.lane.b32.xlu0 %v556, 20
      %v1024 = vpop.permute.xlu0 %1023
      %1025 = vrot.lane.b32.xlu0 %v559, 20
      %v1026 = vpop.permute.xlu0 %1025
      %1027 = vrot.lane.b32.xlu0 %v561, 20
      %v1028 = vpop.permute.xlu0 %1027
      %1029 = vrot.lane.b32.xlu0 %v564, 20
      %v1030 = vpop.permute.xlu0 %1029
      %1031 = vrot.lane.b32.xlu0 %v566, 20
      %v1032 = vpop.permute.xlu0 %1031
      %1033 = vrot.lane.b32.xlu0 %v569, 20
      %v1034 = vpop.permute.xlu0 %1033
      %1035 = vrot.lane.b32.xlu0 %v571, 20
      %v1036 = vpop.permute.xlu0 %1035
      %1037 = vrot.lane.b32.xlu0 %v574, 20
      %v1038 = vpop.permute.xlu0 %1037
      %1039 = vrot.lane.b32.xlu0 %v576, 20
      %v1040 = vpop.permute.xlu0 %1039
      %1041 = vrot.lane.b32.xlu0 %v579, 20
      %v1042 = vpop.permute.xlu0 %1041
      %1043 = vrot.lane.b32.xlu0 %v581, 20
      %v1044 = vpop.permute.xlu0 %1043
      %1045 = vrot.lane.b32.xlu0 %v584, 20
      %v1046 = vpop.permute.xlu0 %1045
      %1047 = vrot.lane.b32.xlu0 %v586, 20
      %v1048 = vpop.permute.xlu0 %1047
      %1049 = vrot.lane.b32.xlu0 %v589, 20
      %v1050 = vpop.permute.xlu0 %1049
      %1051 = vrot.lane.b32.xlu0 %v591, 20
      %v1052 = vpop.permute.xlu0 %1051
      %1053 = vrot.lane.b32.xlu0 %v594, 20
      %v1054 = vpop.permute.xlu0 %1053
      %1055 = vrot.lane.b32.xlu0 %v596, 20
      %v1056 = vpop.permute.xlu0 %1055
      %1057 = vrot.lane.b32.xlu0 %v994, 20
      %v1058 = vpop.permute.xlu0 %1057
      %1059 = vrot.lane.b32.xlu0 %v996, 20
      %v1060 = vpop.permute.xlu0 %1059
      %vm1093 = vcmask 195744
      %1094 = vst.msk [vmem:[#allocation2] sm:$0xff] %vm1093, %v998
      %1095 = vst.msk [vmem:[#allocation2 + $0x8] sm:$0xff] %vm1093, %v1000
      %1096 = vst.msk [vmem:[#allocation2 + $0x10] sm:$0xff] %vm1093, %v1002
      %1097 = vst.msk [vmem:[#allocation2 + $0x18] sm:$0xff] %vm1093, %v1004
      %1098 = vst.msk [vmem:[#allocation2 + $0x20] sm:$0xff] %vm1093, %v1006
      %1099 = vst.msk [vmem:[#allocation2 + $0x28] sm:$0xff] %vm1093, %v1008
      %1100 = vst.msk [vmem:[#allocation2 + $0x30] sm:$0xff] %vm1093, %v1010
      %1101 = vst.msk [vmem:[#allocation2 + $0x38] sm:$0xff] %vm1093, %v1012
      %1102 = vst.msk [vmem:[#allocation2 + $0x40] sm:$0xff] %vm1093, %v1014
      %1103 = vst.msk [vmem:[#allocation2 + $0x48] sm:$0xff] %vm1093, %v1016
      %1104 = vst.msk [vmem:[#allocation2 + $0x50] sm:$0xff] %vm1093, %v1018
      %1105 = vst.msk [vmem:[#allocation2 + $0x58] sm:$0xff] %vm1093, %v1020
      %1106 = vst.msk [vmem:[#allocation2 + $0x60] sm:$0xff] %vm1093, %v1022
      %1107 = vst.msk [vmem:[#allocation2 + $0x68] sm:$0xff] %vm1093, %v1024
      %1108 = vst.msk [vmem:[#allocation2 + $0x70] sm:$0xff] %vm1093, %v1026
      %1109 = vst.msk [vmem:[#allocation2 + $0x78] sm:$0xff] %vm1093, %v1028
      %1110 = vst.msk [vmem:[#allocation2 + $0x80] sm:$0xff] %vm1093, %v1030
      %1111 = vst.msk [vmem:[#allocation2 + $0x88] sm:$0xff] %vm1093, %v1032
      %1112 = vst.msk [vmem:[#allocation2 + $0x90] sm:$0xff] %vm1093, %v1034
      %1113 = vst.msk [vmem:[#allocation2 + $0x98] sm:$0xff] %vm1093, %v1036
      %1114 = vst.msk [vmem:[#allocation2 + $0xa0] sm:$0xff] %vm1093, %v1038
      %1115 = vst.msk [vmem:[#allocation2 + $0xa8] sm:$0xff] %vm1093, %v1040
      %1116 = vst.msk [vmem:[#allocation2 + $0xb0] sm:$0xff] %vm1093, %v1042
      %1117 = vst.msk [vmem:[#allocation2 + $0xb8] sm:$0xff] %vm1093, %v1044
      %1118 = vst.msk [vmem:[#allocation2 + $0xc0] sm:$0xff] %vm1093, %v1046
      %1119 = vst.msk [vmem:[#allocation2 + $0xc8] sm:$0xff] %vm1093, %v1048
      %1120 = vst.msk [vmem:[#allocation2 + $0xd0] sm:$0xff] %vm1093, %v1050
      %1121 = vst.msk [vmem:[#allocation2 + $0xd8] sm:$0xff] %vm1093, %v1052
      %1122 = vst.msk [vmem:[#allocation2 + $0xe0] sm:$0xff] %vm1093, %v1054
      %1123 = vst.msk [vmem:[#allocation2 + $0xe8] sm:$0xff] %vm1093, %v1056
      %1124 = vst.msk [vmem:[#allocation2 + $0xf0] sm:$0xff] %vm1093, %v1058
      %1125 = vst.msk [vmem:[#allocation2 + $0xf8] sm:$0xff] %vm1093, %v1060
      %1128 = vrot.lane.b32.xlu0 %v177, 24
      %v1129 = vpop.permute.xlu0 %1128
      %1130 = vrot.lane.b32.xlu0 %v178, 24
      %v1131 = vpop.permute.xlu0 %1130
      %1132 = vrot.lane.b32.xlu0 %v180, 24
      %v1133 = vpop.permute.xlu0 %1132
      %1134 = vrot.lane.b32.xlu0 %v181, 24
      %v1135 = vpop.permute.xlu0 %1134
      %1136 = vrot.lane.b32.xlu0 %v183, 24
      %v1137 = vpop.permute.xlu0 %1136
      %1138 = vrot.lane.b32.xlu0 %v184, 24
      %v1139 = vpop.permute.xlu0 %1138
      %1140 = vrot.lane.b32.xlu0 %v186, 24
      %v1141 = vpop.permute.xlu0 %1140
      %1142 = vrot.lane.b32.xlu0 %v187, 24
      %v1143 = vpop.permute.xlu0 %1142
      %1144 = vrot.lane.b32.xlu0 %v189, 24
      %v1145 = vpop.permute.xlu0 %1144
      %1146 = vrot.lane.b32.xlu0 %v190, 24
      %v1147 = vpop.permute.xlu0 %1146
      %1148 = vrot.lane.b32.xlu0 %v192, 24
      %v1149 = vpop.permute.xlu0 %1148
      %1150 = vrot.lane.b32.xlu0 %v193, 24
      %v1151 = vpop.permute.xlu0 %1150
      %1152 = vrot.lane.b32.xlu0 %v195, 24
      %v1153 = vpop.permute.xlu0 %1152
      %1154 = vrot.lane.b32.xlu0 %v196, 24
      %v1155 = vpop.permute.xlu0 %1154
      %1156 = vrot.lane.b32.xlu0 %v198, 24
      %v1157 = vpop.permute.xlu0 %1156
      %1158 = vrot.lane.b32.xlu0 %v199, 24
      %v1159 = vpop.permute.xlu0 %1158
      %1160 = vrot.lane.b32.xlu0 %v201, 24
      %v1161 = vpop.permute.xlu0 %1160
      %1162 = vrot.lane.b32.xlu0 %v202, 24
      %v1163 = vpop.permute.xlu0 %1162
      %1164 = vrot.lane.b32.xlu0 %v204, 24
      %v1165 = vpop.permute.xlu0 %1164
      %1166 = vrot.lane.b32.xlu0 %v205, 24
      %v1167 = vpop.permute.xlu0 %1166
      %1168 = vrot.lane.b32.xlu0 %v207, 24
      %v1169 = vpop.permute.xlu0 %1168
      %1170 = vrot.lane.b32.xlu0 %v208, 24
      %v1171 = vpop.permute.xlu0 %1170
      %1172 = vrot.lane.b32.xlu0 %v210, 24
      %v1173 = vpop.permute.xlu0 %1172
      %1174 = vrot.lane.b32.xlu0 %v211, 24
      %v1175 = vpop.permute.xlu0 %1174
      %1176 = vrot.lane.b32.xlu0 %v213, 24
      %v1177 = vpop.permute.xlu0 %1176
      %1178 = vrot.lane.b32.xlu0 %v214, 24
      %v1179 = vpop.permute.xlu0 %1178
      %1180 = vrot.lane.b32.xlu0 %v216, 24
      %v1181 = vpop.permute.xlu0 %1180
      %1182 = vrot.lane.b32.xlu0 %v217, 24
      %v1183 = vpop.permute.xlu0 %1182
      %1184 = vrot.lane.b32.xlu0 %v219, 24
      %v1185 = vpop.permute.xlu0 %1184
      %1186 = vrot.lane.b32.xlu0 %v220, 24
      %v1187 = vpop.permute.xlu0 %1186
      %1188 = vrot.lane.b32.xlu0 %v222, 24
      %v1189 = vpop.permute.xlu0 %1188
      %1190 = vrot.lane.b32.xlu0 %v223, 24
      %v1191 = vpop.permute.xlu0 %1190
      %vm1224 = vcmask 228544
      %1225 = vst.msk [vmem:[#allocation2] sm:$0xff] %vm1224, %v1129
      %1226 = vst.msk [vmem:[#allocation2 + $0x8] sm:$0xff] %vm1224, %v1131
      %1227 = vst.msk [vmem:[#allocation2 + $0x10] sm:$0xff] %vm1224, %v1133
      %1228 = vst.msk [vmem:[#allocation2 + $0x18] sm:$0xff] %vm1224, %v1135
      %1229 = vst.msk [vmem:[#allocation2 + $0x20] sm:$0xff] %vm1224, %v1137
      %1230 = vst.msk [vmem:[#allocation2 + $0x28] sm:$0xff] %vm1224, %v1139
      %1231 = vst.msk [vmem:[#allocation2 + $0x30] sm:$0xff] %vm1224, %v1141
      %1232 = vst.msk [vmem:[#allocation2 + $0x38] sm:$0xff] %vm1224, %v1143
      %1233 = vst.msk [vmem:[#allocation2 + $0x40] sm:$0xff] %vm1224, %v1145
      %1234 = vst.msk [vmem:[#allocation2 + $0x48] sm:$0xff] %vm1224, %v1147
      %1235 = vst.msk [vmem:[#allocation2 + $0x50] sm:$0xff] %vm1224, %v1149
      %1236 = vst.msk [vmem:[#allocation2 + $0x58] sm:$0xff] %vm1224, %v1151
      %1237 = vst.msk [vmem:[#allocation2 + $0x60] sm:$0xff] %vm1224, %v1153
      %1238 = vst.msk [vmem:[#allocation2 + $0x68] sm:$0xff] %vm1224, %v1155
      %1239 = vst.msk [vmem:[#allocation2 + $0x70] sm:$0xff] %vm1224, %v1157
      %1240 = vst.msk [vmem:[#allocation2 + $0x78] sm:$0xff] %vm1224, %v1159
      %1241 = vst.msk [vmem:[#allocation2 + $0x80] sm:$0xff] %vm1224, %v1161
      %1242 = vst.msk [vmem:[#allocation2 + $0x88] sm:$0xff] %vm1224, %v1163
      %1243 = vst.msk [vmem:[#allocation2 + $0x90] sm:$0xff] %vm1224, %v1165
      %1244 = vst.msk [vmem:[#allocation2 + $0x98] sm:$0xff] %vm1224, %v1167
      %1245 = vst.msk [vmem:[#allocation2 + $0xa0] sm:$0xff] %vm1224, %v1169
      %1246 = vst.msk [vmem:[#allocation2 + $0xa8] sm:$0xff] %vm1224, %v1171
      %1247 = vst.msk [vmem:[#allocation2 + $0xb0] sm:$0xff] %vm1224, %v1173
      %1248 = vst.msk [vmem:[#allocation2 + $0xb8] sm:$0xff] %vm1224, %v1175
      %1249 = vst.msk [vmem:[#allocation2 + $0xc0] sm:$0xff] %vm1224, %v1177
      %1250 = vst.msk [vmem:[#allocation2 + $0xc8] sm:$0xff] %vm1224, %v1179
      %1251 = vst.msk [vmem:[#allocation2 + $0xd0] sm:$0xff] %vm1224, %v1181
      %1252 = vst.msk [vmem:[#allocation2 + $0xd8] sm:$0xff] %vm1224, %v1183
      %1253 = vst.msk [vmem:[#allocation2 + $0xe0] sm:$0xff] %vm1224, %v1185
      %1254 = vst.msk [vmem:[#allocation2 + $0xe8] sm:$0xff] %vm1224, %v1187
      %1255 = vst.msk [vmem:[#allocation2 + $0xf0] sm:$0xff] %vm1224, %v1189
      %1256 = vst.msk [vmem:[#allocation2 + $0xf8] sm:$0xff] %vm1224, %v1191
      %v1258 = vrot.slane %v222, 1
      %v1259 = vrot.slane %v223, 1
      %v1260 = vsel %vm306, %v1258, %v1259
      %v1261 = vrot.slane %v224, 1
      %v1262 = vsel %vm306, %v1259, %v1261
      %1263 = vrot.lane.b32.xlu0 %v319, 28
      %v1264 = vpop.permute.xlu0 %1263
      %1265 = vrot.lane.b32.xlu0 %v321, 28
      %v1266 = vpop.permute.xlu0 %1265
      %1267 = vrot.lane.b32.xlu0 %v324, 28
      %v1268 = vpop.permute.xlu0 %1267
      %1269 = vrot.lane.b32.xlu0 %v326, 28
      %v1270 = vpop.permute.xlu0 %1269
      %1271 = vrot.lane.b32.xlu0 %v329, 28
      %v1272 = vpop.permute.xlu0 %1271
      %1273 = vrot.lane.b32.xlu0 %v331, 28
      %v1274 = vpop.permute.xlu0 %1273
      %1275 = vrot.lane.b32.xlu0 %v334, 28
      %v1276 = vpop.permute.xlu0 %1275
      %1277 = vrot.lane.b32.xlu0 %v336, 28
      %v1278 = vpop.permute.xlu0 %1277
      %1279 = vrot.lane.b32.xlu0 %v339, 28
      %v1280 = vpop.permute.xlu0 %1279
      %1281 = vrot.lane.b32.xlu0 %v341, 28
      %v1282 = vpop.permute.xlu0 %1281
      %1283 = vrot.lane.b32.xlu0 %v344, 28
      %v1284 = vpop.permute.xlu0 %1283
      %1285 = vrot.lane.b32.xlu0 %v346, 28
      %v1286 = vpop.permute.xlu0 %1285
      %1287 = vrot.lane.b32.xlu0 %v349, 28
      %v1288 = vpop.permute.xlu0 %1287
      %1289 = vrot.lane.b32.xlu0 %v351, 28
      %v1290 = vpop.permute.xlu0 %1289
      %1291 = vrot.lane.b32.xlu0 %v354, 28
      %v1292 = vpop.permute.xlu0 %1291
      %1293 = vrot.lane.b32.xlu0 %v356, 28
      %v1294 = vpop.permute.xlu0 %1293
      %1295 = vrot.lane.b32.xlu0 %v359, 28
      %v1296 = vpop.permute.xlu0 %1295
      %1297 = vrot.lane.b32.xlu0 %v361, 28
      %v1298 = vpop.permute.xlu0 %1297
      %1299 = vrot.lane.b32.xlu0 %v364, 28
      %v1300 = vpop.permute.xlu0 %1299
      %1301 = vrot.lane.b32.xlu0 %v366, 28
      %v1302 = vpop.permute.xlu0 %1301
      %1303 = vrot.lane.b32.xlu0 %v369, 28
      %v1304 = vpop.permute.xlu0 %1303
      %1305 = vrot.lane.b32.xlu0 %v371, 28
      %v1306 = vpop.permute.xlu0 %1305
      %1307 = vrot.lane.b32.xlu0 %v374, 28
      %v1308 = vpop.permute.xlu0 %1307
      %1309 = vrot.lane.b32.xlu0 %v376, 28
      %v1310 = vpop.permute.xlu0 %1309
      %1311 = vrot.lane.b32.xlu0 %v379, 28
      %v1312 = vpop.permute.xlu0 %1311
      %1313 = vrot.lane.b32.xlu0 %v381, 28
      %v1314 = vpop.permute.xlu0 %1313
      %1315 = vrot.lane.b32.xlu0 %v384, 28
      %v1316 = vpop.permute.xlu0 %1315
      %1317 = vrot.lane.b32.xlu0 %v386, 28
      %v1318 = vpop.permute.xlu0 %1317
      %1319 = vrot.lane.b32.xlu0 %v860, 28
      %v1320 = vpop.permute.xlu0 %1319
      %1321 = vrot.lane.b32.xlu0 %v862, 28
      %v1322 = vpop.permute.xlu0 %1321
      %1323 = vrot.lane.b32.xlu0 %v1260, 28
      %v1324 = vpop.permute.xlu0 %1323
      %1325 = vrot.lane.b32.xlu0 %v1262, 28
      %v1326 = vpop.permute.xlu0 %1325
      %vm1359 = vcmask 261344
      %1360 = vst.msk [vmem:[#allocation2] sm:$0xff] %vm1359, %v1264
      %1361 = vst.msk [vmem:[#allocation2 + $0x8] sm:$0xff] %vm1359, %v1266
      %1362 = vst.msk [vmem:[#allocation2 + $0x10] sm:$0xff] %vm1359, %v1268
      %1363 = vst.msk [vmem:[#allocation2 + $0x18] sm:$0xff] %vm1359, %v1270
      %1364 = vst.msk [vmem:[#allocation2 + $0x20] sm:$0xff] %vm1359, %v1272
      %1365 = vst.msk [vmem:[#allocation2 + $0x28] sm:$0xff] %vm1359, %v1274
      %1366 = vst.msk [vmem:[#allocation2 + $0x30] sm:$0xff] %vm1359, %v1276
      %1367 = vst.msk [vmem:[#allocation2 + $0x38] sm:$0xff] %vm1359, %v1278
      %1368 = vst.msk [vmem:[#allocation2 + $0x40] sm:$0xff] %vm1359, %v1280
      %1369 = vst.msk [vmem:[#allocation2 + $0x48] sm:$0xff] %vm1359, %v1282
      %1370 = vst.msk [vmem:[#allocation2 + $0x50] sm:$0xff] %vm1359, %v1284
      %1371 = vst.msk [vmem:[#allocation2 + $0x58] sm:$0xff] %vm1359, %v1286
      %1372 = vst.msk [vmem:[#allocation2 + $0x60] sm:$0xff] %vm1359, %v1288
      %1373 = vst.msk [vmem:[#allocation2 + $0x68] sm:$0xff] %vm1359, %v1290
      %1374 = vst.msk [vmem:[#allocation2 + $0x70] sm:$0xff] %vm1359, %v1292
      %1375 = vst.msk [vmem:[#allocation2 + $0x78] sm:$0xff] %vm1359, %v1294
      %1376 = vst.msk [vmem:[#allocation2 + $0x80] sm:$0xff] %vm1359, %v1296
      %1377 = vst.msk [vmem:[#allocation2 + $0x88] sm:$0xff] %vm1359, %v1298
      %1378 = vst.msk [vmem:[#allocation2 + $0x90] sm:$0xff] %vm1359, %v1300
      %1379 = vst.msk [vmem:[#allocation2 + $0x98] sm:$0xff] %vm1359, %v1302
      %1380 = vst.msk [vmem:[#allocation2 + $0xa0] sm:$0xff] %vm1359, %v1304
      %1381 = vst.msk [vmem:[#allocation2 + $0xa8] sm:$0xff] %vm1359, %v1306
      %1382 = vst.msk [vmem:[#allocation2 + $0xb0] sm:$0xff] %vm1359, %v1308
      %1383 = vst.msk [vmem:[#allocation2 + $0xb8] sm:$0xff] %vm1359, %v1310
      %1384 = vst.msk [vmem:[#allocation2 + $0xc0] sm:$0xff] %vm1359, %v1312
      %1385 = vst.msk [vmem:[#allocation2 + $0xc8] sm:$0xff] %vm1359, %v1314
      %1386 = vst.msk [vmem:[#allocation2 + $0xd0] sm:$0xff] %vm1359, %v1316
      %1387 = vst.msk [vmem:[#allocation2 + $0xd8] sm:$0xff] %vm1359, %v1318
      %1388 = vst.msk [vmem:[#allocation2 + $0xe0] sm:$0xff] %vm1359, %v1320
      %1389 = vst.msk [vmem:[#allocation2 + $0xe8] sm:$0xff] %vm1359, %v1322
      %1390 = vst.msk [vmem:[#allocation2 + $0xf0] sm:$0xff] %vm1359, %v1324
      %1391 = vst.msk [vmem:[#allocation2 + $0xf8] sm:$0xff] %vm1359, %v1326
      %v1392 = vrot.slane %v222, 2
      %v1393 = vrot.slane %v223, 2
      %v1394 = vsel %vm516, %v1392, %v1393
      %v1395 = vrot.slane %v224, 2
      %v1396 = vsel %vm516, %v1393, %v1395
      %1397 = vrot.lane.b32.xlu0 %v529, 32
      %v1398 = vpop.permute.xlu0 %1397
      %1399 = vrot.lane.b32.xlu0 %v531, 32
      %v1400 = vpop.permute.xlu0 %1399
      %1401 = vrot.lane.b32.xlu0 %v534, 32
      %v1402 = vpop.permute.xlu0 %1401
      %1403 = vrot.lane.b32.xlu0 %v536, 32
      %v1404 = vpop.permute.xlu0 %1403
      %1405 = vrot.lane.b32.xlu0 %v539, 32
      %v1406 = vpop.permute.xlu0 %1405
      %1407 = vrot.lane.b32.xlu0 %v541, 32
      %v1408 = vpop.permute.xlu0 %1407
      %1409 = vrot.lane.b32.xlu0 %v544, 32
      %v1410 = vpop.permute.xlu0 %1409
      %1411 = vrot.lane.b32.xlu0 %v546, 32
      %v1412 = vpop.permute.xlu0 %1411
      %1413 = vrot.lane.b32.xlu0 %v549, 32
      %v1414 = vpop.permute.xlu0 %1413
      %1415 = vrot.lane.b32.xlu0 %v551, 32
      %v1416 = vpop.permute.xlu0 %1415
      %1417 = vrot.lane.b32.xlu0 %v554, 32
      %v1418 = vpop.permute.xlu0 %1417
      %1419 = vrot.lane.b32.xlu0 %v556, 32
      %v1420 = vpop.permute.xlu0 %1419
      %1421 = vrot.lane.b32.xlu0 %v559, 32
      %v1422 = vpop.permute.xlu0 %1421
      %1423 = vrot.lane.b32.xlu0 %v561, 32
      %v1424 = vpop.permute.xlu0 %1423
      %1425 = vrot.lane.b32.xlu0 %v564, 32
      %v1426 = vpop.permute.xlu0 %1425
      %1427 = vrot.lane.b32.xlu0 %v566, 32
      %v1428 = vpop.permute.xlu0 %1427
      %1429 = vrot.lane.b32.xlu0 %v569, 32
      %v1430 = vpop.permute.xlu0 %1429
      %1431 = vrot.lane.b32.xlu0 %v571, 32
      %v1432 = vpop.permute.xlu0 %1431
      %1433 = vrot.lane.b32.xlu0 %v574, 32
      %v1434 = vpop.permute.xlu0 %1433
      %1435 = vrot.lane.b32.xlu0 %v576, 32
      %v1436 = vpop.permute.xlu0 %1435
      %1437 = vrot.lane.b32.xlu0 %v579, 32
      %v1438 = vpop.permute.xlu0 %1437
      %1439 = vrot.lane.b32.xlu0 %v581, 32
      %v1440 = vpop.permute.xlu0 %1439
      %1441 = vrot.lane.b32.xlu0 %v584, 32
      %v1442 = vpop.permute.xlu0 %1441
      %1443 = vrot.lane.b32.xlu0 %v586, 32
      %v1444 = vpop.permute.xlu0 %1443
      %1445 = vrot.lane.b32.xlu0 %v589, 32
      %v1446 = vpop.permute.xlu0 %1445
      %1447 = vrot.lane.b32.xlu0 %v591, 32
      %v1448 = vpop.permute.xlu0 %1447
      %1449 = vrot.lane.b32.xlu0 %v594, 32
      %v1450 = vpop.permute.xlu0 %1449
      %1451 = vrot.lane.b32.xlu0 %v596, 32
      %v1452 = vpop.permute.xlu0 %1451
      %1453 = vrot.lane.b32.xlu0 %v994, 32
      %v1454 = vpop.permute.xlu0 %1453
      %1455 = vrot.lane.b32.xlu0 %v996, 32
      %v1456 = vpop.permute.xlu0 %1455
      %1457 = vrot.lane.b32.xlu0 %v1394, 32
      %v1458 = vpop.permute.xlu0 %1457
      %1459 = vrot.lane.b32.xlu0 %v1396, 32
      %v1460 = vpop.permute.xlu0 %1459
      %vm1493 = vcmask 294144
      %1494 = vst.msk [vmem:[#allocation2] sm:$0xff] %vm1493, %v1398
      %1495 = vst.msk [vmem:[#allocation2 + $0x8] sm:$0xff] %vm1493, %v1400
      %1496 = vst.msk [vmem:[#allocation2 + $0x10] sm:$0xff] %vm1493, %v1402
      %1497 = vst.msk [vmem:[#allocation2 + $0x18] sm:$0xff] %vm1493, %v1404
      %1498 = vst.msk [vmem:[#allocation2 + $0x20] sm:$0xff] %vm1493, %v1406
      %1499 = vst.msk [vmem:[#allocation2 + $0x28] sm:$0xff] %vm1493, %v1408
      %1500 = vst.msk [vmem:[#allocation2 + $0x30] sm:$0xff] %vm1493, %v1410
      %1501 = vst.msk [vmem:[#allocation2 + $0x38] sm:$0xff] %vm1493, %v1412
      %1502 = vst.msk [vmem:[#allocation2 + $0x40] sm:$0xff] %vm1493, %v1414
      %1503 = vst.msk [vmem:[#allocation2 + $0x48] sm:$0xff] %vm1493, %v1416
      %1504 = vst.msk [vmem:[#allocation2 + $0x50] sm:$0xff] %vm1493, %v1418
      %1505 = vst.msk [vmem:[#allocation2 + $0x58] sm:$0xff] %vm1493, %v1420
      %1506 = vst.msk [vmem:[#allocation2 + $0x60] sm:$0xff] %vm1493, %v1422
      %1507 = vst.msk [vmem:[#allocation2 + $0x68] sm:$0xff] %vm1493, %v1424
      %1508 = vst.msk [vmem:[#allocation2 + $0x70] sm:$0xff] %vm1493, %v1426
      %1509 = vst.msk [vmem:[#allocation2 + $0x78] sm:$0xff] %vm1493, %v1428
      %1510 = vst.msk [vmem:[#allocation2 + $0x80] sm:$0xff] %vm1493, %v1430
      %1511 = vst.msk [vmem:[#allocation2 + $0x88] sm:$0xff] %vm1493, %v1432
      %1512 = vst.msk [vmem:[#allocation2 + $0x90] sm:$0xff] %vm1493, %v1434
      %1513 = vst.msk [vmem:[#allocation2 + $0x98] sm:$0xff] %vm1493, %v1436
      %1514 = vst.msk [vmem:[#allocation2 + $0xa0] sm:$0xff] %vm1493, %v1438
      %1515 = vst.msk [vmem:[#allocation2 + $0xa8] sm:$0xff] %vm1493, %v1440
      %1516 = vst.msk [vmem:[#allocation2 + $0xb0] sm:$0xff] %vm1493, %v1442
      %1517 = vst.msk [vmem:[#allocation2 + $0xb8] sm:$0xff] %vm1493, %v1444
      %1518 = vst.msk [vmem:[#allocation2 + $0xc0] sm:$0xff] %vm1493, %v1446
      %1519 = vst.msk [vmem:[#allocation2 + $0xc8] sm:$0xff] %vm1493, %v1448
      %1520 = vst.msk [vmem:[#allocation2 + $0xd0] sm:$0xff] %vm1493, %v1450
      %1521 = vst.msk [vmem:[#allocation2 + $0xd8] sm:$0xff] %vm1493, %v1452
      %1522 = vst.msk [vmem:[#allocation2 + $0xe0] sm:$0xff] %vm1493, %v1454
      %1523 = vst.msk [vmem:[#allocation2 + $0xe8] sm:$0xff] %vm1493, %v1456
      %1524 = vst.msk [vmem:[#allocation2 + $0xf0] sm:$0xff] %vm1493, %v1458
      %1525 = vst.msk [vmem:[#allocation2 + $0xf8] sm:$0xff] %vm1493, %v1460
      %v1526 = vld [vmem:[#allocation2] sm:$0xff]
      %v1527 = vld [vmem:[#allocation2 + $0x8] sm:$0xff]
      %v1528 = vld [vmem:[#allocation2 + $0x10] sm:$0xff]
      %v1529 = vld [vmem:[#allocation2 + $0x18] sm:$0xff]
      %v1530 = vld [vmem:[#allocation2 + $0x20] sm:$0xff]
      %v1531 = vld [vmem:[#allocation2 + $0x28] sm:$0xff]
      %v1532 = vld [vmem:[#allocation2 + $0x30] sm:$0xff]
      %v1533 = vld [vmem:[#allocation2 + $0x38] sm:$0xff]
      %v1534 = vld [vmem:[#allocation2 + $0x40] sm:$0xff]
      %v1535 = vld [vmem:[#allocation2 + $0x48] sm:$0xff]
      %v1536 = vld [vmem:[#allocation2 + $0x50] sm:$0xff]
      %v1537 = vld [vmem:[#allocation2 + $0x58] sm:$0xff]
      %v1538 = vld [vmem:[#allocation2 + $0x60] sm:$0xff]
      %v1539 = vld [vmem:[#allocation2 + $0x68] sm:$0xff]
      %v1540 = vld [vmem:[#allocation2 + $0x70] sm:$0xff]
      %v1541 = vld [vmem:[#allocation2 + $0x78] sm:$0xff]
      %v1542 = vld [vmem:[#allocation2 + $0x80] sm:$0xff]
      %v1543 = vld [vmem:[#allocation2 + $0x88] sm:$0xff]
      %v1544 = vld [vmem:[#allocation2 + $0x90] sm:$0xff]
      %v1545 = vld [vmem:[#allocation2 + $0x98] sm:$0xff]
      %v1546 = vld [vmem:[#allocation2 + $0xa0] sm:$0xff]
      %v1547 = vld [vmem:[#allocation2 + $0xa8] sm:$0xff]
      %v1548 = vld [vmem:[#allocation2 + $0xb0] sm:$0xff]
      %v1549 = vld [vmem:[#allocation2 + $0xb8] sm:$0xff]
      %v1550 = vld [vmem:[#allocation2 + $0xc0] sm:$0xff]
      %v1551 = vld [vmem:[#allocation2 + $0xc8] sm:$0xff]
      %v1552 = vld [vmem:[#allocation2 + $0xd0] sm:$0xff]
      %v1553 = vld [vmem:[#allocation2 + $0xd8] sm:$0xff]
      %v1554 = vld [vmem:[#allocation2 + $0xe0] sm:$0xff]
      %v1555 = vld [vmem:[#allocation2 + $0xe8] sm:$0xff]
      %v1556 = vld [vmem:[#allocation2 + $0xf0] sm:$0xff]
      %v1557 = vld [vmem:[#allocation2 + $0xf8] sm:$0xff]
      %v1558 = vld [vmem:[%s1] sm:$0xff]
      %v1559 = vld [vmem:[%s1 + $0x8] sm:$0xff]
      %v1560 = vld [vmem:[%s1 + $0x10] sm:$0xff]
      %v1561 = vld [vmem:[%s1 + $0x18] sm:$0xff]
      %v1562 = vld [vmem:[%s1 + $0x20] sm:$0xf]
      %vm1563 = vcmask 293888
      %v1565 = vsel %vm1563, %v1526, 0
      %v1568 = vsel %vm1563, %v1527, 0
      %v1571 = vsel %vm1563, %v1528, 0
      %v1574 = vsel %vm1563, %v1529, 0
      %v1577 = vsel %vm1563, %v1530, 0
      %v1580 = vsel %vm1563, %v1531, 0
      %v1583 = vsel %vm1563, %v1532, 0
      %v1586 = vsel %vm1563, %v1533, 0
      %v1589 = vsel %vm1563, %v1534, 0
      %v1592 = vsel %vm1563, %v1535, 0
      %v1595 = vsel %vm1563, %v1536, 0
      %v1598 = vsel %vm1563, %v1537, 0
      %v1601 = vsel %vm1563, %v1538, 0
      %v1604 = vsel %vm1563, %v1539, 0
      %v1607 = vsel %vm1563, %v1540, 0
      %v1610 = vsel %vm1563, %v1541, 0
      %v1613 = vsel %vm1563, %v1542, 0
      %v1616 = vsel %vm1563, %v1543, 0
      %v1619 = vsel %vm1563, %v1544, 0
      %v1622 = vsel %vm1563, %v1545, 0
      %v1625 = vsel %vm1563, %v1546, 0
      %v1628 = vsel %vm1563, %v1547, 0
      %v1631 = vsel %vm1563, %v1548, 0
      %v1634 = vsel %vm1563, %v1549, 0
      %v1637 = vsel %vm1563, %v1550, 0
      %v1640 = vsel %vm1563, %v1551, 0
      %v1643 = vsel %vm1563, %v1552, 0
      %v1646 = vsel %vm1563, %v1553, 0
      %v1649 = vsel %vm1563, %v1554, 0
      %v1652 = vsel %vm1563, %v1555, 0
      %v1655 = vsel %vm1563, %v1556, 0
      %v1658 = vsel %vm1563, %v1557, 0
      %vm1660 = vcmask 1043456
      %v1662 = vsel %vm1660, %v1562, 0
      %1664 = vmatprep.subr.mxu0 0.0
      %1665 = vmatpush1.msra.mxu0 0.0
      %1666 = vmatprep.subr.mxu0 0.0
      %1667 = vmatpush1.msra.mxu0 0.0
      %1668 = vmatprep.subr.mxu0 0.0
      %1669 = vmatpush1.msra.mxu0 0.0
      %1670 = vmatprep.subr.mxu0 0.0
      %1671 = vmatpush1.msra.mxu0 0.0
      %1672 = vmatprep.subr.mxu0 0.0
      %1673 = vmatpush1.msra.mxu0 0.0
      %1674 = vmatprep.subr.mxu0 0.0
      %1675 = vmatpush1.msra.mxu0 0.0
      %1676 = vmatprep.subr.mxu0 0.0
      %1677 = vmatpush1.msra.mxu0 0.0
      %1678 = vmatprep.subr.mxu0 0.0
      %1679 = vmatpush1.msra.mxu0 0.0
      %1680 = vmatprep.subr.mxu0 0.0
      %1681 = vmatpush1.msra.mxu0 0.0
      %1682 = vmatprep.subr.mxu0 0.0
      %1683 = vmatpush1.msra.mxu0 0.0
      %1684 = vmatprep.subr.mxu0 0.0
      %1685 = vmatpush1.msra.mxu0 0.0
      %1686 = vmatprep.subr.mxu0 0.0
      %1687 = vmatpush1.msra.mxu0 %v1662
      %1688 = vmatprep.subr.mxu0 0.0
      %1689 = vmatpush1.msra.mxu0 %v1561
      %1690 = vmatprep.subr.mxu0 0.0
      %1691 = vmatpush1.msra.mxu0 %v1560
      %1692 = vmatprep.subr.mxu0 0.0
      %1693 = vmatpush1.msra.mxu0 %v1559
      %1694 = vmatprep.subr.mxu0 0.0
      %1695 = vmatpush1.msra.mxu0 %v1558
      %1696 = vmatprep.subr.mxu0 0.0
      %1697 = vmatpush2.msra.mxu0 0.0
      %1698 = vmatprep.subr.mxu0 0.0
      %1699 = vmatpush2.msra.mxu0 0.0
      %1700 = vmatprep.subr.mxu0 0.0
      %1701 = vmatpush2.msra.mxu0 0.0
      %1702 = vmatprep.subr.mxu0 0.0
      %1703 = vmatpush2.msra.mxu0 0.0
      %1704 = vmatprep.subr.mxu0 0.0
      %1705 = vmatpush2.msra.mxu0 0.0
      %1706 = vmatprep.subr.mxu0 0.0
      %1707 = vmatpush2.msra.mxu0 0.0
      %1708 = vmatprep.subr.mxu0 0.0
      %1709 = vmatpush2.msra.mxu0 0.0
      %1710 = vmatprep.subr.mxu0 0.0
      %1711 = vmatpush2.msra.mxu0 0.0
      %1712 = vmatprep.subr.mxu0 0.0
      %1713 = vmatpush2.msra.mxu0 0.0
      %1714 = vmatprep.subr.mxu0 0.0
      %1715 = vmatpush2.msra.mxu0 0.0
      %1716 = vmatprep.subr.mxu0 0.0
      %1717 = vmatpush2.msra.mxu0 0.0
      %1718 = vmatprep.subr.mxu0 0.0
      %1719 = vmatpush2.msra.mxu0 0.0
      %1720 = vmatprep.subr.mxu0 0.0
      %1721 = vmatpush2.msra.mxu0 0.0
      %1722 = vmatprep.subr.mxu0 0.0
      %1723 = vmatpush2.msra.mxu0 0.0
      %1724 = vmatprep.subr.mxu0 0.0
      %1725 = vmatpush2.msra.mxu0 0.0
      %1726 = vmatprep.subr.mxu0 0.0
      %1727 = vmatpush2.msra.mxu0 0.0
      %1728 = vmatprep.mubr.f32.mxu0 0.0
      %1729 = vmatmul.mubr.f32.gmra.mxu0 %v1565
      %v1730 = vpop.f32.mrf.mxu0
      %v1731 = vadd.f32 0.0, %v1730
      %v1732 = vpop.f32.mrf.mxu0
      %1733 = vmatprep.mubr.f32.mxu0 0.0
      %1734 = vmatmul.mubr.f32.gmra.mxu0 %v1568
      %v1735 = vpop.f32.mrf.mxu0
      %v1736 = vadd.f32 0.0, %v1735
      %v1737 = vpop.f32.mrf.mxu0
      %1738 = vmatprep.mubr.f32.mxu0 0.0
      %1739 = vmatmul.mubr.f32.gmra.mxu0 %v1571
      %v1740 = vpop.f32.mrf.mxu0
      %v1741 = vadd.f32 0.0, %v1740
      %v1742 = vpop.f32.mrf.mxu0
      %1743 = vmatprep.mubr.f32.mxu0 0.0
      %1744 = vmatmul.mubr.f32.gmra.mxu0 %v1574
      %v1745 = vpop.f32.mrf.mxu0
      %v1746 = vadd.f32 0.0, %v1745
      %v1747 = vpop.f32.mrf.mxu0
      %1748 = vmatprep.mubr.f32.mxu0 0.0
      %1749 = vmatmul.mubr.f32.gmra.mxu0 %v1577
      %v1750 = vpop.f32.mrf.mxu0
      %v1751 = vadd.f32 0.0, %v1750
      %v1752 = vpop.f32.mrf.mxu0
      %1753 = vmatprep.mubr.f32.mxu0 0.0
      %1754 = vmatmul.mubr.f32.gmra.mxu0 %v1580
      %v1755 = vpop.f32.mrf.mxu0
      %v1756 = vadd.f32 0.0, %v1755
      %v1757 = vpop.f32.mrf.mxu0
      %1758 = vmatprep.mubr.f32.mxu0 0.0
      %1759 = vmatmul.mubr.f32.gmra.mxu0 %v1583
      %v1760 = vpop.f32.mrf.mxu0
      %v1761 = vadd.f32 0.0, %v1760
      %v1762 = vpop.f32.mrf.mxu0
      %1763 = vmatprep.mubr.f32.mxu0 0.0
      %1764 = vmatmul.mubr.f32.gmra.mxu0 %v1586
      %v1765 = vpop.f32.mrf.mxu0
      %v1766 = vadd.f32 0.0, %v1765
      %v1767 = vpop.f32.mrf.mxu0
      %1768 = vmatprep.mubr.f32.mxu0 0.0
      %1769 = vmatmul.mubr.f32.gmra.mxu0 %v1589
      %v1770 = vpop.f32.mrf.mxu0
      %v1771 = vadd.f32 0.0, %v1770
      %v1772 = vpop.f32.mrf.mxu0
      %1773 = vmatprep.mubr.f32.mxu0 0.0
      %1774 = vmatmul.mubr.f32.gmra.mxu0 %v1592
      %v1775 = vpop.f32.mrf.mxu0
      %v1776 = vadd.f32 0.0, %v1775
      %v1777 = vpop.f32.mrf.mxu0
      %1778 = vmatprep.mubr.f32.mxu0 0.0
      %1779 = vmatmul.mubr.f32.gmra.mxu0 %v1595
      %v1780 = vpop.f32.mrf.mxu0
      %v1781 = vadd.f32 0.0, %v1780
      %v1782 = vpop.f32.mrf.mxu0
      %1783 = vmatprep.mubr.f32.mxu0 0.0
      %1784 = vmatmul.mubr.f32.gmra.mxu0 %v1598
      %v1785 = vpop.f32.mrf.mxu0
      %v1786 = vadd.f32 0.0, %v1785
      %v1787 = vpop.f32.mrf.mxu0
      %1788 = vmatprep.mubr.f32.mxu0 0.0
      %1789 = vmatmul.mubr.f32.gmra.mxu0 %v1601
      %v1790 = vpop.f32.mrf.mxu0
      %v1791 = vadd.f32 0.0, %v1790
      %v1792 = vpop.f32.mrf.mxu0
      %1793 = vmatprep.mubr.f32.mxu0 0.0
      %1794 = vmatmul.mubr.f32.gmra.mxu0 %v1604
      %v1795 = vpop.f32.mrf.mxu0
      %v1796 = vadd.f32 0.0, %v1795
      %v1797 = vpop.f32.mrf.mxu0
      %1798 = vmatprep.mubr.f32.mxu0 0.0
      %1799 = vmatmul.mubr.f32.gmra.mxu0 %v1607
      %v1800 = vpop.f32.mrf.mxu0
      %v1801 = vadd.f32 0.0, %v1800
      %v1802 = vpop.f32.mrf.mxu0
      %1803 = vmatprep.mubr.f32.mxu0 0.0
      %1804 = vmatmul.mubr.f32.gmra.mxu0 %v1610
      %v1805 = vpop.f32.mrf.mxu0
      %v1806 = vadd.f32 0.0, %v1805
      %v1807 = vpop.f32.mrf.mxu0
      %1808 = vmatprep.mubr.f32.mxu0 0.0
      %1809 = vmatmul.mubr.f32.gmra.mxu0 %v1613
      %v1810 = vpop.f32.mrf.mxu0
      %v1811 = vadd.f32 0.0, %v1810
      %v1812 = vpop.f32.mrf.mxu0
      %1813 = vmatprep.mubr.f32.mxu0 0.0
      %1814 = vmatmul.mubr.f32.gmra.mxu0 %v1616
      %v1815 = vpop.f32.mrf.mxu0
      %v1816 = vadd.f32 0.0, %v1815
      %v1817 = vpop.f32.mrf.mxu0
      %1818 = vmatprep.mubr.f32.mxu0 0.0
      %1819 = vmatmul.mubr.f32.gmra.mxu0 %v1619
      %v1820 = vpop.f32.mrf.mxu0
      %v1821 = vadd.f32 0.0, %v1820
      %v1822 = vpop.f32.mrf.mxu0
      %1823 = vmatprep.mubr.f32.mxu0 0.0
      %1824 = vmatmul.mubr.f32.gmra.mxu0 %v1622
      %v1825 = vpop.f32.mrf.mxu0
      %v1826 = vadd.f32 0.0, %v1825
      %v1827 = vpop.f32.mrf.mxu0
      %1828 = vmatprep.mubr.f32.mxu0 0.0
      %1829 = vmatmul.mubr.f32.gmra.mxu0 %v1625
      %v1830 = vpop.f32.mrf.mxu0
      %v1831 = vadd.f32 0.0, %v1830
      %v1832 = vpop.f32.mrf.mxu0
      %1833 = vmatprep.mubr.f32.mxu0 0.0
      %1834 = vmatmul.mubr.f32.gmra.mxu0 %v1628
      %v1835 = vpop.f32.mrf.mxu0
      %v1836 = vadd.f32 0.0, %v1835
      %v1837 = vpop.f32.mrf.mxu0
      %1838 = vmatprep.mubr.f32.mxu0 0.0
      %1839 = vmatmul.mubr.f32.gmra.mxu0 %v1631
      %v1840 = vpop.f32.mrf.mxu0
      %v1841 = vadd.f32 0.0, %v1840
      %v1842 = vpop.f32.mrf.mxu0
      %1843 = vmatprep.mubr.f32.mxu0 0.0
      %1844 = vmatmul.mubr.f32.gmra.mxu0 %v1634
      %v1845 = vpop.f32.mrf.mxu0
      %v1846 = vadd.f32 0.0, %v1845
      %v1847 = vpop.f32.mrf.mxu0
      %1848 = vmatprep.mubr.f32.mxu0 0.0
      %1849 = vmatmul.mubr.f32.gmra.mxu0 %v1637
      %v1850 = vpop.f32.mrf.mxu0
      %v1851 = vadd.f32 0.0, %v1850
      %v1852 = vpop.f32.mrf.mxu0
      %1853 = vmatprep.mubr.f32.mxu0 0.0
      %1854 = vmatmul.mubr.f32.gmra.mxu0 %v1640
      %v1855 = vpop.f32.mrf.mxu0
      %v1856 = vadd.f32 0.0, %v1855
      %v1857 = vpop.f32.mrf.mxu0
      %1858 = vmatprep.mubr.f32.mxu0 0.0
      %1859 = vmatmul.mubr.f32.gmra.mxu0 %v1643
      %v1860 = vpop.f32.mrf.mxu0
      %v1861 = vadd.f32 0.0, %v1860
      %v1862 = vpop.f32.mrf.mxu0
      %1863 = vmatprep.mubr.f32.mxu0 0.0
      %1864 = vmatmul.mubr.f32.gmra.mxu0 %v1646
      %v1865 = vpop.f32.mrf.mxu0
      %v1866 = vadd.f32 0.0, %v1865
      %v1867 = vpop.f32.mrf.mxu0
      %1868 = vmatprep.mubr.f32.mxu0 0.0
      %1869 = vmatmul.mubr.f32.gmra.mxu0 %v1649
      %v1870 = vpop.f32.mrf.mxu0
      %v1871 = vadd.f32 0.0, %v1870
      %v1872 = vpop.f32.mrf.mxu0
      %1873 = vmatprep.mubr.f32.mxu0 0.0
      %1874 = vmatmul.mubr.f32.gmra.mxu0 %v1652
      %v1875 = vpop.f32.mrf.mxu0
      %v1876 = vadd.f32 0.0, %v1875
      %v1877 = vpop.f32.mrf.mxu0
      %1878 = vmatprep.mubr.f32.mxu0 0.0
      %1879 = vmatmul.mubr.f32.gmra.mxu0 %v1655
      %v1880 = vpop.f32.mrf.mxu0
      %v1881 = vadd.f32 0.0, %v1880
      %v1882 = vpop.f32.mrf.mxu0
      %1883 = vmatprep.mubr.f32.mxu0 0.0
      %1884 = vmatmul.mubr.f32.gmra.mxu0 %v1658
      %v1885 = vpop.f32.mrf.mxu0
      %v1886 = vadd.f32 0.0, %v1885
      %v1887 = vpop.f32.mrf.mxu0
      %1888 = vdwg.mxu0
      %vm1889 = vcmask 64512
      %v1890 = vsel %vm1889, %v1731, 0.0
      %v1891 = vsel %vm1889, %v1736, 0.0
      %v1892 = vadd.f32 %v1890, %v1891
      %v1893 = vsel %vm1889, %v1741, 0.0
      %v1894 = vadd.f32 %v1892, %v1893
      %v1895 = vsel %vm1889, %v1746, 0.0
      %v1896 = vadd.f32 %v1894, %v1895
      %v1897 = vsel %vm1889, %v1751, 0.0
      %v1898 = vadd.f32 %v1896, %v1897
      %v1899 = vsel %vm1889, %v1756, 0.0
      %v1900 = vadd.f32 %v1898, %v1899
      %v1901 = vsel %vm1889, %v1761, 0.0
      %v1902 = vadd.f32 %v1900, %v1901
      %v1903 = vsel %vm1889, %v1766, 0.0
      %v1904 = vadd.f32 %v1902, %v1903
      %v1905 = vsel %vm1889, %v1771, 0.0
      %v1906 = vadd.f32 %v1904, %v1905
      %v1907 = vsel %vm1889, %v1776, 0.0
      %v1908 = vadd.f32 %v1906, %v1907
      %v1909 = vsel %vm1889, %v1781, 0.0
      %v1910 = vadd.f32 %v1908, %v1909
      %v1911 = vsel %vm1889, %v1786, 0.0
      %v1912 = vadd.f32 %v1910, %v1911
      %v1913 = vsel %vm1889, %v1791, 0.0
      %v1914 = vadd.f32 %v1912, %v1913
      %v1915 = vsel %vm1889, %v1796, 0.0
      %v1916 = vadd.f32 %v1914, %v1915
      %v1917 = vsel %vm1889, %v1801, 0.0
      %v1918 = vadd.f32 %v1916, %v1917
      %v1919 = vsel %vm1889, %v1806, 0.0
      %v1920 = vadd.f32 %v1918, %v1919
      %v1921 = vsel %vm1889, %v1811, 0.0
      %v1922 = vadd.f32 %v1920, %v1921
      %v1923 = vsel %vm1889, %v1816, 0.0
      %v1924 = vadd.f32 %v1922, %v1923
      %v1925 = vsel %vm1889, %v1821, 0.0
      %v1926 = vadd.f32 %v1924, %v1925
      %v1927 = vsel %vm1889, %v1826, 0.0
      %v1928 = vadd.f32 %v1926, %v1927
      %v1929 = vsel %vm1889, %v1831, 0.0
      %v1930 = vadd.f32 %v1928, %v1929
      %v1931 = vsel %vm1889, %v1836, 0.0
      %v1932 = vadd.f32 %v1930, %v1931
      %v1933 = vsel %vm1889, %v1841, 0.0
      %v1934 = vadd.f32 %v1932, %v1933
      %v1935 = vsel %vm1889, %v1846, 0.0
      %v1936 = vadd.f32 %v1934, %v1935
      %v1937 = vsel %vm1889, %v1851, 0.0
      %v1938 = vadd.f32 %v1936, %v1937
      %v1939 = vsel %vm1889, %v1856, 0.0
      %v1940 = vadd.f32 %v1938, %v1939
      %v1941 = vsel %vm1889, %v1861, 0.0
      %v1942 = vadd.f32 %v1940, %v1941
      %v1943 = vsel %vm1889, %v1866, 0.0
      %v1944 = vadd.f32 %v1942, %v1943
      %v1945 = vsel %vm1889, %v1871, 0.0
      %v1946 = vadd.f32 %v1944, %v1945
      %v1947 = vsel %vm1889, %v1876, 0.0
      %v1948 = vadd.f32 %v1946, %v1947
      %v1949 = vsel %vm1889, %v1881, 0.0
      %v1950 = vadd.f32 %v1948, %v1949
      %v1951 = vsel %vm1889, %v1886, 0.0
      %v1952 = vadd.f32 %v1950, %v1951
      %v1953 = vrot.slane %v1952, 4
      %v1954 = vadd.f32 %v1952, %v1953
      %v1955 = vrot.slane %v1954, 2
      %v1956 = vadd.f32 %v1954, %v1955
      %v1957 = vrot.slane %v1956, 1
      %v1958 = vadd.f32 %v1956, %v1957
      %v1959 = vmul.f32 %v1958, 0.00390625
      %v1960 = vmul.f32 %v1731, %v1731
      %v1961 = vmul.f32 %v1736, %v1736
      %v1962 = vmul.f32 %v1741, %v1741
      %v1963 = vmul.f32 %v1746, %v1746
      %v1964 = vmul.f32 %v1751, %v1751
      %v1965 = vmul.f32 %v1756, %v1756
      %v1966 = vmul.f32 %v1761, %v1761
      %v1967 = vmul.f32 %v1766, %v1766
      %v1968 = vmul.f32 %v1771, %v1771
      %v1969 = vmul.f32 %v1776, %v1776
      %v1970 = vmul.f32 %v1781, %v1781
      %v1971 = vmul.f32 %v1786, %v1786
      %v1972 = vmul.f32 %v1791, %v1791
      %v1973 = vmul.f32 %v1796, %v1796
      %v1974 = vmul.f32 %v1801, %v1801
      %v1975 = vmul.f32 %v1806, %v1806
      %v1976 = vmul.f32 %v1811, %v1811
      %v1977 = vmul.f32 %v1816, %v1816
      %v1978 = vmul.f32 %v1821, %v1821
      %v1979 = vmul.f32 %v1826, %v1826
      %v1980 = vmul.f32 %v1831, %v1831
      %v1981 = vmul.f32 %v1836, %v1836
      %v1982 = vmul.f32 %v1841, %v1841
      %v1983 = vmul.f32 %v1846, %v1846
      %v1984 = vmul.f32 %v1851, %v1851
      %v1985 = vmul.f32 %v1856, %v1856
      %v1986 = vmul.f32 %v1861, %v1861
      %v1987 = vmul.f32 %v1866, %v1866
      %v1988 = vmul.f32 %v1871, %v1871
      %v1989 = vmul.f32 %v1876, %v1876
      %v1990 = vmul.f32 %v1881, %v1881
      %v1991 = vmul.f32 %v1886, %v1886
      %v1992 = vsel %vm1889, %v1960, 0.0
      %v1993 = vsel %vm1889, %v1961, 0.0
      %v1994 = vadd.f32 %v1992, %v1993
      %v1995 = vsel %vm1889, %v1962, 0.0
      %v1996 = vadd.f32 %v1994, %v1995
      %v1997 = vsel %vm1889, %v1963, 0.0
      %v1998 = vadd.f32 %v1996, %v1997
      %v1999 = vsel %vm1889, %v1964, 0.0
      %v2000 = vadd.f32 %v1998, %v1999
      %v2001 = vsel %vm1889, %v1965, 0.0
      %v2002 = vadd.f32 %v2000, %v2001
      %v2003 = vsel %vm1889, %v1966, 0.0
      %v2004 = vadd.f32 %v2002, %v2003
      %v2005 = vsel %vm1889, %v1967, 0.0
      %v2006 = vadd.f32 %v2004, %v2005
      %v2007 = vsel %vm1889, %v1968, 0.0
      %v2008 = vadd.f32 %v2006, %v2007
      %v2009 = vsel %vm1889, %v1969, 0.0
      %v2010 = vadd.f32 %v2008, %v2009
      %v2011 = vsel %vm1889, %v1970, 0.0
      %v2012 = vadd.f32 %v2010, %v2011
      %v2013 = vsel %vm1889, %v1971, 0.0
      %v2014 = vadd.f32 %v2012, %v2013
      %v2015 = vsel %vm1889, %v1972, 0.0
      %v2016 = vadd.f32 %v2014, %v2015
      %v2017 = vsel %vm1889, %v1973, 0.0
      %v2018 = vadd.f32 %v2016, %v2017
      %v2019 = vsel %vm1889, %v1974, 0.0
      %v2020 = vadd.f32 %v2018, %v2019
      %v2021 = vsel %vm1889, %v1975, 0.0
      %v2022 = vadd.f32 %v2020, %v2021
      %v2023 = vsel %vm1889, %v1976, 0.0
      %v2024 = vadd.f32 %v2022, %v2023
      %v2025 = vsel %vm1889, %v1977, 0.0
      %v2026 = vadd.f32 %v2024, %v2025
      %v2027 = vsel %vm1889, %v1978, 0.0
      %v2028 = vadd.f32 %v2026, %v2027
      %v2029 = vsel %vm1889, %v1979, 0.0
      %v2030 = vadd.f32 %v2028, %v2029
      %v2031 = vsel %vm1889, %v1980, 0.0
      %v2032 = vadd.f32 %v2030, %v2031
      %v2033 = vsel %vm1889, %v1981, 0.0
      %v2034 = vadd.f32 %v2032, %v2033
      %v2035 = vsel %vm1889, %v1982, 0.0
      %v2036 = vadd.f32 %v2034, %v2035
      %v2037 = vsel %vm1889, %v1983, 0.0
      %v2038 = vadd.f32 %v2036, %v2037
      %v2039 = vsel %vm1889, %v1984, 0.0
      %v2040 = vadd.f32 %v2038, %v2039
      %v2041 = vsel %vm1889, %v1985, 0.0
      %v2042 = vadd.f32 %v2040, %v2041
      %v2043 = vsel %vm1889, %v1986, 0.0
      %v2044 = vadd.f32 %v2042, %v2043
      %v2045 = vsel %vm1889, %v1987, 0.0
      %v2046 = vadd.f32 %v2044, %v2045
      %v2047 = vsel %vm1889, %v1988, 0.0
      %v2048 = vadd.f32 %v2046, %v2047
      %v2049 = vsel %vm1889, %v1989, 0.0
      %v2050 = vadd.f32 %v2048, %v2049
      %v2051 = vsel %vm1889, %v1990, 0.0
      %v2052 = vadd.f32 %v2050, %v2051
      %v2053 = vsel %vm1889, %v1991, 0.0
      %v2054 = vadd.f32 %v2052, %v2053
      %v2055 = vrot.slane %v2054, 4
      %v2056 = vadd.f32 %v2054, %v2055
      %v2057 = vrot.slane %v2056, 2
      %v2058 = vadd.f32 %v2056, %v2057
      %v2059 = vrot.slane %v2058, 1
      %v2060 = vadd.f32 %v2058, %v2059
      %v2061 = vmul.f32 %v2060, 0.00390625
      %v2062 = vmul.f32 %v1959, %v1959
      %v2063 = vsub.f32 %v2061, %v2062
      %v2064 = vmax.f32 %v2063, 0.0
      %v2065 = vsub.f32 %v1731, %v1959
      %v2066 = vsub.f32 %v1736, %v1959
      %v2067 = vsub.f32 %v1741, %v1959
      %v2068 = vsub.f32 %v1746, %v1959
      %v2069 = vsub.f32 %v1751, %v1959
      %v2070 = vsub.f32 %v1756, %v1959
      %v2071 = vsub.f32 %v1761, %v1959
      %v2072 = vsub.f32 %v1766, %v1959
      %v2073 = vsub.f32 %v1771, %v1959
      %v2074 = vsub.f32 %v1776, %v1959
      %v2075 = vsub.f32 %v1781, %v1959
      %v2076 = vsub.f32 %v1786, %v1959
      %v2077 = vsub.f32 %v1791, %v1959
      %v2078 = vsub.f32 %v1796, %v1959
      %v2079 = vsub.f32 %v1801, %v1959
      %v2080 = vsub.f32 %v1806, %v1959
      %v2081 = vsub.f32 %v1811, %v1959
      %v2082 = vsub.f32 %v1816, %v1959
      %v2083 = vsub.f32 %v1821, %v1959
      %v2084 = vsub.f32 %v1826, %v1959
      %v2085 = vsub.f32 %v1831, %v1959
      %v2086 = vsub.f32 %v1836, %v1959
      %v2087 = vsub.f32 %v1841, %v1959
      %v2088 = vsub.f32 %v1846, %v1959
      %v2089 = vsub.f32 %v1851, %v1959
      %v2090 = vsub.f32 %v1856, %v1959
      %v2091 = vsub.f32 %v1861, %v1959
      %v2092 = vsub.f32 %v1866, %v1959
      %v2093 = vsub.f32 %v1871, %v1959
      %v2094 = vsub.f32 %v1876, %v1959
      %v2095 = vsub.f32 %v1881, %v1959
      %v2096 = vsub.f32 %v1886, %v1959
      %v2097 = vadd.f32 %v2064, 1e-05
      %v2098 = vrsqrt.pop %v2097
      %v2099 = vmul.f32 %v2065, %v2098
      %v2100 = vmul.f32 %v2066, %v2098
      %v2101 = vmul.f32 %v2067, %v2098
      %v2102 = vmul.f32 %v2068, %v2098
      %v2103 = vmul.f32 %v2069, %v2098
      %v2104 = vmul.f32 %v2070, %v2098
      %v2105 = vmul.f32 %v2071, %v2098
      %v2106 = vmul.f32 %v2072, %v2098
      %v2107 = vmul.f32 %v2073, %v2098
      %v2108 = vmul.f32 %v2074, %v2098
      %v2109 = vmul.f32 %v2075, %v2098
      %v2110 = vmul.f32 %v2076, %v2098
      %v2111 = vmul.f32 %v2077, %v2098
      %v2112 = vmul.f32 %v2078, %v2098
      %v2113 = vmul.f32 %v2079, %v2098
      %v2114 = vmul.f32 %v2080, %v2098
      %v2115 = vmul.f32 %v2081, %v2098
      %v2116 = vmul.f32 %v2082, %v2098
      %v2117 = vmul.f32 %v2083, %v2098
      %v2118 = vmul.f32 %v2084, %v2098
      %v2119 = vmul.f32 %v2085, %v2098
      %v2120 = vmul.f32 %v2086, %v2098
      %v2121 = vmul.f32 %v2087, %v2098
      %v2122 = vmul.f32 %v2088, %v2098
      %v2123 = vmul.f32 %v2089, %v2098
      %v2124 = vmul.f32 %v2090, %v2098
      %v2125 = vmul.f32 %v2091, %v2098
      %v2126 = vmul.f32 %v2092, %v2098
      %v2127 = vmul.f32 %v2093, %v2098
      %v2128 = vmul.f32 %v2094, %v2098
      %v2129 = vmul.f32 %v2095, %v2098
      %v2130 = vmul.f32 %v2096, %v2098
      %vm2131 = vcmp.ge.f32.partialorder %v2099, 0.0
      %vm2132 = vcmp.ge.f32.partialorder %v2100, 0.0
      %vm2133 = vcmp.ge.f32.partialorder %v2101, 0.0
      %vm2134 = vcmp.ge.f32.partialorder %v2102, 0.0
      %vm2135 = vcmp.ge.f32.partialorder %v2103, 0.0
      %vm2136 = vcmp.ge.f32.partialorder %v2104, 0.0
      %vm2137 = vcmp.ge.f32.partialorder %v2105, 0.0
      %vm2138 = vcmp.ge.f32.partialorder %v2106, 0.0
      %vm2139 = vcmp.ge.f32.partialorder %v2107, 0.0
      %vm2140 = vcmp.ge.f32.partialorder %v2108, 0.0
      %vm2141 = vcmp.ge.f32.partialorder %v2109, 0.0
      %vm2142 = vcmp.ge.f32.partialorder %v2110, 0.0
      %vm2143 = vcmp.ge.f32.partialorder %v2111, 0.0
      %vm2144 = vcmp.ge.f32.partialorder %v2112, 0.0
      %vm2145 = vcmp.ge.f32.partialorder %v2113, 0.0
      %vm2146 = vcmp.ge.f32.partialorder %v2114, 0.0
      %vm2147 = vcmp.ge.f32.partialorder %v2115, 0.0
      %vm2148 = vcmp.ge.f32.partialorder %v2116, 0.0
      %vm2149 = vcmp.ge.f32.partialorder %v2117, 0.0
      %vm2150 = vcmp.ge.f32.partialorder %v2118, 0.0
      %vm2151 = vcmp.ge.f32.partialorder %v2119, 0.0
      %vm2152 = vcmp.ge.f32.partialorder %v2120, 0.0
      %vm2153 = vcmp.ge.f32.partialorder %v2121, 0.0
      %vm2154 = vcmp.ge.f32.partialorder %v2122, 0.0
      %vm2155 = vcmp.ge.f32.partialorder %v2123, 0.0
      %vm2156 = vcmp.ge.f32.partialorder %v2124, 0.0
      %vm2157 = vcmp.ge.f32.partialorder %v2125, 0.0
      %vm2158 = vcmp.ge.f32.partialorder %v2126, 0.0
      %vm2159 = vcmp.ge.f32.partialorder %v2127, 0.0
      %vm2160 = vcmp.ge.f32.partialorder %v2128, 0.0
      %vm2161 = vcmp.ge.f32.partialorder %v2129, 0.0
      %vm2162 = vcmp.ge.f32.partialorder %v2130, 0.0
      %v2163 = vmul.f32 %v2099, 0.2
      %v2164 = vmul.f32 %v2100, 0.2
      %v2165 = vmul.f32 %v2101, 0.2
      %v2166 = vmul.f32 %v2102, 0.2
      %v2167 = vmul.f32 %v2103, 0.2
      %v2168 = vmul.f32 %v2104, 0.2
      %v2169 = vmul.f32 %v2105, 0.2
      %v2170 = vmul.f32 %v2106, 0.2
      %v2171 = vmul.f32 %v2107, 0.2
      %v2172 = vmul.f32 %v2108, 0.2
      %v2173 = vmul.f32 %v2109, 0.2
      %v2174 = vmul.f32 %v2110, 0.2
      %v2175 = vmul.f32 %v2111, 0.2
      %v2176 = vmul.f32 %v2112, 0.2
      %v2177 = vmul.f32 %v2113, 0.2
      %v2178 = vmul.f32 %v2114, 0.2
      %v2179 = vmul.f32 %v2115, 0.2
      %v2180 = vmul.f32 %v2116, 0.2
      %v2181 = vmul.f32 %v2117, 0.2
      %v2182 = vmul.f32 %v2118, 0.2
      %v2183 = vmul.f32 %v2119, 0.2
      %v2184 = vmul.f32 %v2120, 0.2
      %v2185 = vmul.f32 %v2121, 0.2
      %v2186 = vmul.f32 %v2122, 0.2
      %v2187 = vmul.f32 %v2123, 0.2
      %v2188 = vmul.f32 %v2124, 0.2
      %v2189 = vmul.f32 %v2125, 0.2
      %v2190 = vmul.f32 %v2126, 0.2
      %v2191 = vmul.f32 %v2127, 0.2
      %v2192 = vmul.f32 %v2128, 0.2
      %v2193 = vmul.f32 %v2129, 0.2
      %v2194 = vmul.f32 %v2130, 0.2
      %v2195 = vsel %vm2131, %v2099, %v2163
      %v2196 = vsel %vm2132, %v2100, %v2164
      %v2197 = vsel %vm2133, %v2101, %v2165
      %v2198 = vsel %vm2134, %v2102, %v2166
      %v2199 = vsel %vm2135, %v2103, %v2167
      %v2200 = vsel %vm2136, %v2104, %v2168
      %v2201 = vsel %vm2137, %v2105, %v2169
      %v2202 = vsel %vm2138, %v2106, %v2170
      %v2203 = vsel %vm2139, %v2107, %v2171
      %v2204 = vsel %vm2140, %v2108, %v2172
      %v2205 = vsel %vm2141, %v2109, %v2173
      %v2206 = vsel %vm2142, %v2110, %v2174
      %v2207 = vsel %vm2143, %v2111, %v2175
      %v2208 = vsel %vm2144, %v2112, %v2176
      %v2209 = vsel %vm2145, %v2113, %v2177
      %v2210 = vsel %vm2146, %v2114, %v2178
      %v2211 = vsel %vm2147, %v2115, %v2179
      %v2212 = vsel %vm2148, %v2116, %v2180
      %v2213 = vsel %vm2149, %v2117, %v2181
      %v2214 = vsel %vm2150, %v2118, %v2182
      %v2215 = vsel %vm2151, %v2119, %v2183
      %v2216 = vsel %vm2152, %v2120, %v2184
      %v2217 = vsel %vm2153, %v2121, %v2185
      %v2218 = vsel %vm2154, %v2122, %v2186
      %v2219 = vsel %vm2155, %v2123, %v2187
      %v2220 = vsel %vm2156, %v2124, %v2188
      %v2221 = vsel %vm2157, %v2125, %v2189
      %v2222 = vsel %vm2158, %v2126, %v2190
      %v2223 = vsel %vm2159, %v2127, %v2191
      %v2224 = vsel %vm2160, %v2128, %v2192
      %v2225 = vsel %vm2161, %v2129, %v2193
      %v2226 = vsel %vm2162, %v2130, %v2194
      %s2227 = scalar_lea.vmem [#allocation3], 24
      %2228 = vst.msk [vmem:[%s2227 + $0x1] sm:$0xff] %vm1889, %v2195
      %2229 = vst.msk [vmem:[%s2227 + $0x9] sm:$0xff] %vm1889, %v2196
      %2230 = vst.msk [vmem:[%s2227 + $0x19] sm:$0xff] %vm1889, %v2197
      %2231 = vst.msk [vmem:[%s2227 + $0x21] sm:$0xff] %vm1889, %v2198
      %2232 = vst.msk [vmem:[%s2227 + $0x31] sm:$0xff] %vm1889, %v2199
      %2233 = vst.msk [vmem:[%s2227 + $0x39] sm:$0xff] %vm1889, %v2200
      %2234 = vst.msk [vmem:[%s2227 + $0x49] sm:$0xff] %vm1889, %v2201
      %2235 = vst.msk [vmem:[%s2227 + $0x51] sm:$0xff] %vm1889, %v2202
      %2236 = vst.msk [vmem:[%s2227 + $0x61] sm:$0xff] %vm1889, %v2203
      %2237 = vst.msk [vmem:[%s2227 + $0x69] sm:$0xff] %vm1889, %v2204
      %2238 = vst.msk [vmem:[%s2227 + $0x79] sm:$0xff] %vm1889, %v2205
      %2239 = vst.msk [vmem:[%s2227 + $0x81] sm:$0xff] %vm1889, %v2206
      %2240 = vst.msk [vmem:[%s2227 + $0x91] sm:$0xff] %vm1889, %v2207
      %2241 = vst.msk [vmem:[%s2227 + $0x99] sm:$0xff] %vm1889, %v2208
      %2242 = vst.msk [vmem:[%s2227 + $0xa9] sm:$0xff] %vm1889, %v2209
      %2243 = vst.msk [vmem:[%s2227 + $0xb1] sm:$0xff] %vm1889, %v2210
      %2244 = vst.msk [vmem:[%s2227 + $0xc1] sm:$0xff] %vm1889, %v2211
      %2245 = vst.msk [vmem:[%s2227 + $0xc9] sm:$0xff] %vm1889, %v2212
      %2246 = vst.msk [vmem:[%s2227 + $0xd9] sm:$0xff] %vm1889, %v2213
      %2247 = vst.msk [vmem:[%s2227 + $0xe1] sm:$0xff] %vm1889, %v2214
      %2248 = vst.msk [vmem:[%s2227 + $0xf1] sm:$0xff] %vm1889, %v2215
      %2249 = vst.msk [vmem:[%s2227 + $0xf9] sm:$0xff] %vm1889, %v2216
      %2250 = vst.msk [vmem:[%s2227 + $0x109] sm:$0xff] %vm1889, %v2217
      %2251 = vst.msk [vmem:[%s2227 + $0x111] sm:$0xff] %vm1889, %v2218
      %2252 = vst.msk [vmem:[%s2227 + $0x121] sm:$0xff] %vm1889, %v2219
      %2253 = vst.msk [vmem:[%s2227 + $0x129] sm:$0xff] %vm1889, %v2220
      %2254 = vst.msk [vmem:[%s2227 + $0x139] sm:$0xff] %vm1889, %v2221
      %2255 = vst.msk [vmem:[%s2227 + $0x141] sm:$0xff] %vm1889, %v2222
      %2256 = vst.msk [vmem:[%s2227 + $0x151] sm:$0xff] %vm1889, %v2223
      %2257 = vst.msk [vmem:[%s2227 + $0x159] sm:$0xff] %vm1889, %v2224
      %2258 = vst.msk [vmem:[%s2227 + $0x169] sm:$0xff] %vm1889, %v2225
      %2259 = vst.msk [vmem:[%s2227 + $0x171] sm:$0xff] %vm1889, %v2226
      %2260 = vst.msk [vmem:[#allocation3] sm:$0xff] %vm1889, 0.0
      %2261 = vst.msk [vmem:[#allocation3 + $0x8] sm:$0xff] %vm1889, 0.0
      %vm2262 = vcmask 58368
      %2263 = vst.msk [vmem:[#allocation3 + $0x10] sm:$0x3] %vm2262, 0.0
      %s2264 = scalar_lea.vmem [#allocation3], 408
      %2265 = vst.msk [vmem:[%s2264] sm:$0xff] %vm1889, 0.0
      %2266 = vst.msk [vmem:[%s2264 + $0x8] sm:$0xff] %vm1889, 0.0
      %2267 = vst.msk [vmem:[%s2264 + $0x10] sm:$0x3] %vm2262, 0.0
      %vm2268 = vcmask 57344
      %2269 = vst.msk [vmem:[#allocation3] sm:$0x1] %vm2268, 0.0
      %2270 = vst.msk [vmem:[#allocation3 + $0x18] sm:$0x1] %vm2268, 0.0
      %2271 = vst.msk [vmem:[#allocation3 + $0x30] sm:$0x1] %vm2268, 0.0
      %2272 = vst.msk [vmem:[#allocation3 + $0x48] sm:$0x1] %vm2268, 0.0
      %2273 = vst.msk [vmem:[#allocation3 + $0x60] sm:$0x1] %vm2268, 0.0
      %2274 = vst.msk [vmem:[#allocation3 + $0x78] sm:$0x1] %vm2268, 0.0
      %2275 = vst.msk [vmem:[#allocation3 + $0x90] sm:$0x1] %vm2268, 0.0
      %2276 = vst.msk [vmem:[#allocation3 + $0xa8] sm:$0x1] %vm2268, 0.0
      %2277 = vst.msk [vmem:[#allocation3 + $0xc0] sm:$0x1] %vm2268, 0.0
      %2278 = vst.msk [vmem:[#allocation3 + $0xd8] sm:$0x1] %vm2268, 0.0
      %2279 = vst.msk [vmem:[#allocation3 + $0xf0] sm:$0x1] %vm2268, 0.0
      %2280 = vst.msk [vmem:[#allocation3 + $0x108] sm:$0x1] %vm2268, 0.0
      %2281 = vst.msk [vmem:[#allocation3 + $0x120] sm:$0x1] %vm2268, 0.0
      %2282 = vst.msk [vmem:[#allocation3 + $0x138] sm:$0x1] %vm2268, 0.0
      %2283 = vst.msk [vmem:[#allocation3 + $0x150] sm:$0x1] %vm2268, 0.0
      %2284 = vst.msk [vmem:[#allocation3 + $0x168] sm:$0x1] %vm2268, 0.0
      %2285 = vst.msk [vmem:[#allocation3 + $0x180] sm:$0x1] %vm2268, 0.0
      %2286 = vst.msk [vmem:[#allocation3 + $0x198] sm:$0x1] %vm2268, 0.0
      %2287 = vst.msk [vmem:[#allocation3 + $0x11] sm:$0x1] %vm2268, 0.0
      %2288 = vst.msk [vmem:[#allocation3 + $0x29] sm:$0x1] %vm2268, 0.0
      %2289 = vst.msk [vmem:[#allocation3 + $0x41] sm:$0x1] %vm2268, 0.0
      %2290 = vst.msk [vmem:[#allocation3 + $0x59] sm:$0x1] %vm2268, 0.0
      %2291 = vst.msk [vmem:[#allocation3 + $0x71] sm:$0x1] %vm2268, 0.0
      %2292 = vst.msk [vmem:[#allocation3 + $0x89] sm:$0x1] %vm2268, 0.0
      %2293 = vst.msk [vmem:[#allocation3 + $0xa1] sm:$0x1] %vm2268, 0.0
      %2294 = vst.msk [vmem:[#allocation3 + $0xb9] sm:$0x1] %vm2268, 0.0
      %2295 = vst.msk [vmem:[#allocation3 + $0xd1] sm:$0x1] %vm2268, 0.0
      %2296 = vst.msk [vmem:[#allocation3 + $0xe9] sm:$0x1] %vm2268, 0.0
      %2297 = vst.msk [vmem:[#allocation3 + $0x101] sm:$0x1] %vm2268, 0.0
      %2298 = vst.msk [vmem:[#allocation3 + $0x119] sm:$0x1] %vm2268, 0.0
      %2299 = vst.msk [vmem:[#allocation3 + $0x131] sm:$0x1] %vm2268, 0.0
      %2300 = vst.msk [vmem:[#allocation3 + $0x149] sm:$0x1] %vm2268, 0.0
      %2301 = vst.msk [vmem:[#allocation3 + $0x161] sm:$0x1] %vm2268, 0.0
      %2302 = vst.msk [vmem:[#allocation3 + $0x179] sm:$0x1] %vm2268, 0.0
      %2303 = vst.msk [vmem:[#allocation3 + $0x191] sm:$0x1] %vm2268, 0.0
      %2304 = vst.msk [vmem:[#allocation3 + $0x1a9] sm:$0x1] %vm2268, 0.0
      %v2305 = vld [vmem:[#allocation3] sm:$0xff]
      %v2306 = vld [vmem:[#allocation3 + $0x8] sm:$0xff]
      %v2307 = vld [vmem:[#allocation3 + $0x10] sm:$0x3]
      %v2308 = vld [vmem:[#allocation3 + $0x18] sm:$0xff]
      %v2309 = vld [vmem:[#allocation3 + $0x20] sm:$0xff]
      %v2310 = vld [vmem:[#allocation3 + $0x28] sm:$0x3]
      %v2311 = vld [vmem:[#allocation3 + $0x30] sm:$0xff]
      %v2312 = vld [vmem:[#allocation3 + $0x38] sm:$0xff]
      %v2313 = vld [vmem:[#allocation3 + $0x40] sm:$0x3]
      %v2314 = vld [vmem:[#allocation3 + $0x48] sm:$0xff]
      %v2315 = vld [vmem:[#allocation3 + $0x50] sm:$0xff]
      %v2316 = vld [vmem:[#allocation3 + $0x58] sm:$0x3]
      %v2317 = vld [vmem:[#allocation3 + $0x60] sm:$0xff]
      %v2318 = vld [vmem:[#allocation3 + $0x68] sm:$0xff]
      %v2319 = vld [vmem:[#allocation3 + $0x70] sm:$0x3]
      %v2320 = vld [vmem:[#allocation3 + $0x78] sm:$0xff]
      %v2321 = vld [vmem:[#allocation3 + $0x80] sm:$0xff]
      %v2322 = vld [vmem:[#allocation3 + $0x88] sm:$0x3]
      %v2323 = vld [vmem:[#allocation3 + $0x90] sm:$0xff]
      %v2324 = vld [vmem:[#allocation3 + $0x98] sm:$0xff]
      %v2325 = vld [vmem:[#allocation3 + $0xa0] sm:$0x3]
      %v2326 = vld [vmem:[#allocation3 + $0xa8] sm:$0xff]
      %v2327 = vld [vmem:[#allocation3 + $0xb0] sm:$0xff]
      %v2328 = vld [vmem:[#allocation3 + $0xb8] sm:$0x3]
      %v2329 = vld [vmem:[#allocation3 + $0xc0] sm:$0xff]
      %v2330 = vld [vmem:[#allocation3 + $0xc8] sm:$0xff]
      %v2331 = vld [vmem:[#allocation3 + $0xd0] sm:$0x3]
      %v2332 = vld [vmem:[#allocation3 + $0xd8] sm:$0xff]
      %v2333 = vld [vmem:[#allocation3 + $0xe0] sm:$0xff]
      %v2334 = vld [vmem:[#allocation3 + $0xe8] sm:$0x3]
      %v2335 = vld [vmem:[#allocation3 + $0xf0] sm:$0xff]
      %v2336 = vld [vmem:[#allocation3 + $0xf8] sm:$0xff]
      %v2337 = vld [vmem:[#allocation3 + $0x100] sm:$0x3]
      %v2338 = vld [vmem:[#allocation3 + $0x108] sm:$0xff]
      %v2339 = vld [vmem:[#allocation3 + $0x110] sm:$0xff]
      %v2340 = vld [vmem:[#allocation3 + $0x118] sm:$0x3]
      %v2341 = vld [vmem:[#allocation3 + $0x120] sm:$0xff]
      %v2342 = vld [vmem:[#allocation3 + $0x128] sm:$0xff]
      %v2343 = vld [vmem:[#allocation3 + $0x130] sm:$0x3]
      %v2344 = vld [vmem:[#allocation3 + $0x138] sm:$0xff]
      %v2345 = vld [vmem:[#allocation3 + $0x140] sm:$0xff]
      %v2346 = vld [vmem:[#allocation3 + $0x148] sm:$0x3]
      %v2347 = vld [vmem:[#allocation3 + $0x150] sm:$0xff]
      %v2348 = vld [vmem:[#allocation3 + $0x158] sm:$0xff]
      %v2349 = vld [vmem:[#allocation3 + $0x160] sm:$0x3]
      %v2350 = vld [vmem:[#allocation3 + $0x168] sm:$0xff]
      %v2351 = vld [vmem:[#allocation3 + $0x170] sm:$0xff]
      %v2352 = vld [vmem:[#allocation3 + $0x178] sm:$0x3]
      %v2353 = vld [vmem:[#allocation3 + $0x180] sm:$0xff]
      %v2354 = vld [vmem:[#allocation3 + $0x188] sm:$0xff]
      %v2355 = vld [vmem:[#allocation3 + $0x190] sm:$0x3]
      %v2356 = vld [vmem:[#allocation3 + $0x198] sm:$0xff]
      %v2357 = vld [vmem:[#allocation3 + $0x1a0] sm:$0xff]
      %v2358 = vld [vmem:[#allocation3 + $0x1a8] sm:$0x3]
      %2359 = vst.msk [vmem:[#allocation4] sm:$0xff] %vm1889, %v2305
      %2360 = vst.msk [vmem:[#allocation4 + $0x8] sm:$0xff] %vm1889, %v2306
      %2361 = vst.msk [vmem:[#allocation4 + $0x10] sm:$0xff] %vm1889, %v2308
      %2362 = vst.msk [vmem:[#allocation4 + $0x18] sm:$0xff] %vm1889, %v2309
      %2363 = vst.msk [vmem:[#allocation4 + $0x20] sm:$0xff] %vm1889, %v2311
      %2364 = vst.msk [vmem:[#allocation4 + $0x28] sm:$0xff] %vm1889, %v2312
      %2365 = vst.msk [vmem:[#allocation4 + $0x30] sm:$0xff] %vm1889, %v2314
      %2366 = vst.msk [vmem:[#allocation4 + $0x38] sm:$0xff] %vm1889, %v2315
      %2367 = vst.msk [vmem:[#allocation4 + $0x40] sm:$0xff] %vm1889, %v2317
      %2368 = vst.msk [vmem:[#allocation4 + $0x48] sm:$0xff] %vm1889, %v2318
      %2369 = vst.msk [vmem:[#allocation4 + $0x50] sm:$0xff] %vm1889, %v2320
      %2370 = vst.msk [vmem:[#allocation4 + $0x58] sm:$0xff] %vm1889, %v2321
      %2371 = vst.msk [vmem:[#allocation4 + $0x60] sm:$0xff] %vm1889, %v2323
      %2372 = vst.msk [vmem:[#allocation4 + $0x68] sm:$0xff] %vm1889, %v2324
      %2373 = vst.msk [vmem:[#allocation4 + $0x70] sm:$0xff] %vm1889, %v2326
      %2374 = vst.msk [vmem:[#allocation4 + $0x78] sm:$0xff] %vm1889, %v2327
      %2375 = vst.msk [vmem:[#allocation4 + $0x80] sm:$0xff] %vm1889, %v2329
      %2376 = vst.msk [vmem:[#allocation4 + $0x88] sm:$0xff] %vm1889, %v2330
      %2377 = vst.msk [vmem:[#allocation4 + $0x90] sm:$0xff] %vm1889, %v2332
      %2378 = vst.msk [vmem:[#allocation4 + $0x98] sm:$0xff] %vm1889, %v2333
      %2379 = vst.msk [vmem:[#allocation4 + $0xa0] sm:$0xff] %vm1889, %v2335
      %2380 = vst.msk [vmem:[#allocation4 + $0xa8] sm:$0xff] %vm1889, %v2336
      %2381 = vst.msk [vmem:[#allocation4 + $0xb0] sm:$0xff] %vm1889, %v2338
      %2382 = vst.msk [vmem:[#allocation4 + $0xb8] sm:$0xff] %vm1889, %v2339
      %2383 = vst.msk [vmem:[#allocation4 + $0xc0] sm:$0xff] %vm1889, %v2341
      %2384 = vst.msk [vmem:[#allocation4 + $0xc8] sm:$0xff] %vm1889, %v2342
      %2385 = vst.msk [vmem:[#allocation4 + $0xd0] sm:$0xff] %vm1889, %v2344
      %2386 = vst.msk [vmem:[#allocation4 + $0xd8] sm:$0xff] %vm1889, %v2345
      %2387 = vst.msk [vmem:[#allocation4 + $0xe0] sm:$0xff] %vm1889, %v2347
      %2388 = vst.msk [vmem:[#allocation4 + $0xe8] sm:$0xff] %vm1889, %v2348
      %2389 = vst.msk [vmem:[#allocation4 + $0xf0] sm:$0xff] %vm1889, %v2350
      %2390 = vst.msk [vmem:[#allocation4 + $0xf8] sm:$0xff] %vm1889, %v2351
      %v2439 = vrot.slane %v2305, 1
      %v2440 = vrot.slane %v2306, 1
      %v2441 = vsel %vm306, %v2439, %v2440
      %v2442 = vrot.slane %v2307, 1
      %v2443 = vsel %vm306, %v2440, %v2442
      %v2444 = vrot.slane %v2308, 1
      %v2445 = vrot.slane %v2309, 1
      %v2446 = vsel %vm306, %v2444, %v2445
      %v2447 = vrot.slane %v2310, 1
      %v2448 = vsel %vm306, %v2445, %v2447
      %v2449 = vrot.slane %v2311, 1
      %v2450 = vrot.slane %v2312, 1
      %v2451 = vsel %vm306, %v2449, %v2450
      %v2452 = vrot.slane %v2313, 1
      %v2453 = vsel %vm306, %v2450, %v2452
      %v2454 = vrot.slane %v2314, 1
      %v2455 = vrot.slane %v2315, 1
      %v2456 = vsel %vm306, %v2454, %v2455
      %v2457 = vrot.slane %v2316, 1
      %v2458 = vsel %vm306, %v2455, %v2457
      %v2459 = vrot.slane %v2317, 1
      %v2460 = vrot.slane %v2318, 1
      %v2461 = vsel %vm306, %v2459, %v2460
      %v2462 = vrot.slane %v2319, 1
      %v2463 = vsel %vm306, %v2460, %v2462
      %v2464 = vrot.slane %v2320, 1
      %v2465 = vrot.slane %v2321, 1
      %v2466 = vsel %vm306, %v2464, %v2465
      %v2467 = vrot.slane %v2322, 1
      %v2468 = vsel %vm306, %v2465, %v2467
      %v2469 = vrot.slane %v2323, 1
      %v2470 = vrot.slane %v2324, 1
      %v2471 = vsel %vm306, %v2469, %v2470
      %v2472 = vrot.slane %v2325, 1
      %v2473 = vsel %vm306, %v2470, %v2472
      %v2474 = vrot.slane %v2326, 1
      %v2475 = vrot.slane %v2327, 1
      %v2476 = vsel %vm306, %v2474, %v2475
      %v2477 = vrot.slane %v2328, 1
      %v2478 = vsel %vm306, %v2475, %v2477
      %v2479 = vrot.slane %v2329, 1
      %v2480 = vrot.slane %v2330, 1
      %v2481 = vsel %vm306, %v2479, %v2480
      %v2482 = vrot.slane %v2331, 1
      %v2483 = vsel %vm306, %v2480, %v2482
      %v2484 = vrot.slane %v2332, 1
      %v2485 = vrot.slane %v2333, 1
      %v2486 = vsel %vm306, %v2484, %v2485
      %v2487 = vrot.slane %v2334, 1
      %v2488 = vsel %vm306, %v2485, %v2487
      %v2489 = vrot.slane %v2335, 1
      %v2490 = vrot.slane %v2336, 1
      %v2491 = vsel %vm306, %v2489, %v2490
      %v2492 = vrot.slane %v2337, 1
      %v2493 = vsel %vm306, %v2490, %v2492
      %v2494 = vrot.slane %v2338, 1
      %v2495 = vrot.slane %v2339, 1
      %v2496 = vsel %vm306, %v2494, %v2495
      %v2497 = vrot.slane %v2340, 1
      %v2498 = vsel %vm306, %v2495, %v2497
      %v2499 = vrot.slane %v2341, 1
      %v2500 = vrot.slane %v2342, 1
      %v2501 = vsel %vm306, %v2499, %v2500
      %v2502 = vrot.slane %v2343, 1
      %v2503 = vsel %vm306, %v2500, %v2502
      %v2504 = vrot.slane %v2344, 1
      %v2505 = vrot.slane %v2345, 1
      %v2506 = vsel %vm306, %v2504, %v2505
      %v2507 = vrot.slane %v2346, 1
      %v2508 = vsel %vm306, %v2505, %v2507
      %v2509 = vrot.slane %v2347, 1
      %v2510 = vrot.slane %v2348, 1
      %v2511 = vsel %vm306, %v2509, %v2510
      %v2512 = vrot.slane %v2349, 1
      %v2513 = vsel %vm306, %v2510, %v2512
      %v2514 = vrot.slane %v2350, 1
      %v2515 = vrot.slane %v2351, 1
      %v2516 = vsel %vm306, %v2514, %v2515
      %v2517 = vrot.slane %v2352, 1
      %v2518 = vsel %vm306, %v2515, %v2517
      %2519 = vrot.lane.b32.xlu0 %v2441, 8
      %v2520 = vpop.permute.xlu0 %2519
      %2521 = vrot.lane.b32.xlu0 %v2443, 8
      %v2522 = vpop.permute.xlu0 %2521
      %2523 = vrot.lane.b32.xlu0 %v2446, 8
      %v2524 = vpop.permute.xlu0 %2523
      %2525 = vrot.lane.b32.xlu0 %v2448, 8
      %v2526 = vpop.permute.xlu0 %2525
      %2527 = vrot.lane.b32.xlu0 %v2451, 8
      %v2528 = vpop.permute.xlu0 %2527
      %2529 = vrot.lane.b32.xlu0 %v2453, 8
      %v2530 = vpop.permute.xlu0 %2529
      %2531 = vrot.lane.b32.xlu0 %v2456, 8
      %v2532 = vpop.permute.xlu0 %2531
      %2533 = vrot.lane.b32.xlu0 %v2458, 8
      %v2534 = vpop.permute.xlu0 %2533
      %2535 = vrot.lane.b32.xlu0 %v2461, 8
      %v2536 = vpop.permute.xlu0 %2535
      %2537 = vrot.lane.b32.xlu0 %v2463, 8
      %v2538 = vpop.permute.xlu0 %2537
      %2539 = vrot.lane.b32.xlu0 %v2466, 8
      %v2540 = vpop.permute.xlu0 %2539
      %2541 = vrot.lane.b32.xlu0 %v2468, 8
      %v2542 = vpop.permute.xlu0 %2541
      %2543 = vrot.lane.b32.xlu0 %v2471, 8
      %v2544 = vpop.permute.xlu0 %2543
      %2545 = vrot.lane.b32.xlu0 %v2473, 8
      %v2546 = vpop.permute.xlu0 %2545
      %2547 = vrot.lane.b32.xlu0 %v2476, 8
      %v2548 = vpop.permute.xlu0 %2547
      %2549 = vrot.lane.b32.xlu0 %v2478, 8
      %v2550 = vpop.permute.xlu0 %2549
      %2551 = vrot.lane.b32.xlu0 %v2481, 8
      %v2552 = vpop.permute.xlu0 %2551
      %2553 = vrot.lane.b32.xlu0 %v2483, 8
      %v2554 = vpop.permute.xlu0 %2553
      %2555 = vrot.lane.b32.xlu0 %v2486, 8
      %v2556 = vpop.permute.xlu0 %2555
      %2557 = vrot.lane.b32.xlu0 %v2488, 8
      %v2558 = vpop.permute.xlu0 %2557
      %2559 = vrot.lane.b32.xlu0 %v2491, 8
      %v2560 = vpop.permute.xlu0 %2559
      %2561 = vrot.lane.b32.xlu0 %v2493, 8
      %v2562 = vpop.permute.xlu0 %2561
      %2563 = vrot.lane.b32.xlu0 %v2496, 8
      %v2564 = vpop.permute.xlu0 %2563
      %2565 = vrot.lane.b32.xlu0 %v2498, 8
      %v2566 = vpop.permute.xlu0 %2565
      %2567 = vrot.lane.b32.xlu0 %v2501, 8
      %v2568 = vpop.permute.xlu0 %2567
      %2569 = vrot.lane.b32.xlu0 %v2503, 8
      %v2570 = vpop.permute.xlu0 %2569
      %2571 = vrot.lane.b32.xlu0 %v2506, 8
      %v2572 = vpop.permute.xlu0 %2571
      %2573 = vrot.lane.b32.xlu0 %v2508, 8
      %v2574 = vpop.permute.xlu0 %2573
      %2575 = vrot.lane.b32.xlu0 %v2511, 8
      %v2576 = vpop.permute.xlu0 %2575
      %2577 = vrot.lane.b32.xlu0 %v2513, 8
      %v2578 = vpop.permute.xlu0 %2577
      %2579 = vrot.lane.b32.xlu0 %v2516, 8
      %v2580 = vpop.permute.xlu0 %2579
      %2581 = vrot.lane.b32.xlu0 %v2518, 8
      %v2582 = vpop.permute.xlu0 %2581
      %vm2615 = vcmask 130112
      %2616 = vst.msk [vmem:[#allocation4] sm:$0xff] %vm2615, %v2520
      %2617 = vst.msk [vmem:[#allocation4 + $0x8] sm:$0xff] %vm2615, %v2522
      %2618 = vst.msk [vmem:[#allocation4 + $0x10] sm:$0xff] %vm2615, %v2524
      %2619 = vst.msk [vmem:[#allocation4 + $0x18] sm:$0xff] %vm2615, %v2526
      %2620 = vst.msk [vmem:[#allocation4 + $0x20] sm:$0xff] %vm2615, %v2528
      %2621 = vst.msk [vmem:[#allocation4 + $0x28] sm:$0xff] %vm2615, %v2530
      %2622 = vst.msk [vmem:[#allocation4 + $0x30] sm:$0xff] %vm2615, %v2532
      %2623 = vst.msk [vmem:[#allocation4 + $0x38] sm:$0xff] %vm2615, %v2534
      %2624 = vst.msk [vmem:[#allocation4 + $0x40] sm:$0xff] %vm2615, %v2536
      %2625 = vst.msk [vmem:[#allocation4 + $0x48] sm:$0xff] %vm2615, %v2538
      %2626 = vst.msk [vmem:[#allocation4 + $0x50] sm:$0xff] %vm2615, %v2540
      %2627 = vst.msk [vmem:[#allocation4 + $0x58] sm:$0xff] %vm2615, %v2542
      %2628 = vst.msk [vmem:[#allocation4 + $0x60] sm:$0xff] %vm2615, %v2544
      %2629 = vst.msk [vmem:[#allocation4 + $0x68] sm:$0xff] %vm2615, %v2546
      %2630 = vst.msk [vmem:[#allocation4 + $0x70] sm:$0xff] %vm2615, %v2548
      %2631 = vst.msk [vmem:[#allocation4 + $0x78] sm:$0xff] %vm2615, %v2550
      %2632 = vst.msk [vmem:[#allocation4 + $0x80] sm:$0xff] %vm2615, %v2552
      %2633 = vst.msk [vmem:[#allocation4 + $0x88] sm:$0xff] %vm2615, %v2554
      %2634 = vst.msk [vmem:[#allocation4 + $0x90] sm:$0xff] %vm2615, %v2556
      %2635 = vst.msk [vmem:[#allocation4 + $0x98] sm:$0xff] %vm2615, %v2558
      %2636 = vst.msk [vmem:[#allocation4 + $0xa0] sm:$0xff] %vm2615, %v2560
      %2637 = vst.msk [vmem:[#allocation4 + $0xa8] sm:$0xff] %vm2615, %v2562
      %2638 = vst.msk [vmem:[#allocation4 + $0xb0] sm:$0xff] %vm2615, %v2564
      %2639 = vst.msk [vmem:[#allocation4 + $0xb8] sm:$0xff] %vm2615, %v2566
      %2640 = vst.msk [vmem:[#allocation4 + $0xc0] sm:$0xff] %vm2615, %v2568
      %2641 = vst.msk [vmem:[#allocation4 + $0xc8] sm:$0xff] %vm2615, %v2570
      %2642 = vst.msk [vmem:[#allocation4 + $0xd0] sm:$0xff] %vm2615, %v2572
      %2643 = vst.msk [vmem:[#allocation4 + $0xd8] sm:$0xff] %vm2615, %v2574
      %2644 = vst.msk [vmem:[#allocation4 + $0xe0] sm:$0xff] %vm2615, %v2576
      %2645 = vst.msk [vmem:[#allocation4 + $0xe8] sm:$0xff] %vm2615, %v2578
      %2646 = vst.msk [vmem:[#allocation4 + $0xf0] sm:$0xff] %vm2615, %v2580
      %2647 = vst.msk [vmem:[#allocation4 + $0xf8] sm:$0xff] %vm2615, %v2582
      %v2648 = vrot.slane %v2305, 2
      %v2649 = vrot.slane %v2306, 2
      %v2650 = vsel %vm516, %v2648, %v2649
      %v2651 = vrot.slane %v2307, 2
      %v2652 = vsel %vm516, %v2649, %v2651
      %v2653 = vrot.slane %v2308, 2
      %v2654 = vrot.slane %v2309, 2
      %v2655 = vsel %vm516, %v2653, %v2654
      %v2656 = vrot.slane %v2310, 2
      %v2657 = vsel %vm516, %v2654, %v2656
      %v2658 = vrot.slane %v2311, 2
      %v2659 = vrot.slane %v2312, 2
      %v2660 = vsel %vm516, %v2658, %v2659
      %v2661 = vrot.slane %v2313, 2
      %v2662 = vsel %vm516, %v2659, %v2661
      %v2663 = vrot.slane %v2314, 2
      %v2664 = vrot.slane %v2315, 2
      %v2665 = vsel %vm516, %v2663, %v2664
      %v2666 = vrot.slane %v2316, 2
      %v2667 = vsel %vm516, %v2664, %v2666
      %v2668 = vrot.slane %v2317, 2
      %v2669 = vrot.slane %v2318, 2
      %v2670 = vsel %vm516, %v2668, %v2669
      %v2671 = vrot.slane %v2319, 2
      %v2672 = vsel %vm516, %v2669, %v2671
      %v2673 = vrot.slane %v2320, 2
      %v2674 = vrot.slane %v2321, 2
      %v2675 = vsel %vm516, %v2673, %v2674
      %v2676 = vrot.slane %v2322, 2
      %v2677 = vsel %vm516, %v2674, %v2676
      %v2678 = vrot.slane %v2323, 2
      %v2679 = vrot.slane %v2324, 2
      %v2680 = vsel %vm516, %v2678, %v2679
      %v2681 = vrot.slane %v2325, 2
      %v2682 = vsel %vm516, %v2679, %v2681
      %v2683 = vrot.slane %v2326, 2
      %v2684 = vrot.slane %v2327, 2
      %v2685 = vsel %vm516, %v2683, %v2684
      %v2686 = vrot.slane %v2328, 2
      %v2687 = vsel %vm516, %v2684, %v2686
      %v2688 = vrot.slane %v2329, 2
      %v2689 = vrot.slane %v2330, 2
      %v2690 = vsel %vm516, %v2688, %v2689
      %v2691 = vrot.slane %v2331, 2
      %v2692 = vsel %vm516, %v2689, %v2691
      %v2693 = vrot.slane %v2332, 2
      %v2694 = vrot.slane %v2333, 2
      %v2695 = vsel %vm516, %v2693, %v2694
      %v2696 = vrot.slane %v2334, 2
      %v2697 = vsel %vm516, %v2694, %v2696
      %v2698 = vrot.slane %v2335, 2
      %v2699 = vrot.slane %v2336, 2
      %v2700 = vsel %vm516, %v2698, %v2699
      %v2701 = vrot.slane %v2337, 2
      %v2702 = vsel %vm516, %v2699, %v2701
      %v2703 = vrot.slane %v2338, 2
      %v2704 = vrot.slane %v2339, 2
      %v2705 = vsel %vm516, %v2703, %v2704
      %v2706 = vrot.slane %v2340, 2
      %v2707 = vsel %vm516, %v2704, %v2706
      %v2708 = vrot.slane %v2341, 2
      %v2709 = vrot.slane %v2342, 2
      %v2710 = vsel %vm516, %v2708, %v2709
      %v2711 = vrot.slane %v2343, 2
      %v2712 = vsel %vm516, %v2709, %v2711
      %v2713 = vrot.slane %v2344, 2
      %v2714 = vrot.slane %v2345, 2
      %v2715 = vsel %vm516, %v2713, %v2714
      %v2716 = vrot.slane %v2346, 2
      %v2717 = vsel %vm516, %v2714, %v2716
      %v2718 = vrot.slane %v2347, 2
      %v2719 = vrot.slane %v2348, 2
      %v2720 = vsel %vm516, %v2718, %v2719
      %v2721 = vrot.slane %v2349, 2
      %v2722 = vsel %vm516, %v2719, %v2721
      %v2723 = vrot.slane %v2350, 2
      %v2724 = vrot.slane %v2351, 2
      %v2725 = vsel %vm516, %v2723, %v2724
      %v2726 = vrot.slane %v2352, 2
      %v2727 = vsel %vm516, %v2724, %v2726
      %2728 = vrot.lane.b32.xlu0 %v2650, 16
      %v2729 = vpop.permute.xlu0 %2728
      %2730 = vrot.lane.b32.xlu0 %v2652, 16
      %v2731 = vpop.permute.xlu0 %2730
      %2732 = vrot.lane.b32.xlu0 %v2655, 16
      %v2733 = vpop.permute.xlu0 %2732
      %2734 = vrot.lane.b32.xlu0 %v2657, 16
      %v2735 = vpop.permute.xlu0 %2734
      %2736 = vrot.lane.b32.xlu0 %v2660, 16
      %v2737 = vpop.permute.xlu0 %2736
      %2738 = vrot.lane.b32.xlu0 %v2662, 16
      %v2739 = vpop.permute.xlu0 %2738
      %2740 = vrot.lane.b32.xlu0 %v2665, 16
      %v2741 = vpop.permute.xlu0 %2740
      %2742 = vrot.lane.b32.xlu0 %v2667, 16
      %v2743 = vpop.permute.xlu0 %2742
      %2744 = vrot.lane.b32.xlu0 %v2670, 16
      %v2745 = vpop.permute.xlu0 %2744
      %2746 = vrot.lane.b32.xlu0 %v2672, 16
      %v2747 = vpop.permute.xlu0 %2746
      %2748 = vrot.lane.b32.xlu0 %v2675, 16
      %v2749 = vpop.permute.xlu0 %2748
      %2750 = vrot.lane.b32.xlu0 %v2677, 16
      %v2751 = vpop.permute.xlu0 %2750
      %2752 = vrot.lane.b32.xlu0 %v2680, 16
      %v2753 = vpop.permute.xlu0 %2752
      %2754 = vrot.lane.b32.xlu0 %v2682, 16
      %v2755 = vpop.permute.xlu0 %2754
      %2756 = vrot.lane.b32.xlu0 %v2685, 16
      %v2757 = vpop.permute.xlu0 %2756
      %2758 = vrot.lane.b32.xlu0 %v2687, 16
      %v2759 = vpop.permute.xlu0 %2758
      %2760 = vrot.lane.b32.xlu0 %v2690, 16
      %v2761 = vpop.permute.xlu0 %2760
      %2762 = vrot.lane.b32.xlu0 %v2692, 16
      %v2763 = vpop.permute.xlu0 %2762
      %2764 = vrot.lane.b32.xlu0 %v2695, 16
      %v2765 = vpop.permute.xlu0 %2764
      %2766 = vrot.lane.b32.xlu0 %v2697, 16
      %v2767 = vpop.permute.xlu0 %2766
      %2768 = vrot.lane.b32.xlu0 %v2700, 16
      %v2769 = vpop.permute.xlu0 %2768
      %2770 = vrot.lane.b32.xlu0 %v2702, 16
      %v2771 = vpop.permute.xlu0 %2770
      %2772 = vrot.lane.b32.xlu0 %v2705, 16
      %v2773 = vpop.permute.xlu0 %2772
      %2774 = vrot.lane.b32.xlu0 %v2707, 16
      %v2775 = vpop.permute.xlu0 %2774
      %2776 = vrot.lane.b32.xlu0 %v2710, 16
      %v2777 = vpop.permute.xlu0 %2776
      %2778 = vrot.lane.b32.xlu0 %v2712, 16
      %v2779 = vpop.permute.xlu0 %2778
      %2780 = vrot.lane.b32.xlu0 %v2715, 16
      %v2781 = vpop.permute.xlu0 %2780
      %2782 = vrot.lane.b32.xlu0 %v2717, 16
      %v2783 = vpop.permute.xlu0 %2782
      %2784 = vrot.lane.b32.xlu0 %v2720, 16
      %v2785 = vpop.permute.xlu0 %2784
      %2786 = vrot.lane.b32.xlu0 %v2722, 16
      %v2787 = vpop.permute.xlu0 %2786
      %2788 = vrot.lane.b32.xlu0 %v2725, 16
      %v2789 = vpop.permute.xlu0 %2788
      %2790 = vrot.lane.b32.xlu0 %v2727, 16
      %v2791 = vpop.permute.xlu0 %2790
      %vm2824 = vcmask 195712
      %2825 = vst.msk [vmem:[#allocation4] sm:$0xff] %vm2824, %v2729
      %2826 = vst.msk [vmem:[#allocation4 + $0x8] sm:$0xff] %vm2824, %v2731
      %2827 = vst.msk [vmem:[#allocation4 + $0x10] sm:$0xff] %vm2824, %v2733
      %2828 = vst.msk [vmem:[#allocation4 + $0x18] sm:$0xff] %vm2824, %v2735
      %2829 = vst.msk [vmem:[#allocation4 + $0x20] sm:$0xff] %vm2824, %v2737
      %2830 = vst.msk [vmem:[#allocation4 + $0x28] sm:$0xff] %vm2824, %v2739
      %2831 = vst.msk [vmem:[#allocation4 + $0x30] sm:$0xff] %vm2824, %v2741
      %2832 = vst.msk [vmem:[#allocation4 + $0x38] sm:$0xff] %vm2824, %v2743
      %2833 = vst.msk [vmem:[#allocation4 + $0x40] sm:$0xff] %vm2824, %v2745
      %2834 = vst.msk [vmem:[#allocation4 + $0x48] sm:$0xff] %vm2824, %v2747
      %2835 = vst.msk [vmem:[#allocation4 + $0x50] sm:$0xff] %vm2824, %v2749
      %2836 = vst.msk [vmem:[#allocation4 + $0x58] sm:$0xff] %vm2824, %v2751
      %2837 = vst.msk [vmem:[#allocation4 + $0x60] sm:$0xff] %vm2824, %v2753
      %2838 = vst.msk [vmem:[#allocation4 + $0x68] sm:$0xff] %vm2824, %v2755
      %2839 = vst.msk [vmem:[#allocation4 + $0x70] sm:$0xff] %vm2824, %v2757
      %2840 = vst.msk [vmem:[#allocation4 + $0x78] sm:$0xff] %vm2824, %v2759
      %2841 = vst.msk [vmem:[#allocation4 + $0x80] sm:$0xff] %vm2824, %v2761
      %2842 = vst.msk [vmem:[#allocation4 + $0x88] sm:$0xff] %vm2824, %v2763
      %2843 = vst.msk [vmem:[#allocation4 + $0x90] sm:$0xff] %vm2824, %v2765
      %2844 = vst.msk [vmem:[#allocation4 + $0x98] sm:$0xff] %vm2824, %v2767
      %2845 = vst.msk [vmem:[#allocation4 + $0xa0] sm:$0xff] %vm2824, %v2769
      %2846 = vst.msk [vmem:[#allocation4 + $0xa8] sm:$0xff] %vm2824, %v2771
      %2847 = vst.msk [vmem:[#allocation4 + $0xb0] sm:$0xff] %vm2824, %v2773
      %2848 = vst.msk [vmem:[#allocation4 + $0xb8] sm:$0xff] %vm2824, %v2775
      %2849 = vst.msk [vmem:[#allocation4 + $0xc0] sm:$0xff] %vm2824, %v2777
      %2850 = vst.msk [vmem:[#allocation4 + $0xc8] sm:$0xff] %vm2824, %v2779
      %2851 = vst.msk [vmem:[#allocation4 + $0xd0] sm:$0xff] %vm2824, %v2781
      %2852 = vst.msk [vmem:[#allocation4 + $0xd8] sm:$0xff] %vm2824, %v2783
      %2853 = vst.msk [vmem:[#allocation4 + $0xe0] sm:$0xff] %vm2824, %v2785
      %2854 = vst.msk [vmem:[#allocation4 + $0xe8] sm:$0xff] %vm2824, %v2787
      %2855 = vst.msk [vmem:[#allocation4 + $0xf0] sm:$0xff] %vm2824, %v2789
      %2856 = vst.msk [vmem:[#allocation4 + $0xf8] sm:$0xff] %vm2824, %v2791
      %2859 = vrot.lane.b32.xlu0 %v2308, 24
      %v2860 = vpop.permute.xlu0 %2859
      %2861 = vrot.lane.b32.xlu0 %v2309, 24
      %v2862 = vpop.permute.xlu0 %2861
      %2863 = vrot.lane.b32.xlu0 %v2311, 24
      %v2864 = vpop.permute.xlu0 %2863
      %2865 = vrot.lane.b32.xlu0 %v2312, 24
      %v2866 = vpop.permute.xlu0 %2865
      %2867 = vrot.lane.b32.xlu0 %v2314, 24
      %v2868 = vpop.permute.xlu0 %2867
      %2869 = vrot.lane.b32.xlu0 %v2315, 24
      %v2870 = vpop.permute.xlu0 %2869
      %2871 = vrot.lane.b32.xlu0 %v2317, 24
      %v2872 = vpop.permute.xlu0 %2871
      %2873 = vrot.lane.b32.xlu0 %v2318, 24
      %v2874 = vpop.permute.xlu0 %2873
      %2875 = vrot.lane.b32.xlu0 %v2320, 24
      %v2876 = vpop.permute.xlu0 %2875
      %2877 = vrot.lane.b32.xlu0 %v2321, 24
      %v2878 = vpop.permute.xlu0 %2877
      %2879 = vrot.lane.b32.xlu0 %v2323, 24
      %v2880 = vpop.permute.xlu0 %2879
      %2881 = vrot.lane.b32.xlu0 %v2324, 24
      %v2882 = vpop.permute.xlu0 %2881
      %2883 = vrot.lane.b32.xlu0 %v2326, 24
      %v2884 = vpop.permute.xlu0 %2883
      %2885 = vrot.lane.b32.xlu0 %v2327, 24
      %v2886 = vpop.permute.xlu0 %2885
      %2887 = vrot.lane.b32.xlu0 %v2329, 24
      %v2888 = vpop.permute.xlu0 %2887
      %2889 = vrot.lane.b32.xlu0 %v2330, 24
      %v2890 = vpop.permute.xlu0 %2889
      %2891 = vrot.lane.b32.xlu0 %v2332, 24
      %v2892 = vpop.permute.xlu0 %2891
      %2893 = vrot.lane.b32.xlu0 %v2333, 24
      %v2894 = vpop.permute.xlu0 %2893
      %2895 = vrot.lane.b32.xlu0 %v2335, 24
      %v2896 = vpop.permute.xlu0 %2895
      %2897 = vrot.lane.b32.xlu0 %v2336, 24
      %v2898 = vpop.permute.xlu0 %2897
      %2899 = vrot.lane.b32.xlu0 %v2338, 24
      %v2900 = vpop.permute.xlu0 %2899
      %2901 = vrot.lane.b32.xlu0 %v2339, 24
      %v2902 = vpop.permute.xlu0 %2901
      %2903 = vrot.lane.b32.xlu0 %v2341, 24
      %v2904 = vpop.permute.xlu0 %2903
      %2905 = vrot.lane.b32.xlu0 %v2342, 24
      %v2906 = vpop.permute.xlu0 %2905
      %2907 = vrot.lane.b32.xlu0 %v2344, 24
      %v2908 = vpop.permute.xlu0 %2907
      %2909 = vrot.lane.b32.xlu0 %v2345, 24
      %v2910 = vpop.permute.xlu0 %2909
      %2911 = vrot.lane.b32.xlu0 %v2347, 24
      %v2912 = vpop.permute.xlu0 %2911
      %2913 = vrot.lane.b32.xlu0 %v2348, 24
      %v2914 = vpop.permute.xlu0 %2913
      %2915 = vrot.lane.b32.xlu0 %v2350, 24
      %v2916 = vpop.permute.xlu0 %2915
      %2917 = vrot.lane.b32.xlu0 %v2351, 24
      %v2918 = vpop.permute.xlu0 %2917
      %2919 = vrot.lane.b32.xlu0 %v2353, 24
      %v2920 = vpop.permute.xlu0 %2919
      %2921 = vrot.lane.b32.xlu0 %v2354, 24
      %v2922 = vpop.permute.xlu0 %2921
      %vm2955 = vcmask 261312
      %2956 = vst.msk [vmem:[#allocation4] sm:$0xff] %vm2955, %v2860
      %2957 = vst.msk [vmem:[#allocation4 + $0x8] sm:$0xff] %vm2955, %v2862
      %2958 = vst.msk [vmem:[#allocation4 + $0x10] sm:$0xff] %vm2955, %v2864
      %2959 = vst.msk [vmem:[#allocation4 + $0x18] sm:$0xff] %vm2955, %v2866
      %2960 = vst.msk [vmem:[#allocation4 + $0x20] sm:$0xff] %vm2955, %v2868
      %2961 = vst.msk [vmem:[#allocation4 + $0x28] sm:$0xff] %vm2955, %v2870
      %2962 = vst.msk [vmem:[#allocation4 + $0x30] sm:$0xff] %vm2955, %v2872
      %2963 = vst.msk [vmem:[#allocation4 + $0x38] sm:$0xff] %vm2955, %v2874
      %2964 = vst.msk [vmem:[#allocation4 + $0x40] sm:$0xff] %vm2955, %v2876
      %2965 = vst.msk [vmem:[#allocation4 + $0x48] sm:$0xff] %vm2955, %v2878
      %2966 = vst.msk [vmem:[#allocation4 + $0x50] sm:$0xff] %vm2955, %v2880
      %2967 = vst.msk [vmem:[#allocation4 + $0x58] sm:$0xff] %vm2955, %v2882
      %2968 = vst.msk [vmem:[#allocation4 + $0x60] sm:$0xff] %vm2955, %v2884
      %2969 = vst.msk [vmem:[#allocation4 + $0x68] sm:$0xff] %vm2955, %v2886
      %2970 = vst.msk [vmem:[#allocation4 + $0x70] sm:$0xff] %vm2955, %v2888
      %2971 = vst.msk [vmem:[#allocation4 + $0x78] sm:$0xff] %vm2955, %v2890
      %2972 = vst.msk [vmem:[#allocation4 + $0x80] sm:$0xff] %vm2955, %v2892
      %2973 = vst.msk [vmem:[#allocation4 + $0x88] sm:$0xff] %vm2955, %v2894
      %2974 = vst.msk [vmem:[#allocation4 + $0x90] sm:$0xff] %vm2955, %v2896
      %2975 = vst.msk [vmem:[#allocation4 + $0x98] sm:$0xff] %vm2955, %v2898
      %2976 = vst.msk [vmem:[#allocation4 + $0xa0] sm:$0xff] %vm2955, %v2900
      %2977 = vst.msk [vmem:[#allocation4 + $0xa8] sm:$0xff] %vm2955, %v2902
      %2978 = vst.msk [vmem:[#allocation4 + $0xb0] sm:$0xff] %vm2955, %v2904
      %2979 = vst.msk [vmem:[#allocation4 + $0xb8] sm:$0xff] %vm2955, %v2906
      %2980 = vst.msk [vmem:[#allocation4 + $0xc0] sm:$0xff] %vm2955, %v2908
      %2981 = vst.msk [vmem:[#allocation4 + $0xc8] sm:$0xff] %vm2955, %v2910
      %2982 = vst.msk [vmem:[#allocation4 + $0xd0] sm:$0xff] %vm2955, %v2912
      %2983 = vst.msk [vmem:[#allocation4 + $0xd8] sm:$0xff] %vm2955, %v2914
      %2984 = vst.msk [vmem:[#allocation4 + $0xe0] sm:$0xff] %vm2955, %v2916
      %2985 = vst.msk [vmem:[#allocation4 + $0xe8] sm:$0xff] %vm2955, %v2918
      %2986 = vst.msk [vmem:[#allocation4 + $0xf0] sm:$0xff] %vm2955, %v2920
      %2987 = vst.msk [vmem:[#allocation4 + $0xf8] sm:$0xff] %vm2955, %v2922
      %v2989 = vrot.slane %v2353, 1
      %v2990 = vrot.slane %v2354, 1
      %v2991 = vsel %vm306, %v2989, %v2990
      %v2992 = vrot.slane %v2355, 1
      %v2993 = vsel %vm306, %v2990, %v2992
      %2994 = vrot.lane.b32.xlu0 %v2446, 32
      %v2995 = vpop.permute.xlu0 %2994
      %2996 = vrot.lane.b32.xlu0 %v2448, 32
      %v2997 = vpop.permute.xlu0 %2996
      %2998 = vrot.lane.b32.xlu0 %v2451, 32
      %v2999 = vpop.permute.xlu0 %2998
      %3000 = vrot.lane.b32.xlu0 %v2453, 32
      %v3001 = vpop.permute.xlu0 %3000
      %3002 = vrot.lane.b32.xlu0 %v2456, 32
      %v3003 = vpop.permute.xlu0 %3002
      %3004 = vrot.lane.b32.xlu0 %v2458, 32
      %v3005 = vpop.permute.xlu0 %3004
      %3006 = vrot.lane.b32.xlu0 %v2461, 32
      %v3007 = vpop.permute.xlu0 %3006
      %3008 = vrot.lane.b32.xlu0 %v2463, 32
      %v3009 = vpop.permute.xlu0 %3008
      %3010 = vrot.lane.b32.xlu0 %v2466, 32
      %v3011 = vpop.permute.xlu0 %3010
      %3012 = vrot.lane.b32.xlu0 %v2468, 32
      %v3013 = vpop.permute.xlu0 %3012
      %3014 = vrot.lane.b32.xlu0 %v2471, 32
      %v3015 = vpop.permute.xlu0 %3014
      %3016 = vrot.lane.b32.xlu0 %v2473, 32
      %v3017 = vpop.permute.xlu0 %3016
      %3018 = vrot.lane.b32.xlu0 %v2476, 32
      %v3019 = vpop.permute.xlu0 %3018
      %3020 = vrot.lane.b32.xlu0 %v2478, 32
      %v3021 = vpop.permute.xlu0 %3020
      %3022 = vrot.lane.b32.xlu0 %v2481, 32
      %v3023 = vpop.permute.xlu0 %3022
      %3024 = vrot.lane.b32.xlu0 %v2483, 32
      %v3025 = vpop.permute.xlu0 %3024
      %3026 = vrot.lane.b32.xlu0 %v2486, 32
      %v3027 = vpop.permute.xlu0 %3026
      %3028 = vrot.lane.b32.xlu0 %v2488, 32
      %v3029 = vpop.permute.xlu0 %3028
      %3030 = vrot.lane.b32.xlu0 %v2491, 32
      %v3031 = vpop.permute.xlu0 %3030
      %3032 = vrot.lane.b32.xlu0 %v2493, 32
      %v3033 = vpop.permute.xlu0 %3032
      %3034 = vrot.lane.b32.xlu0 %v2496, 32
      %v3035 = vpop.permute.xlu0 %3034
      %3036 = vrot.lane.b32.xlu0 %v2498, 32
      %v3037 = vpop.permute.xlu0 %3036
      %3038 = vrot.lane.b32.xlu0 %v2501, 32
      %v3039 = vpop.permute.xlu0 %3038
      %3040 = vrot.lane.b32.xlu0 %v2503, 32
      %v3041 = vpop.permute.xlu0 %3040
      %3042 = vrot.lane.b32.xlu0 %v2506, 32
      %v3043 = vpop.permute.xlu0 %3042
      %3044 = vrot.lane.b32.xlu0 %v2508, 32
      %v3045 = vpop.permute.xlu0 %3044
      %3046 = vrot.lane.b32.xlu0 %v2511, 32
      %v3047 = vpop.permute.xlu0 %3046
      %3048 = vrot.lane.b32.xlu0 %v2513, 32
      %v3049 = vpop.permute.xlu0 %3048
      %3050 = vrot.lane.b32.xlu0 %v2516, 32
      %v3051 = vpop.permute.xlu0 %3050
      %3052 = vrot.lane.b32.xlu0 %v2518, 32
      %v3053 = vpop.permute.xlu0 %3052
      %3054 = vrot.lane.b32.xlu0 %v2991, 32
      %v3055 = vpop.permute.xlu0 %3054
      %3056 = vrot.lane.b32.xlu0 %v2993, 32
      %v3057 = vpop.permute.xlu0 %3056
      %vm3090 = vcmask 326912
      %3091 = vst.msk [vmem:[#allocation4] sm:$0xff] %vm3090, %v2995
      %3092 = vst.msk [vmem:[#allocation4 + $0x8] sm:$0xff] %vm3090, %v2997
      %3093 = vst.msk [vmem:[#allocation4 + $0x10] sm:$0xff] %vm3090, %v2999
      %3094 = vst.msk [vmem:[#allocation4 + $0x18] sm:$0xff] %vm3090, %v3001
      %3095 = vst.msk [vmem:[#allocation4 + $0x20] sm:$0xff] %vm3090, %v3003
      %3096 = vst.msk [vmem:[#allocation4 + $0x28] sm:$0xff] %vm3090, %v3005
      %3097 = vst.msk [vmem:[#allocation4 + $0x30] sm:$0xff] %vm3090, %v3007
      %3098 = vst.msk [vmem:[#allocation4 + $0x38] sm:$0xff] %vm3090, %v3009
      %3099 = vst.msk [vmem:[#allocation4 + $0x40] sm:$0xff] %vm3090, %v3011
      %3100 = vst.msk [vmem:[#allocation4 + $0x48] sm:$0xff] %vm3090, %v3013
      %3101 = vst.msk [vmem:[#allocation4 + $0x50] sm:$0xff] %vm3090, %v3015
      %3102 = vst.msk [vmem:[#allocation4 + $0x58] sm:$0xff] %vm3090, %v3017
      %3103 = vst.msk [vmem:[#allocation4 + $0x60] sm:$0xff] %vm3090, %v3019
      %3104 = vst.msk [vmem:[#allocation4 + $0x68] sm:$0xff] %vm3090, %v3021
      %3105 = vst.msk [vmem:[#allocation4 + $0x70] sm:$0xff] %vm3090, %v3023
      %3106 = vst.msk [vmem:[#allocation4 + $0x78] sm:$0xff] %vm3090, %v3025
      %3107 = vst.msk [vmem:[#allocation4 + $0x80] sm:$0xff] %vm3090, %v3027
      %3108 = vst.msk [vmem:[#allocation4 + $0x88] sm:$0xff] %vm3090, %v3029
      %3109 = vst.msk [vmem:[#allocation4 + $0x90] sm:$0xff] %vm3090, %v3031
      %3110 = vst.msk [vmem:[#allocation4 + $0x98] sm:$0xff] %vm3090, %v3033
      %3111 = vst.msk [vmem:[#allocation4 + $0xa0] sm:$0xff] %vm3090, %v3035
      %3112 = vst.msk [vmem:[#allocation4 + $0xa8] sm:$0xff] %vm3090, %v3037
      %3113 = vst.msk [vmem:[#allocation4 + $0xb0] sm:$0xff] %vm3090, %v3039
      %3114 = vst.msk [vmem:[#allocation4 + $0xb8] sm:$0xff] %vm3090, %v3041
      %3115 = vst.msk [vmem:[#allocation4 + $0xc0] sm:$0xff] %vm3090, %v3043
      %3116 = vst.msk [vmem:[#allocation4 + $0xc8] sm:$0xff] %vm3090, %v3045
      %3117 = vst.msk [vmem:[#allocation4 + $0xd0] sm:$0xff] %vm3090, %v3047
      %3118 = vst.msk [vmem:[#allocation4 + $0xd8] sm:$0xff] %vm3090, %v3049
      %3119 = vst.msk [vmem:[#allocation4 + $0xe0] sm:$0xff] %vm3090, %v3051
      %3120 = vst.msk [vmem:[#allocation4 + $0xe8] sm:$0xff] %vm3090, %v3053
      %3121 = vst.msk [vmem:[#allocation4 + $0xf0] sm:$0xff] %vm3090, %v3055
      %3122 = vst.msk [vmem:[#allocation4 + $0xf8] sm:$0xff] %vm3090, %v3057
      %v3123 = vrot.slane %v2353, 2
      %v3124 = vrot.slane %v2354, 2
      %v3125 = vsel %vm516, %v3123, %v3124
      %v3126 = vrot.slane %v2355, 2
      %v3127 = vsel %vm516, %v3124, %v3126
      %3128 = vrot.lane.b32.xlu0 %v2655, 40
      %v3129 = vpop.permute.xlu0 %3128
      %3130 = vrot.lane.b32.xlu0 %v2657, 40
      %v3131 = vpop.permute.xlu0 %3130
      %3132 = vrot.lane.b32.xlu0 %v2660, 40
      %v3133 = vpop.permute.xlu0 %3132
      %3134 = vrot.lane.b32.xlu0 %v2662, 40
      %v3135 = vpop.permute.xlu0 %3134
      %3136 = vrot.lane.b32.xlu0 %v2665, 40
      %v3137 = vpop.permute.xlu0 %3136
      %3138 = vrot.lane.b32.xlu0 %v2667, 40
      %v3139 = vpop.permute.xlu0 %3138
      %3140 = vrot.lane.b32.xlu0 %v2670, 40
      %v3141 = vpop.permute.xlu0 %3140
      %3142 = vrot.lane.b32.xlu0 %v2672, 40
      %v3143 = vpop.permute.xlu0 %3142
      %3144 = vrot.lane.b32.xlu0 %v2675, 40
      %v3145 = vpop.permute.xlu0 %3144
      %3146 = vrot.lane.b32.xlu0 %v2677, 40
      %v3147 = vpop.permute.xlu0 %3146
      %3148 = vrot.lane.b32.xlu0 %v2680, 40
      %v3149 = vpop.permute.xlu0 %3148
      %3150 = vrot.lane.b32.xlu0 %v2682, 40
      %v3151 = vpop.permute.xlu0 %3150
      %3152 = vrot.lane.b32.xlu0 %v2685, 40
      %v3153 = vpop.permute.xlu0 %3152
      %3154 = vrot.lane.b32.xlu0 %v2687, 40
      %v3155 = vpop.permute.xlu0 %3154
      %3156 = vrot.lane.b32.xlu0 %v2690, 40
      %v3157 = vpop.permute.xlu0 %3156
      %3158 = vrot.lane.b32.xlu0 %v2692, 40
      %v3159 = vpop.permute.xlu0 %3158
      %3160 = vrot.lane.b32.xlu0 %v2695, 40
      %v3161 = vpop.permute.xlu0 %3160
      %3162 = vrot.lane.b32.xlu0 %v2697, 40
      %v3163 = vpop.permute.xlu0 %3162
      %3164 = vrot.lane.b32.xlu0 %v2700, 40
      %v3165 = vpop.permute.xlu0 %3164
      %3166 = vrot.lane.b32.xlu0 %v2702, 40
      %v3167 = vpop.permute.xlu0 %3166
      %3168 = vrot.lane.b32.xlu0 %v2705, 40
      %v3169 = vpop.permute.xlu0 %3168
      %3170 = vrot.lane.b32.xlu0 %v2707, 40
      %v3171 = vpop.permute.xlu0 %3170
      %3172 = vrot.lane.b32.xlu0 %v2710, 40
      %v3173 = vpop.permute.xlu0 %3172
      %3174 = vrot.lane.b32.xlu0 %v2712, 40
      %v3175 = vpop.permute.xlu0 %3174
      %3176 = vrot.lane.b32.xlu0 %v2715, 40
      %v3177 = vpop.permute.xlu0 %3176
      %3178 = vrot.lane.b32.xlu0 %v2717, 40
      %v3179 = vpop.permute.xlu0 %3178
      %3180 = vrot.lane.b32.xlu0 %v2720, 40
      %v3181 = vpop.permute.xlu0 %3180
      %3182 = vrot.lane.b32.xlu0 %v2722, 40
      %v3183 = vpop.permute.xlu0 %3182
      %3184 = vrot.lane.b32.xlu0 %v2725, 40
      %v3185 = vpop.permute.xlu0 %3184
      %3186 = vrot.lane.b32.xlu0 %v2727, 40
      %v3187 = vpop.permute.xlu0 %3186
      %3188 = vrot.lane.b32.xlu0 %v3125, 40
      %v3189 = vpop.permute.xlu0 %3188
      %3190 = vrot.lane.b32.xlu0 %v3127, 40
      %v3191 = vpop.permute.xlu0 %3190
      %vm3224 = vcmask 392512
      %3225 = vst.msk [vmem:[#allocation4] sm:$0xff] %vm3224, %v3129
      %3226 = vst.msk [vmem:[#allocation4 + $0x8] sm:$0xff] %vm3224, %v3131
      %3227 = vst.msk [vmem:[#allocation4 + $0x10] sm:$0xff] %vm3224, %v3133
      %3228 = vst.msk [vmem:[#allocation4 + $0x18] sm:$0xff] %vm3224, %v3135
      %3229 = vst.msk [vmem:[#allocation4 + $0x20] sm:$0xff] %vm3224, %v3137
      %3230 = vst.msk [vmem:[#allocation4 + $0x28] sm:$0xff] %vm3224, %v3139
      %3231 = vst.msk [vmem:[#allocation4 + $0x30] sm:$0xff] %vm3224, %v3141
      %3232 = vst.msk [vmem:[#allocation4 + $0x38] sm:$0xff] %vm3224, %v3143
      %3233 = vst.msk [vmem:[#allocation4 + $0x40] sm:$0xff] %vm3224, %v3145
      %3234 = vst.msk [vmem:[#allocation4 + $0x48] sm:$0xff] %vm3224, %v3147
      %3235 = vst.msk [vmem:[#allocation4 + $0x50] sm:$0xff] %vm3224, %v3149
      %3236 = vst.msk [vmem:[#allocation4 + $0x58] sm:$0xff] %vm3224, %v3151
      %3237 = vst.msk [vmem:[#allocation4 + $0x60] sm:$0xff] %vm3224, %v3153
      %3238 = vst.msk [vmem:[#allocation4 + $0x68] sm:$0xff] %vm3224, %v3155
      %3239 = vst.msk [vmem:[#allocation4 + $0x70] sm:$0xff] %vm3224, %v3157
      %3240 = vst.msk [vmem:[#allocation4 + $0x78] sm:$0xff] %vm3224, %v3159
      %3241 = vst.msk [vmem:[#allocation4 + $0x80] sm:$0xff] %vm3224, %v3161
      %3242 = vst.msk [vmem:[#allocation4 + $0x88] sm:$0xff] %vm3224, %v3163
      %3243 = vst.msk [vmem:[#allocation4 + $0x90] sm:$0xff] %vm3224, %v3165
      %3244 = vst.msk [vmem:[#allocation4 + $0x98] sm:$0xff] %vm3224, %v3167
      %3245 = vst.msk [vmem:[#allocation4 + $0xa0] sm:$0xff] %vm3224, %v3169
      %3246 = vst.msk [vmem:[#allocation4 + $0xa8] sm:$0xff] %vm3224, %v3171
      %3247 = vst.msk [vmem:[#allocation4 + $0xb0] sm:$0xff] %vm3224, %v3173
      %3248 = vst.msk [vmem:[#allocation4 + $0xb8] sm:$0xff] %vm3224, %v3175
      %3249 = vst.msk [vmem:[#allocation4 + $0xc0] sm:$0xff] %vm3224, %v3177
      %3250 = vst.msk [vmem:[#allocation4 + $0xc8] sm:$0xff] %vm3224, %v3179
      %3251 = vst.msk [vmem:[#allocation4 + $0xd0] sm:$0xff] %vm3224, %v3181
      %3252 = vst.msk [vmem:[#allocation4 + $0xd8] sm:$0xff] %vm3224, %v3183
      %3253 = vst.msk [vmem:[#allocation4 + $0xe0] sm:$0xff] %vm3224, %v3185
      %3254 = vst.msk [vmem:[#allocation4 + $0xe8] sm:$0xff] %vm3224, %v3187
      %3255 = vst.msk [vmem:[#allocation4 + $0xf0] sm:$0xff] %vm3224, %v3189
      %3256 = vst.msk [vmem:[#allocation4 + $0xf8] sm:$0xff] %vm3224, %v3191
      %3259 = vrot.lane.b32.xlu0 %v2311, 48
      %v3260 = vpop.permute.xlu0 %3259
      %3261 = vrot.lane.b32.xlu0 %v2312, 48
      %v3262 = vpop.permute.xlu0 %3261
      %3263 = vrot.lane.b32.xlu0 %v2314, 48
      %v3264 = vpop.permute.xlu0 %3263
      %3265 = vrot.lane.b32.xlu0 %v2315, 48
      %v3266 = vpop.permute.xlu0 %3265
      %3267 = vrot.lane.b32.xlu0 %v2317, 48
      %v3268 = vpop.permute.xlu0 %3267
      %3269 = vrot.lane.b32.xlu0 %v2318, 48
      %v3270 = vpop.permute.xlu0 %3269
      %3271 = vrot.lane.b32.xlu0 %v2320, 48
      %v3272 = vpop.permute.xlu0 %3271
      %3273 = vrot.lane.b32.xlu0 %v2321, 48
      %v3274 = vpop.permute.xlu0 %3273
      %3275 = vrot.lane.b32.xlu0 %v2323, 48
      %v3276 = vpop.permute.xlu0 %3275
      %3277 = vrot.lane.b32.xlu0 %v2324, 48
      %v3278 = vpop.permute.xlu0 %3277
      %3279 = vrot.lane.b32.xlu0 %v2326, 48
      %v3280 = vpop.permute.xlu0 %3279
      %3281 = vrot.lane.b32.xlu0 %v2327, 48
      %v3282 = vpop.permute.xlu0 %3281
      %3283 = vrot.lane.b32.xlu0 %v2329, 48
      %v3284 = vpop.permute.xlu0 %3283
      %3285 = vrot.lane.b32.xlu0 %v2330, 48
      %v3286 = vpop.permute.xlu0 %3285
      %3287 = vrot.lane.b32.xlu0 %v2332, 48
      %v3288 = vpop.permute.xlu0 %3287
      %3289 = vrot.lane.b32.xlu0 %v2333, 48
      %v3290 = vpop.permute.xlu0 %3289
      %3291 = vrot.lane.b32.xlu0 %v2335, 48
      %v3292 = vpop.permute.xlu0 %3291
      %3293 = vrot.lane.b32.xlu0 %v2336, 48
      %v3294 = vpop.permute.xlu0 %3293
      %3295 = vrot.lane.b32.xlu0 %v2338, 48
      %v3296 = vpop.permute.xlu0 %3295
      %3297 = vrot.lane.b32.xlu0 %v2339, 48
      %v3298 = vpop.permute.xlu0 %3297
      %3299 = vrot.lane.b32.xlu0 %v2341, 48
      %v3300 = vpop.permute.xlu0 %3299
      %3301 = vrot.lane.b32.xlu0 %v2342, 48
      %v3302 = vpop.permute.xlu0 %3301
      %3303 = vrot.lane.b32.xlu0 %v2344, 48
      %v3304 = vpop.permute.xlu0 %3303
      %3305 = vrot.lane.b32.xlu0 %v2345, 48
      %v3306 = vpop.permute.xlu0 %3305
      %3307 = vrot.lane.b32.xlu0 %v2347, 48
      %v3308 = vpop.permute.xlu0 %3307
      %3309 = vrot.lane.b32.xlu0 %v2348, 48
      %v3310 = vpop.permute.xlu0 %3309
      %3311 = vrot.lane.b32.xlu0 %v2350, 48
      %v3312 = vpop.permute.xlu0 %3311
      %3313 = vrot.lane.b32.xlu0 %v2351, 48
      %v3314 = vpop.permute.xlu0 %3313
      %3315 = vrot.lane.b32.xlu0 %v2353, 48
      %v3316 = vpop.permute.xlu0 %3315
      %3317 = vrot.lane.b32.xlu0 %v2354, 48
      %v3318 = vpop.permute.xlu0 %3317
      %3319 = vrot.lane.b32.xlu0 %v2356, 48
      %v3320 = vpop.permute.xlu0 %3319
      %3321 = vrot.lane.b32.xlu0 %v2357, 48
      %v3322 = vpop.permute.xlu0 %3321
      %vm3355 = vcmask 458112
      %3356 = vst.msk [vmem:[#allocation4] sm:$0xff] %vm3355, %v3260
      %3357 = vst.msk [vmem:[#allocation4 + $0x8] sm:$0xff] %vm3355, %v3262
      %3358 = vst.msk [vmem:[#allocation4 + $0x10] sm:$0xff] %vm3355, %v3264
      %3359 = vst.msk [vmem:[#allocation4 + $0x18] sm:$0xff] %vm3355, %v3266
      %3360 = vst.msk [vmem:[#allocation4 + $0x20] sm:$0xff] %vm3355, %v3268
      %3361 = vst.msk [vmem:[#allocation4 + $0x28] sm:$0xff] %vm3355, %v3270
      %3362 = vst.msk [vmem:[#allocation4 + $0x30] sm:$0xff] %vm3355, %v3272
      %3363 = vst.msk [vmem:[#allocation4 + $0x38] sm:$0xff] %vm3355, %v3274
      %3364 = vst.msk [vmem:[#allocation4 + $0x40] sm:$0xff] %vm3355, %v3276
      %3365 = vst.msk [vmem:[#allocation4 + $0x48] sm:$0xff] %vm3355, %v3278
      %3366 = vst.msk [vmem:[#allocation4 + $0x50] sm:$0xff] %vm3355, %v3280
      %3367 = vst.msk [vmem:[#allocation4 + $0x58] sm:$0xff] %vm3355, %v3282
      %3368 = vst.msk [vmem:[#allocation4 + $0x60] sm:$0xff] %vm3355, %v3284
      %3369 = vst.msk [vmem:[#allocation4 + $0x68] sm:$0xff] %vm3355, %v3286
      %3370 = vst.msk [vmem:[#allocation4 + $0x70] sm:$0xff] %vm3355, %v3288
      %3371 = vst.msk [vmem:[#allocation4 + $0x78] sm:$0xff] %vm3355, %v3290
      %3372 = vst.msk [vmem:[#allocation4 + $0x80] sm:$0xff] %vm3355, %v3292
      %3373 = vst.msk [vmem:[#allocation4 + $0x88] sm:$0xff] %vm3355, %v3294
      %3374 = vst.msk [vmem:[#allocation4 + $0x90] sm:$0xff] %vm3355, %v3296
      %3375 = vst.msk [vmem:[#allocation4 + $0x98] sm:$0xff] %vm3355, %v3298
      %3376 = vst.msk [vmem:[#allocation4 + $0xa0] sm:$0xff] %vm3355, %v3300
      %3377 = vst.msk [vmem:[#allocation4 + $0xa8] sm:$0xff] %vm3355, %v3302
      %3378 = vst.msk [vmem:[#allocation4 + $0xb0] sm:$0xff] %vm3355, %v3304
      %3379 = vst.msk [vmem:[#allocation4 + $0xb8] sm:$0xff] %vm3355, %v3306
      %3380 = vst.msk [vmem:[#allocation4 + $0xc0] sm:$0xff] %vm3355, %v3308
      %3381 = vst.msk [vmem:[#allocation4 + $0xc8] sm:$0xff] %vm3355, %v3310
      %3382 = vst.msk [vmem:[#allocation4 + $0xd0] sm:$0xff] %vm3355, %v3312
      %3383 = vst.msk [vmem:[#allocation4 + $0xd8] sm:$0xff] %vm3355, %v3314
      %3384 = vst.msk [vmem:[#allocation4 + $0xe0] sm:$0xff] %vm3355, %v3316
      %3385 = vst.msk [vmem:[#allocation4 + $0xe8] sm:$0xff] %vm3355, %v3318
      %3386 = vst.msk [vmem:[#allocation4 + $0xf0] sm:$0xff] %vm3355, %v3320
      %3387 = vst.msk [vmem:[#allocation4 + $0xf8] sm:$0xff] %vm3355, %v3322
      %v3389 = vrot.slane %v2356, 1
      %v3390 = vrot.slane %v2357, 1
      %v3391 = vsel %vm306, %v3389, %v3390
      %v3392 = vrot.slane %v2358, 1
      %v3393 = vsel %vm306, %v3390, %v3392
      %3394 = vrot.lane.b32.xlu0 %v2451, 56
      %v3395 = vpop.permute.xlu0 %3394
      %3396 = vrot.lane.b32.xlu0 %v2453, 56
      %v3397 = vpop.permute.xlu0 %3396
      %3398 = vrot.lane.b32.xlu0 %v2456, 56
      %v3399 = vpop.permute.xlu0 %3398
      %3400 = vrot.lane.b32.xlu0 %v2458, 56
      %v3401 = vpop.permute.xlu0 %3400
      %3402 = vrot.lane.b32.xlu0 %v2461, 56
      %v3403 = vpop.permute.xlu0 %3402
      %3404 = vrot.lane.b32.xlu0 %v2463, 56
      %v3405 = vpop.permute.xlu0 %3404
      %3406 = vrot.lane.b32.xlu0 %v2466, 56
      %v3407 = vpop.permute.xlu0 %3406
      %3408 = vrot.lane.b32.xlu0 %v2468, 56
      %v3409 = vpop.permute.xlu0 %3408
      %3410 = vrot.lane.b32.xlu0 %v2471, 56
      %v3411 = vpop.permute.xlu0 %3410
      %3412 = vrot.lane.b32.xlu0 %v2473, 56
      %v3413 = vpop.permute.xlu0 %3412
      %3414 = vrot.lane.b32.xlu0 %v2476, 56
      %v3415 = vpop.permute.xlu0 %3414
      %3416 = vrot.lane.b32.xlu0 %v2478, 56
      %v3417 = vpop.permute.xlu0 %3416
      %3418 = vrot.lane.b32.xlu0 %v2481, 56
      %v3419 = vpop.permute.xlu0 %3418
      %3420 = vrot.lane.b32.xlu0 %v2483, 56
      %v3421 = vpop.permute.xlu0 %3420
      %3422 = vrot.lane.b32.xlu0 %v2486, 56
      %v3423 = vpop.permute.xlu0 %3422
      %3424 = vrot.lane.b32.xlu0 %v2488, 56
      %v3425 = vpop.permute.xlu0 %3424
      %3426 = vrot.lane.b32.xlu0 %v2491, 56
      %v3427 = vpop.permute.xlu0 %3426
      %3428 = vrot.lane.b32.xlu0 %v2493, 56
      %v3429 = vpop.permute.xlu0 %3428
      %3430 = vrot.lane.b32.xlu0 %v2496, 56
      %v3431 = vpop.permute.xlu0 %3430
      %3432 = vrot.lane.b32.xlu0 %v2498, 56
      %v3433 = vpop.permute.xlu0 %3432
      %3434 = vrot.lane.b32.xlu0 %v2501, 56
      %v3435 = vpop.permute.xlu0 %3434
      %3436 = vrot.lane.b32.xlu0 %v2503, 56
      %v3437 = vpop.permute.xlu0 %3436
      %3438 = vrot.lane.b32.xlu0 %v2506, 56
      %v3439 = vpop.permute.xlu0 %3438
      %3440 = vrot.lane.b32.xlu0 %v2508, 56
      %v3441 = vpop.permute.xlu0 %3440
      %3442 = vrot.lane.b32.xlu0 %v2511, 56
      %v3443 = vpop.permute.xlu0 %3442
      %3444 = vrot.lane.b32.xlu0 %v2513, 56
      %v3445 = vpop.permute.xlu0 %3444
      %3446 = vrot.lane.b32.xlu0 %v2516, 56
      %v3447 = vpop.permute.xlu0 %3446
      %3448 = vrot.lane.b32.xlu0 %v2518, 56
      %v3449 = vpop.permute.xlu0 %3448
      %3450 = vrot.lane.b32.xlu0 %v2991, 56
      %v3451 = vpop.permute.xlu0 %3450
      %3452 = vrot.lane.b32.xlu0 %v2993, 56
      %v3453 = vpop.permute.xlu0 %3452
      %3454 = vrot.lane.b32.xlu0 %v3391, 56
      %v3455 = vpop.permute.xlu0 %3454
      %3456 = vrot.lane.b32.xlu0 %v3393, 56
      %v3457 = vpop.permute.xlu0 %3456
      %vm3490 = vcmask 523712
      %3491 = vst.msk [vmem:[#allocation4] sm:$0xff] %vm3490, %v3395
      %3492 = vst.msk [vmem:[#allocation4 + $0x8] sm:$0xff] %vm3490, %v3397
      %3493 = vst.msk [vmem:[#allocation4 + $0x10] sm:$0xff] %vm3490, %v3399
      %3494 = vst.msk [vmem:[#allocation4 + $0x18] sm:$0xff] %vm3490, %v3401
      %3495 = vst.msk [vmem:[#allocation4 + $0x20] sm:$0xff] %vm3490, %v3403
      %3496 = vst.msk [vmem:[#allocation4 + $0x28] sm:$0xff] %vm3490, %v3405
      %3497 = vst.msk [vmem:[#allocation4 + $0x30] sm:$0xff] %vm3490, %v3407
      %3498 = vst.msk [vmem:[#allocation4 + $0x38] sm:$0xff] %vm3490, %v3409
      %3499 = vst.msk [vmem:[#allocation4 + $0x40] sm:$0xff] %vm3490, %v3411
      %3500 = vst.msk [vmem:[#allocation4 + $0x48] sm:$0xff] %vm3490, %v3413
      %3501 = vst.msk [vmem:[#allocation4 + $0x50] sm:$0xff] %vm3490, %v3415
      %3502 = vst.msk [vmem:[#allocation4 + $0x58] sm:$0xff] %vm3490, %v3417
      %3503 = vst.msk [vmem:[#allocation4 + $0x60] sm:$0xff] %vm3490, %v3419
      %3504 = vst.msk [vmem:[#allocation4 + $0x68] sm:$0xff] %vm3490, %v3421
      %3505 = vst.msk [vmem:[#allocation4 + $0x70] sm:$0xff] %vm3490, %v3423
      %3506 = vst.msk [vmem:[#allocation4 + $0x78] sm:$0xff] %vm3490, %v3425
      %3507 = vst.msk [vmem:[#allocation4 + $0x80] sm:$0xff] %vm3490, %v3427
      %3508 = vst.msk [vmem:[#allocation4 + $0x88] sm:$0xff] %vm3490, %v3429
      %3509 = vst.msk [vmem:[#allocation4 + $0x90] sm:$0xff] %vm3490, %v3431
      %3510 = vst.msk [vmem:[#allocation4 + $0x98] sm:$0xff] %vm3490, %v3433
      %3511 = vst.msk [vmem:[#allocation4 + $0xa0] sm:$0xff] %vm3490, %v3435
      %3512 = vst.msk [vmem:[#allocation4 + $0xa8] sm:$0xff] %vm3490, %v3437
      %3513 = vst.msk [vmem:[#allocation4 + $0xb0] sm:$0xff] %vm3490, %v3439
      %3514 = vst.msk [vmem:[#allocation4 + $0xb8] sm:$0xff] %vm3490, %v3441
      %3515 = vst.msk [vmem:[#allocation4 + $0xc0] sm:$0xff] %vm3490, %v3443
      %3516 = vst.msk [vmem:[#allocation4 + $0xc8] sm:$0xff] %vm3490, %v3445
      %3517 = vst.msk [vmem:[#allocation4 + $0xd0] sm:$0xff] %vm3490, %v3447
      %3518 = vst.msk [vmem:[#allocation4 + $0xd8] sm:$0xff] %vm3490, %v3449
      %3519 = vst.msk [vmem:[#allocation4 + $0xe0] sm:$0xff] %vm3490, %v3451
      %3520 = vst.msk [vmem:[#allocation4 + $0xe8] sm:$0xff] %vm3490, %v3453
      %3521 = vst.msk [vmem:[#allocation4 + $0xf0] sm:$0xff] %vm3490, %v3455
      %3522 = vst.msk [vmem:[#allocation4 + $0xf8] sm:$0xff] %vm3490, %v3457
      %v3523 = vrot.slane %v2356, 2
      %v3524 = vrot.slane %v2357, 2
      %v3525 = vsel %vm516, %v3523, %v3524
      %v3526 = vrot.slane %v2358, 2
      %v3527 = vsel %vm516, %v3524, %v3526
      %3528 = vrot.lane.b32.xlu0 %v2660, 64
      %v3529 = vpop.permute.xlu0 %3528
      %3530 = vrot.lane.b32.xlu0 %v2662, 64
      %v3531 = vpop.permute.xlu0 %3530
      %3532 = vrot.lane.b32.xlu0 %v2665, 64
      %v3533 = vpop.permute.xlu0 %3532
      %3534 = vrot.lane.b32.xlu0 %v2667, 64
      %v3535 = vpop.permute.xlu0 %3534
      %3536 = vrot.lane.b32.xlu0 %v2670, 64
      %v3537 = vpop.permute.xlu0 %3536
      %3538 = vrot.lane.b32.xlu0 %v2672, 64
      %v3539 = vpop.permute.xlu0 %3538
      %3540 = vrot.lane.b32.xlu0 %v2675, 64
      %v3541 = vpop.permute.xlu0 %3540
      %3542 = vrot.lane.b32.xlu0 %v2677, 64
      %v3543 = vpop.permute.xlu0 %3542
      %3544 = vrot.lane.b32.xlu0 %v2680, 64
      %v3545 = vpop.permute.xlu0 %3544
      %3546 = vrot.lane.b32.xlu0 %v2682, 64
      %v3547 = vpop.permute.xlu0 %3546
      %3548 = vrot.lane.b32.xlu0 %v2685, 64
      %v3549 = vpop.permute.xlu0 %3548
      %3550 = vrot.lane.b32.xlu0 %v2687, 64
      %v3551 = vpop.permute.xlu0 %3550
      %3552 = vrot.lane.b32.xlu0 %v2690, 64
      %v3553 = vpop.permute.xlu0 %3552
      %3554 = vrot.lane.b32.xlu0 %v2692, 64
      %v3555 = vpop.permute.xlu0 %3554
      %3556 = vrot.lane.b32.xlu0 %v2695, 64
      %v3557 = vpop.permute.xlu0 %3556
      %3558 = vrot.lane.b32.xlu0 %v2697, 64
      %v3559 = vpop.permute.xlu0 %3558
      %3560 = vrot.lane.b32.xlu0 %v2700, 64
      %v3561 = vpop.permute.xlu0 %3560
      %3562 = vrot.lane.b32.xlu0 %v2702, 64
      %v3563 = vpop.permute.xlu0 %3562
      %3564 = vrot.lane.b32.xlu0 %v2705, 64
      %v3565 = vpop.permute.xlu0 %3564
      %3566 = vrot.lane.b32.xlu0 %v2707, 64
      %v3567 = vpop.permute.xlu0 %3566
      %3568 = vrot.lane.b32.xlu0 %v2710, 64
      %v3569 = vpop.permute.xlu0 %3568
      %3570 = vrot.lane.b32.xlu0 %v2712, 64
      %v3571 = vpop.permute.xlu0 %3570
      %3572 = vrot.lane.b32.xlu0 %v2715, 64
      %v3573 = vpop.permute.xlu0 %3572
      %3574 = vrot.lane.b32.xlu0 %v2717, 64
      %v3575 = vpop.permute.xlu0 %3574
      %3576 = vrot.lane.b32.xlu0 %v2720, 64
      %v3577 = vpop.permute.xlu0 %3576
      %3578 = vrot.lane.b32.xlu0 %v2722, 64
      %v3579 = vpop.permute.xlu0 %3578
      %3580 = vrot.lane.b32.xlu0 %v2725, 64
      %v3581 = vpop.permute.xlu0 %3580
      %3582 = vrot.lane.b32.xlu0 %v2727, 64
      %v3583 = vpop.permute.xlu0 %3582
      %3584 = vrot.lane.b32.xlu0 %v3125, 64
      %v3585 = vpop.permute.xlu0 %3584
      %3586 = vrot.lane.b32.xlu0 %v3127, 64
      %v3587 = vpop.permute.xlu0 %3586
      %3588 = vrot.lane.b32.xlu0 %v3525, 64
      %v3589 = vpop.permute.xlu0 %3588
      %3590 = vrot.lane.b32.xlu0 %v3527, 64
      %v3591 = vpop.permute.xlu0 %3590
      %vm3624 = vcmask 589312
      %3625 = vst.msk [vmem:[#allocation4] sm:$0xff] %vm3624, %v3529
      %3626 = vst.msk [vmem:[#allocation4 + $0x8] sm:$0xff] %vm3624, %v3531
      %3627 = vst.msk [vmem:[#allocation4 + $0x10] sm:$0xff] %vm3624, %v3533
      %3628 = vst.msk [vmem:[#allocation4 + $0x18] sm:$0xff] %vm3624, %v3535
      %3629 = vst.msk [vmem:[#allocation4 + $0x20] sm:$0xff] %vm3624, %v3537
      %3630 = vst.msk [vmem:[#allocation4 + $0x28] sm:$0xff] %vm3624, %v3539
      %3631 = vst.msk [vmem:[#allocation4 + $0x30] sm:$0xff] %vm3624, %v3541
      %3632 = vst.msk [vmem:[#allocation4 + $0x38] sm:$0xff] %vm3624, %v3543
      %3633 = vst.msk [vmem:[#allocation4 + $0x40] sm:$0xff] %vm3624, %v3545
      %3634 = vst.msk [vmem:[#allocation4 + $0x48] sm:$0xff] %vm3624, %v3547
      %3635 = vst.msk [vmem:[#allocation4 + $0x50] sm:$0xff] %vm3624, %v3549
      %3636 = vst.msk [vmem:[#allocation4 + $0x58] sm:$0xff] %vm3624, %v3551
      %3637 = vst.msk [vmem:[#allocation4 + $0x60] sm:$0xff] %vm3624, %v3553
      %3638 = vst.msk [vmem:[#allocation4 + $0x68] sm:$0xff] %vm3624, %v3555
      %3639 = vst.msk [vmem:[#allocation4 + $0x70] sm:$0xff] %vm3624, %v3557
      %3640 = vst.msk [vmem:[#allocation4 + $0x78] sm:$0xff] %vm3624, %v3559
      %3641 = vst.msk [vmem:[#allocation4 + $0x80] sm:$0xff] %vm3624, %v3561
      %3642 = vst.msk [vmem:[#allocation4 + $0x88] sm:$0xff] %vm3624, %v3563
      %3643 = vst.msk [vmem:[#allocation4 + $0x90] sm:$0xff] %vm3624, %v3565
      %3644 = vst.msk [vmem:[#allocation4 + $0x98] sm:$0xff] %vm3624, %v3567
      %3645 = vst.msk [vmem:[#allocation4 + $0xa0] sm:$0xff] %vm3624, %v3569
      %3646 = vst.msk [vmem:[#allocation4 + $0xa8] sm:$0xff] %vm3624, %v3571
      %3647 = vst.msk [vmem:[#allocation4 + $0xb0] sm:$0xff] %vm3624, %v3573
      %3648 = vst.msk [vmem:[#allocation4 + $0xb8] sm:$0xff] %vm3624, %v3575
      %3649 = vst.msk [vmem:[#allocation4 + $0xc0] sm:$0xff] %vm3624, %v3577
      %3650 = vst.msk [vmem:[#allocation4 + $0xc8] sm:$0xff] %vm3624, %v3579
      %3651 = vst.msk [vmem:[#allocation4 + $0xd0] sm:$0xff] %vm3624, %v3581
      %3652 = vst.msk [vmem:[#allocation4 + $0xd8] sm:$0xff] %vm3624, %v3583
      %3653 = vst.msk [vmem:[#allocation4 + $0xe0] sm:$0xff] %vm3624, %v3585
      %3654 = vst.msk [vmem:[#allocation4 + $0xe8] sm:$0xff] %vm3624, %v3587
      %3655 = vst.msk [vmem:[#allocation4 + $0xf0] sm:$0xff] %vm3624, %v3589
      %3656 = vst.msk [vmem:[#allocation4 + $0xf8] sm:$0xff] %vm3624, %v3591
      %v3657 = vld [vmem:[#allocation4] sm:$0xff]
      %v3658 = vld [vmem:[#allocation4 + $0x8] sm:$0xff]
      %v3659 = vld [vmem:[#allocation4 + $0x10] sm:$0xff]
      %v3660 = vld [vmem:[#allocation4 + $0x18] sm:$0xff]
      %v3661 = vld [vmem:[#allocation4 + $0x20] sm:$0xff]
      %v3662 = vld [vmem:[#allocation4 + $0x28] sm:$0xff]
      %v3663 = vld [vmem:[#allocation4 + $0x30] sm:$0xff]
      %v3664 = vld [vmem:[#allocation4 + $0x38] sm:$0xff]
      %v3665 = vld [vmem:[#allocation4 + $0x40] sm:$0xff]
      %v3666 = vld [vmem:[#allocation4 + $0x48] sm:$0xff]
      %v3667 = vld [vmem:[#allocation4 + $0x50] sm:$0xff]
      %v3668 = vld [vmem:[#allocation4 + $0x58] sm:$0xff]
      %v3669 = vld [vmem:[#allocation4 + $0x60] sm:$0xff]
      %v3670 = vld [vmem:[#allocation4 + $0x68] sm:$0xff]
      %v3671 = vld [vmem:[#allocation4 + $0x70] sm:$0xff]
      %v3672 = vld [vmem:[#allocation4 + $0x78] sm:$0xff]
      %v3673 = vld [vmem:[#allocation4 + $0x80] sm:$0xff]
      %v3674 = vld [vmem:[#allocation4 + $0x88] sm:$0xff]
      %v3675 = vld [vmem:[#allocation4 + $0x90] sm:$0xff]
      %v3676 = vld [vmem:[#allocation4 + $0x98] sm:$0xff]
      %v3677 = vld [vmem:[#allocation4 + $0xa0] sm:$0xff]
      %v3678 = vld [vmem:[#allocation4 + $0xa8] sm:$0xff]
      %v3679 = vld [vmem:[#allocation4 + $0xb0] sm:$0xff]
      %v3680 = vld [vmem:[#allocation4 + $0xb8] sm:$0xff]
      %v3681 = vld [vmem:[#allocation4 + $0xc0] sm:$0xff]
      %v3682 = vld [vmem:[#allocation4 + $0xc8] sm:$0xff]
      %v3683 = vld [vmem:[#allocation4 + $0xd0] sm:$0xff]
      %v3684 = vld [vmem:[#allocation4 + $0xd8] sm:$0xff]
      %v3685 = vld [vmem:[#allocation4 + $0xe0] sm:$0xff]
      %v3686 = vld [vmem:[#allocation4 + $0xe8] sm:$0xff]
      %v3687 = vld [vmem:[#allocation4 + $0xf0] sm:$0xff]
      %v3688 = vld [vmem:[#allocation4 + $0xf8] sm:$0xff]
      %v3689 = vld [vmem:[%s2] sm:$0xff]
      %v3690 = vld [vmem:[%s2 + $0x8] sm:$0xff]
      %v3691 = vld [vmem:[%s2 + $0x10] sm:$0xff]
      %v3692 = vld [vmem:[%s2 + $0x18] sm:$0xff]
      %v3693 = vld [vmem:[%s2 + $0x20] sm:$0xff]
      %v3694 = vld [vmem:[%s2 + $0x28] sm:$0xff]
      %v3695 = vld [vmem:[%s2 + $0x30] sm:$0xff]
      %v3696 = vld [vmem:[%s2 + $0x38] sm:$0xff]
      %v3697 = vld [vmem:[%s2 + $0x40] sm:$0xff]
      %vm3698 = vcmask 588800
      %v3700 = vsel %vm3698, %v3657, 0
      %v3703 = vsel %vm3698, %v3658, 0
      %v3706 = vsel %vm3698, %v3659, 0
      %v3709 = vsel %vm3698, %v3660, 0
      %v3712 = vsel %vm3698, %v3661, 0
      %v3715 = vsel %vm3698, %v3662, 0
      %v3718 = vsel %vm3698, %v3663, 0
      %v3721 = vsel %vm3698, %v3664, 0
      %v3724 = vsel %vm3698, %v3665, 0
      %v3727 = vsel %vm3698, %v3666, 0
      %v3730 = vsel %vm3698, %v3667, 0
      %v3733 = vsel %vm3698, %v3668, 0
      %v3736 = vsel %vm3698, %v3669, 0
      %v3739 = vsel %vm3698, %v3670, 0
      %v3742 = vsel %vm3698, %v3671, 0
      %v3745 = vsel %vm3698, %v3672, 0
      %v3748 = vsel %vm3698, %v3673, 0
      %v3751 = vsel %vm3698, %v3674, 0
      %v3754 = vsel %vm3698, %v3675, 0
      %v3757 = vsel %vm3698, %v3676, 0
      %v3760 = vsel %vm3698, %v3677, 0
      %v3763 = vsel %vm3698, %v3678, 0
      %v3766 = vsel %vm3698, %v3679, 0
      %v3769 = vsel %vm3698, %v3680, 0
      %v3772 = vsel %vm3698, %v3681, 0
      %v3775 = vsel %vm3698, %v3682, 0
      %v3778 = vsel %vm3698, %v3683, 0
      %v3781 = vsel %vm3698, %v3684, 0
      %v3784 = vsel %vm3698, %v3685, 0
      %v3787 = vsel %vm3698, %v3686, 0
      %v3790 = vsel %vm3698, %v3687, 0
      %v3793 = vsel %vm3698, %v3688, 0
      %3795 = vmatprep.subr.mxu0 0.0
      %3796 = vmatpush1.msra.mxu0 0.0
      %3797 = vmatprep.subr.mxu0 0.0
      %3798 = vmatpush1.msra.mxu0 0.0
      %3799 = vmatprep.subr.mxu0 0.0
      %3800 = vmatpush1.msra.mxu0 0.0
      %3801 = vmatprep.subr.mxu0 0.0
      %3802 = vmatpush1.msra.mxu0 0.0
      %3803 = vmatprep.subr.mxu0 0.0
      %3804 = vmatpush1.msra.mxu0 0.0
      %3805 = vmatprep.subr.mxu0 0.0
      %3806 = vmatpush1.msra.mxu0 0.0
      %3807 = vmatprep.subr.mxu0 0.0
      %3808 = vmatpush1.msra.mxu0 0.0
      %3809 = vmatprep.subr.mxu0 0.0
      %3810 = vmatpush1.msra.mxu0 %v3697
      %3811 = vmatprep.subr.mxu0 0.0
      %3812 = vmatpush1.msra.mxu0 %v3696
      %3813 = vmatprep.subr.mxu0 0.0
      %3814 = vmatpush1.msra.mxu0 %v3695
      %3815 = vmatprep.subr.mxu0 0.0
      %3816 = vmatpush1.msra.mxu0 %v3694
      %3817 = vmatprep.subr.mxu0 0.0
      %3818 = vmatpush1.msra.mxu0 %v3693
      %3819 = vmatprep.subr.mxu0 0.0
      %3820 = vmatpush1.msra.mxu0 %v3692
      %3821 = vmatprep.subr.mxu0 0.0
      %3822 = vmatpush1.msra.mxu0 %v3691
      %3823 = vmatprep.subr.mxu0 0.0
      %3824 = vmatpush1.msra.mxu0 %v3690
      %3825 = vmatprep.subr.mxu0 0.0
      %3826 = vmatpush1.msra.mxu0 %v3689
      %3827 = vmatprep.subr.mxu0 0.0
      %3828 = vmatpush2.msra.mxu0 0.0
      %3829 = vmatprep.subr.mxu0 0.0
      %3830 = vmatpush2.msra.mxu0 0.0
      %3831 = vmatprep.subr.mxu0 0.0
      %3832 = vmatpush2.msra.mxu0 0.0
      %3833 = vmatprep.subr.mxu0 0.0
      %3834 = vmatpush2.msra.mxu0 0.0
      %3835 = vmatprep.subr.mxu0 0.0
      %3836 = vmatpush2.msra.mxu0 0.0
      %3837 = vmatprep.subr.mxu0 0.0
      %3838 = vmatpush2.msra.mxu0 0.0
      %3839 = vmatprep.subr.mxu0 0.0
      %3840 = vmatpush2.msra.mxu0 0.0
      %3841 = vmatprep.subr.mxu0 0.0
      %3842 = vmatpush2.msra.mxu0 0.0
      %3843 = vmatprep.subr.mxu0 0.0
      %3844 = vmatpush2.msra.mxu0 0.0
      %3845 = vmatprep.subr.mxu0 0.0
      %3846 = vmatpush2.msra.mxu0 0.0
      %3847 = vmatprep.subr.mxu0 0.0
      %3848 = vmatpush2.msra.mxu0 0.0
      %3849 = vmatprep.subr.mxu0 0.0
      %3850 = vmatpush2.msra.mxu0 0.0
      %3851 = vmatprep.subr.mxu0 0.0
      %3852 = vmatpush2.msra.mxu0 0.0
      %3853 = vmatprep.subr.mxu0 0.0
      %3854 = vmatpush2.msra.mxu0 0.0
      %3855 = vmatprep.subr.mxu0 0.0
      %3856 = vmatpush2.msra.mxu0 0.0
      %3857 = vmatprep.subr.mxu0 0.0
      %3858 = vmatpush2.msra.mxu0 0.0
      %3859 = vmatprep.mubr.f32.mxu0 0.0
      %3860 = vmatmul.mubr.f32.gmra.mxu0 %v3700
      %v3861 = vpop.f32.mrf.mxu0
      %v3862 = vadd.f32 0.0, %v3861
      %v3863 = vpop.f32.mrf.mxu0
      %3864 = vmatprep.mubr.f32.mxu0 0.0
      %3865 = vmatmul.mubr.f32.gmra.mxu0 %v3703
      %v3866 = vpop.f32.mrf.mxu0
      %v3867 = vadd.f32 0.0, %v3866
      %v3868 = vpop.f32.mrf.mxu0
      %3869 = vmatprep.mubr.f32.mxu0 0.0
      %3870 = vmatmul.mubr.f32.gmra.mxu0 %v3706
      %v3871 = vpop.f32.mrf.mxu0
      %v3872 = vadd.f32 0.0, %v3871
      %v3873 = vpop.f32.mrf.mxu0
      %3874 = vmatprep.mubr.f32.mxu0 0.0
      %3875 = vmatmul.mubr.f32.gmra.mxu0 %v3709
      %v3876 = vpop.f32.mrf.mxu0
      %v3877 = vadd.f32 0.0, %v3876
      %v3878 = vpop.f32.mrf.mxu0
      %3879 = vmatprep.mubr.f32.mxu0 0.0
      %3880 = vmatmul.mubr.f32.gmra.mxu0 %v3712
      %v3881 = vpop.f32.mrf.mxu0
      %v3882 = vadd.f32 0.0, %v3881
      %v3883 = vpop.f32.mrf.mxu0
      %3884 = vmatprep.mubr.f32.mxu0 0.0
      %3885 = vmatmul.mubr.f32.gmra.mxu0 %v3715
      %v3886 = vpop.f32.mrf.mxu0
      %v3887 = vadd.f32 0.0, %v3886
      %v3888 = vpop.f32.mrf.mxu0
      %3889 = vmatprep.mubr.f32.mxu0 0.0
      %3890 = vmatmul.mubr.f32.gmra.mxu0 %v3718
      %v3891 = vpop.f32.mrf.mxu0
      %v3892 = vadd.f32 0.0, %v3891
      %v3893 = vpop.f32.mrf.mxu0
      %3894 = vmatprep.mubr.f32.mxu0 0.0
      %3895 = vmatmul.mubr.f32.gmra.mxu0 %v3721
      %v3896 = vpop.f32.mrf.mxu0
      %v3897 = vadd.f32 0.0, %v3896
      %v3898 = vpop.f32.mrf.mxu0
      %3899 = vmatprep.mubr.f32.mxu0 0.0
      %3900 = vmatmul.mubr.f32.gmra.mxu0 %v3724
      %v3901 = vpop.f32.mrf.mxu0
      %v3902 = vadd.f32 0.0, %v3901
      %v3903 = vpop.f32.mrf.mxu0
      %3904 = vmatprep.mubr.f32.mxu0 0.0
      %3905 = vmatmul.mubr.f32.gmra.mxu0 %v3727
      %v3906 = vpop.f32.mrf.mxu0
      %v3907 = vadd.f32 0.0, %v3906
      %v3908 = vpop.f32.mrf.mxu0
      %3909 = vmatprep.mubr.f32.mxu0 0.0
      %3910 = vmatmul.mubr.f32.gmra.mxu0 %v3730
      %v3911 = vpop.f32.mrf.mxu0
      %v3912 = vadd.f32 0.0, %v3911
      %v3913 = vpop.f32.mrf.mxu0
      %3914 = vmatprep.mubr.f32.mxu0 0.0
      %3915 = vmatmul.mubr.f32.gmra.mxu0 %v3733
      %v3916 = vpop.f32.mrf.mxu0
      %v3917 = vadd.f32 0.0, %v3916
      %v3918 = vpop.f32.mrf.mxu0
      %3919 = vmatprep.mubr.f32.mxu0 0.0
      %3920 = vmatmul.mubr.f32.gmra.mxu0 %v3736
      %v3921 = vpop.f32.mrf.mxu0
      %v3922 = vadd.f32 0.0, %v3921
      %v3923 = vpop.f32.mrf.mxu0
      %3924 = vmatprep.mubr.f32.mxu0 0.0
      %3925 = vmatmul.mubr.f32.gmra.mxu0 %v3739
      %v3926 = vpop.f32.mrf.mxu0
      %v3927 = vadd.f32 0.0, %v3926
      %v3928 = vpop.f32.mrf.mxu0
      %3929 = vmatprep.mubr.f32.mxu0 0.0
      %3930 = vmatmul.mubr.f32.gmra.mxu0 %v3742
      %v3931 = vpop.f32.mrf.mxu0
      %v3932 = vadd.f32 0.0, %v3931
      %v3933 = vpop.f32.mrf.mxu0
      %3934 = vmatprep.mubr.f32.mxu0 0.0
      %3935 = vmatmul.mubr.f32.gmra.mxu0 %v3745
      %v3936 = vpop.f32.mrf.mxu0
      %v3937 = vadd.f32 0.0, %v3936
      %v3938 = vpop.f32.mrf.mxu0
      %3939 = vmatprep.mubr.f32.mxu0 0.0
      %3940 = vmatmul.mubr.f32.gmra.mxu0 %v3748
      %v3941 = vpop.f32.mrf.mxu0
      %v3942 = vadd.f32 0.0, %v3941
      %v3943 = vpop.f32.mrf.mxu0
      %3944 = vmatprep.mubr.f32.mxu0 0.0
      %3945 = vmatmul.mubr.f32.gmra.mxu0 %v3751
      %v3946 = vpop.f32.mrf.mxu0
      %v3947 = vadd.f32 0.0, %v3946
      %v3948 = vpop.f32.mrf.mxu0
      %3949 = vmatprep.mubr.f32.mxu0 0.0
      %3950 = vmatmul.mubr.f32.gmra.mxu0 %v3754
      %v3951 = vpop.f32.mrf.mxu0
      %v3952 = vadd.f32 0.0, %v3951
      %v3953 = vpop.f32.mrf.mxu0
      %3954 = vmatprep.mubr.f32.mxu0 0.0
      %3955 = vmatmul.mubr.f32.gmra.mxu0 %v3757
      %v3956 = vpop.f32.mrf.mxu0
      %v3957 = vadd.f32 0.0, %v3956
      %v3958 = vpop.f32.mrf.mxu0
      %3959 = vmatprep.mubr.f32.mxu0 0.0
      %3960 = vmatmul.mubr.f32.gmra.mxu0 %v3760
      %v3961 = vpop.f32.mrf.mxu0
      %v3962 = vadd.f32 0.0, %v3961
      %v3963 = vpop.f32.mrf.mxu0
      %3964 = vmatprep.mubr.f32.mxu0 0.0
      %3965 = vmatmul.mubr.f32.gmra.mxu0 %v3763
      %v3966 = vpop.f32.mrf.mxu0
      %v3967 = vadd.f32 0.0, %v3966
      %v3968 = vpop.f32.mrf.mxu0
      %3969 = vmatprep.mubr.f32.mxu0 0.0
      %3970 = vmatmul.mubr.f32.gmra.mxu0 %v3766
      %v3971 = vpop.f32.mrf.mxu0
      %v3972 = vadd.f32 0.0, %v3971
      %v3973 = vpop.f32.mrf.mxu0
      %3974 = vmatprep.mubr.f32.mxu0 0.0
      %3975 = vmatmul.mubr.f32.gmra.mxu0 %v3769
      %v3976 = vpop.f32.mrf.mxu0
      %v3977 = vadd.f32 0.0, %v3976
      %v3978 = vpop.f32.mrf.mxu0
      %3979 = vmatprep.mubr.f32.mxu0 0.0
      %3980 = vmatmul.mubr.f32.gmra.mxu0 %v3772
      %v3981 = vpop.f32.mrf.mxu0
      %v3982 = vadd.f32 0.0, %v3981
      %v3983 = vpop.f32.mrf.mxu0
      %3984 = vmatprep.mubr.f32.mxu0 0.0
      %3985 = vmatmul.mubr.f32.gmra.mxu0 %v3775
      %v3986 = vpop.f32.mrf.mxu0
      %v3987 = vadd.f32 0.0, %v3986
      %v3988 = vpop.f32.mrf.mxu0
      %3989 = vmatprep.mubr.f32.mxu0 0.0
      %3990 = vmatmul.mubr.f32.gmra.mxu0 %v3778
      %v3991 = vpop.f32.mrf.mxu0
      %v3992 = vadd.f32 0.0, %v3991
      %v3993 = vpop.f32.mrf.mxu0
      %3994 = vmatprep.mubr.f32.mxu0 0.0
      %3995 = vmatmul.mubr.f32.gmra.mxu0 %v3781
      %v3996 = vpop.f32.mrf.mxu0
      %v3997 = vadd.f32 0.0, %v3996
      %v3998 = vpop.f32.mrf.mxu0
      %3999 = vmatprep.mubr.f32.mxu0 0.0
      %4000 = vmatmul.mubr.f32.gmra.mxu0 %v3784
      %v4001 = vpop.f32.mrf.mxu0
      %v4002 = vadd.f32 0.0, %v4001
      %v4003 = vpop.f32.mrf.mxu0
      %4004 = vmatprep.mubr.f32.mxu0 0.0
      %4005 = vmatmul.mubr.f32.gmra.mxu0 %v3787
      %v4006 = vpop.f32.mrf.mxu0
      %v4007 = vadd.f32 0.0, %v4006
      %v4008 = vpop.f32.mrf.mxu0
      %4009 = vmatprep.mubr.f32.mxu0 0.0
      %4010 = vmatmul.mubr.f32.gmra.mxu0 %v3790
      %v4011 = vpop.f32.mrf.mxu0
      %v4012 = vadd.f32 0.0, %v4011
      %v4013 = vpop.f32.mrf.mxu0
      %4014 = vmatprep.mubr.f32.mxu0 0.0
      %4015 = vmatmul.mubr.f32.gmra.mxu0 %v3793
      %v4016 = vpop.f32.mrf.mxu0
      %v4017 = vadd.f32 0.0, %v4016
      %v4018 = vpop.f32.mrf.mxu0
      %4019 = vdwg.mxu0
      %4020 = vxpose.xlu0.b32.start [1/16] %v3862, 128
      %4021 = vxpose.xlu0.b32.cont [2/16] %v3867, 128
      %4022 = vxpose.xlu0.b32.cont [3/16] %v3872, 128
      %4023 = vxpose.xlu0.b32.cont [4/16] %v3877, 128
      %4024 = vxpose.xlu0.b32.cont [5/16] %v3882, 128
      %4025 = vxpose.xlu0.b32.cont [6/16] %v3887, 128
      %4026 = vxpose.xlu0.b32.cont [7/16] %v3892, 128
      %4027 = vxpose.xlu0.b32.cont [8/16] %v3897, 128
      %4028 = vxpose.xlu0.b32.cont [9/16] %v3902, 128
      %4029 = vxpose.xlu0.b32.cont [10/16] %v3907, 128
      %4030 = vxpose.xlu0.b32.cont [11/16] %v3912, 128
      %4031 = vxpose.xlu0.b32.cont [12/16] %v3917, 128
      %4032 = vxpose.xlu0.b32.cont [13/16] %v3922, 128
      %4033 = vxpose.xlu0.b32.cont [14/16] %v3927, 128
      %4034 = vxpose.xlu0.b32.cont [15/16] %v3932, 128
      %4035 = vxpose.xlu0.b32.end [16/16] %v3937, 128
      %v4036 = vpop.trf.xlu0
      %v4037 = vpop.trf.xlu0
      %v4038 = vpop.trf.xlu0
      %v4039 = vpop.trf.xlu0
      %v4040 = vpop.trf.xlu0
      %v4041 = vpop.trf.xlu0
      %v4042 = vpop.trf.xlu0
      %v4043 = vpop.trf.xlu0
      %v4044 = vpop.trf.xlu0
      %v4045 = vpop.trf.xlu0
      %v4046 = vpop.trf.xlu0
      %v4047 = vpop.trf.xlu0
      %v4048 = vpop.trf.xlu0
      %v4049 = vpop.trf.xlu0
      %v4050 = vpop.trf.xlu0
      %v4051 = vpop.trf.xlu0
      %4052 = vxpose.xlu0.b32.start [1/16] %v3942, 128
      %4053 = vxpose.xlu0.b32.cont [2/16] %v3947, 128
      %4054 = vxpose.xlu0.b32.cont [3/16] %v3952, 128
      %4055 = vxpose.xlu0.b32.cont [4/16] %v3957, 128
      %4056 = vxpose.xlu0.b32.cont [5/16] %v3962, 128
      %4057 = vxpose.xlu0.b32.cont [6/16] %v3967, 128
      %4058 = vxpose.xlu0.b32.cont [7/16] %v3972, 128
      %4059 = vxpose.xlu0.b32.cont [8/16] %v3977, 128
      %4060 = vxpose.xlu0.b32.cont [9/16] %v3982, 128
      %4061 = vxpose.xlu0.b32.cont [10/16] %v3987, 128
      %4062 = vxpose.xlu0.b32.cont [11/16] %v3992, 128
      %4063 = vxpose.xlu0.b32.cont [12/16] %v3997, 128
      %4064 = vxpose.xlu0.b32.cont [13/16] %v4002, 128
      %4065 = vxpose.xlu0.b32.cont [14/16] %v4007, 128
      %4066 = vxpose.xlu0.b32.cont [15/16] %v4012, 128
      %4067 = vxpose.xlu0.b32.end [16/16] %v4017, 128
      %v4068 = vpop.trf.xlu0
      %v4069 = vpop.trf.xlu0
      %v4070 = vpop.trf.xlu0
      %v4071 = vpop.trf.xlu0
      %v4072 = vpop.trf.xlu0
      %v4073 = vpop.trf.xlu0
      %v4074 = vpop.trf.xlu0
      %v4075 = vpop.trf.xlu0
      %v4076 = vpop.trf.xlu0
      %v4077 = vpop.trf.xlu0
      %v4078 = vpop.trf.xlu0
      %v4079 = vpop.trf.xlu0
      %v4080 = vpop.trf.xlu0
      %v4081 = vpop.trf.xlu0
      %v4082 = vpop.trf.xlu0
      %v4083 = vpop.trf.xlu0
      %v4084 = vadd.f32 %v4036, %v4068
      %4085 = vadd.xlane.f32.xlu0 %v4084
      %v4086 = vpop.xlane.xlu0 %4085
      %v4087 = vmul.f32 %v4086, 0.00390625
      %v4088 = vmul.f32 %v4036, %v4036
      %v4089 = vmul.f32 %v4068, %v4068
      %v4090 = vadd.f32 %v4088, %v4089
      %4091 = vadd.xlane.f32.xlu0 %v4090
      %v4092 = vpop.xlane.xlu0 %4091
      %v4093 = vmul.f32 %v4092, 0.00390625
      %v4094 = vmul.f32 %v4087, %v4087
      %v4095 = vsub.f32 %v4093, %v4094
      %v4096 = vmax.f32 %v4095, 0.0
      %v4097 = vsub.f32 %v4036, %v4087
      %v4098 = vsub.f32 %v4068, %v4087
      %v4099 = vadd.f32 %v4096, 1e-05
      %v4100 = vrsqrt.pop %v4099
      %v4101 = vmul.f32 %v4097, %v4100
      %v4102 = vmul.f32 %v4098, %v4100
      %vm4103 = vcmp.ge.f32.partialorder %v4101, 0.0
      %vm4104 = vcmp.ge.f32.partialorder %v4102, 0.0
      %v4105 = vmul.f32 %v4101, 0.2
      %v4106 = vmul.f32 %v4102, 0.2
      %v4107 = vsel %vm4103, %v4101, %v4105
      %v4108 = vsel %vm4104, %v4102, %v4106
      %4109 = vst [vmem:[%s170] sm:$0xff] %v4107
      %4110 = vst [vmem:[%s170 + $0x8] sm:$0xff] %v4108
      %p4111 = scmp.lt.s32.totalorder %s14, 1
      %s4112 = scalar_select %p4111, %s14, 1
      %s4113 = smul.addr %s4112, 2
      %s4114 = smul.addr %s4113, 8
      %s4115 = scalar_lea.vmem %s3, %s4114
      // Predicated region
      $region33: #{conv_block.1} parent=31 // pred_check
        %p4116 = pneg %p100
      $region34: #{conv_block.1} parent=31 // pred_check_branch
        %4118 = sbr.rel (%p4116) target = $region36
      $region35: #{conv_block.1} parent=31 // pred_region
        _
      $region36: #{conv_block.1} parent=31 // pred_fallthru
        _
    $region32: #{conv_block.1} parent=5 // pred_fallthru
      _
    %p4119 = scmp.le.s32.totalorder 2, %s9
    // Predicated region
    $region37: #{conv_block.1} parent=5 // pred_check
      %p4120 = pneg %p4119
    $region38: #{conv_block.1} parent=5 // pred_check_branch
      %4122 = sbr.rel (%p4120) target = $region40
    $region39: #{conv_block.1} parent=5 // pred_region
      %s4123 = ssub.s32 %s9, 2
      // Predicated region
      $region41: #{conv_block.1} parent=39 // pred_check
        %p4124 = pneg %p106
      $region42: #{conv_block.1} parent=39 // pred_check_branch
        %4126 = sbr.rel (%p4124) target = $region44
      $region43: #{conv_block.1} parent=39 // pred_region
        %p4127 = scmp.lt.s32.totalorder %s15, 1
        %s4128 = scalar_select %p4127, %s15, 1
        %s4129 = smul.addr %s4128, 2
        %s4130 = smul.addr %s4129, 8
        %s4131 = scalar_lea.vmem %s3, %s4130
      $region44: #{conv_block.1} parent=39 // pred_fallthru
        _
    $region40: #{conv_block.1} parent=5 // pred_fallthru
      _
  $region6: #{conv_block.1} parent=0 // loop_footer
    %s13 = sadd.s32 1, %s9
  $region7: #{conv_block.1} parent=0 // loop_footer_branch
    %8 = sbr.rel target = $region3
  $region8: #{conv_block.1} parent=0 // loop_exit
    _

</llo_original>
